<compile_context>
chip_gen: v6e
topology: v6e:2x2x1
jax: 0.10.0
libtpu: 0.0.40
codegen_flags: <defaults>
</compile_context>

<pallas_src>
import functools

import numpy as np
import jax
import jax.numpy as jnp
from jax import lax
from jax.experimental import pallas as pl
from jax.experimental.pallas import tpu as pltpu

LN_EPS = 1e-5

# Layer topology of the PyTorch module: (din, dout) per Linear, LN+ReLU after
# every Linear except the last of the encoder (idx 3) and of the decoder (idx 7).
_HAS_LN = (True, True, True, False, True, True, True, False)


def _layer_dims(input_size):
    return [(input_size, 80), (80, 64), (64, 48), (48, 2),
            (2, 48), (48, 64), (64, 80), (80, input_size)]


def _roundup(n, m):
    return (n + m - 1) // m * m


def _weight_layout(input_size):
    """Row offset of each weight matrix inside the (rows, 128) weight slab."""
    offs, off = [], 0
    for din, _ in _layer_dims(input_size):
        offs.append(off)
        off += _roundup(din, 8)          # keep every W sublane-aligned
    return offs, off


def _vector_rows():
    """Row index of (bias, gamma, beta) for each layer inside the vector slab."""
    rows, r = [], 0
    for has_ln in _HAS_LN:
        if has_ln:
            rows.append((r, r + 1, r + 2))
            r += 3
        else:
            rows.append((r, None, None))
            r += 1
    return rows, r                        # 20 used rows


def pack_wae_params(params, input_size):
    """Pack the 28 parameter arrays into two lane-dense f32 slabs (call once)."""
    w_offs, w_rows = _weight_layout(input_size)
    v_rows, n_vec = _vector_rows()
    w_slab = np.zeros((w_rows, 128), np.float32)
    v_slab = np.zeros((_roundup(n_vec, 8), 128), np.float32)
    pi = 0
    for li, ((din, dout), has_ln) in enumerate(zip(_layer_dims(input_size), _HAS_LN)):
        w = np.asarray(params[pi]); pi += 1          # (din, dout)
        b = np.asarray(params[pi]); pi += 1          # (1, dout)
        w_slab[w_offs[li]:w_offs[li] + din, :dout] = w
        br, gr, ber = v_rows[li]
        v_slab[br, :dout] = b.reshape(-1)
        if has_ln:
            g = np.asarray(params[pi]); pi += 1
            be = np.asarray(params[pi]); pi += 1
            v_slab[gr, :dout] = g.reshape(-1)
            v_slab[ber, :dout] = be.reshape(-1)
    return jnp.asarray(w_slab), jnp.asarray(v_slab)


def _make_kernel(input_size, w_offs, v_rows):
    dims = _layer_dims(input_size)

    def kernel(x_ref, w_ref, v_ref, xr_ref, z_ref):
        def lin(h, li):
            din, dout = dims[li]
            off = w_offs[li]
            w = w_ref[off:off + din, :dout]                 # static VMEM view
            b = v_ref[v_rows[li][0]:v_rows[li][0] + 1, :dout]
            return jnp.dot(h, w, preferred_element_type=jnp.float32) + b

        def ln_relu(h, li):
            _, dout = dims[li]
            inv_n = 1.0 / dout
            # one-pass LN: both XLU reductions issue back-to-back
            mu = jnp.sum(h, axis=-1, keepdims=True) * inv_n
            ms = jnp.sum(h * h, axis=-1, keepdims=True) * inv_n
            var = jnp.maximum(ms - mu * mu, 0.0)
            _, gr, ber = v_rows[li]
            g = v_ref[gr:gr + 1, :dout]
            be = v_ref[ber:ber + 1, :dout]
            y = (h - mu) * lax.rsqrt(var + LN_EPS) * g + be
            return jnp.maximum(y, 0.0)

        h = x_ref[...].astype(jnp.float32)

        # ---- encoder ----
        h = ln_relu(lin(h, 0), 0)      # (TB, 80)
        h = ln_relu(lin(h, 1), 1)      # (TB, 64)
        h = ln_relu(lin(h, 2), 2)      # (TB, 48)
        z = lin(h, 3)                  # (TB, 2)  bottleneck on the MXU

        # ---- decoder ----
        d = ln_relu(lin(z, 4), 4)      # (TB, 48) expansion on the MXU
        d = ln_relu(lin(d, 5), 5)      # (TB, 64)
        d = ln_relu(lin(d, 6), 6)      # (TB, 80)
        logits = lin(d, 7)             # (TB, input_size)

        # Softmax over the feature axis (PyTorch dim=1).
        m = jnp.max(logits, axis=-1, keepdims=True)
        e = jnp.exp(logits - m)
        s = jnp.sum(e, axis=-1, keepdims=True)
        inv = pl.reciprocal(s, approx=True)     # EUP slot
        inv = inv * (2.0 - s * inv)             # one Newton step -> f32 accuracy

        xr_ref[...] = (e * inv).astype(xr_ref.dtype)
        z_ref[...] = z.astype(z_ref.dtype)

    return kernel


@functools.partial(jax.jit, static_argnames=("tb_max",))
def wae_forward(x, w_slab, v_slab, *, tb_max=1024):
    B, input_size = x.shape
    w_offs, _ = _weight_layout(input_size)
    v_rows, _ = _vector_rows()

    # Batch tiling: >=2 tiles when possible (v7x dual-core split), rows a
    # multiple of 8, tb ~ ceil(B / n_tiles) so awkward B doesn't pad up ~2x.
    n_tiles = max(2, pl.cdiv(B, tb_max))
    tb = _roundup(max(1, pl.cdiv(B, n_tiles)), 8)
    n_tiles = pl.cdiv(B, tb)
    B_pad = n_tiles * tb
    if B_pad != B:
        x = jnp.pad(x, ((0, B_pad - B), (0, 0)))

    kernel = _make_kernel(input_size, w_offs, v_rows)

    grid_spec = pltpu.PrefetchScalarGridSpec(
        num_scalar_prefetch=0,
        grid=(n_tiles,),
        in_specs=[
            pl.BlockSpec((tb, input_size), lambda i: (i, 0)),   # x: tiled over batch
            pl.BlockSpec(w_slab.shape, lambda i: (0, 0)),       # weight slab: resident
            pl.BlockSpec(v_slab.shape, lambda i: (0, 0)),       # bias/LN slab: resident
        ],
        out_specs=[
            pl.BlockSpec((tb, input_size), lambda i: (i, 0)),   # x_recon
            pl.BlockSpec((tb, 2), lambda i: (i, 0)),            # z
        ],
    )

    x_recon, z = pl.pallas_call(
        kernel,
        out_shape=(jax.ShapeDtypeStruct((B_pad, input_size), jnp.float32),
                   jax.ShapeDtypeStruct((B_pad, 2), jnp.float32)),
        grid_spec=grid_spec,
        compiler_params=pltpu.CompilerParams(
            dimension_semantics=("parallel",),
        ),
    )(x, w_slab, v_slab)

    if B_pad != B:
        x_recon = x_recon[:B]
        z = z[:B]
    return x_recon, z


def make_wae_params(input_size, key):
    """Deterministic parameter init (synthetic; shapes match the PyTorch module).

    Weights are stored as (in, out) so y = x @ W + b; LayerNorm gamma/beta
    follow every Linear except the last of the encoder and of the decoder.
    """
    dims = _layer_dims(input_size)
    params = []
    keys = jax.random.split(key, len(dims))
    for idx, (din, dout) in enumerate(dims):
        scale = 1.0 / jnp.sqrt(jnp.float32(din))
        w = jax.random.normal(keys[idx], (din, dout), jnp.float32) * scale
        b = jnp.zeros((1, dout), jnp.float32)
        params.extend([w, b])
        if _HAS_LN[idx]:
            params.extend([jnp.ones((1, dout), jnp.float32),
                           jnp.zeros((1, dout), jnp.float32)])
    return params


def reference_forward(x, params):
    """Pure-JAX reference for sanity checking."""
    def linear(h, w, b):
        return h @ w + b

    def ln(h, g, b):
        mu = jnp.mean(h, axis=-1, keepdims=True)
        var = jnp.mean((h - mu) ** 2, axis=-1, keepdims=True)
        return (h - mu) * lax.rsqrt(var + LN_EPS) * g + b

    p = list(params)
    h = x
    for _ in range(3):
        w, b, g, be = p[:4]; p = p[4:]
        h = jnp.maximum(ln(linear(h, w, b), g, be), 0.0)
    w, b = p[:2]; p = p[2:]
    z = linear(h, w, b)
    d = z
    for _ in range(3):
        w, b, g, be = p[:4]; p = p[4:]
        d = jnp.maximum(ln(linear(d, w, b), g, be), 0.0)
    w, b = p[:2]; p = p[2:]
    logits = linear(d, w, b)
    return jax.nn.softmax(logits, axis=1), z


if __name__ == "__main__":
    B = 256            # 2 grid steps at tb=128; exercises the batch pipeline
    INPUT_SIZE = 16

    key = jax.random.PRNGKey(0)
    kx, kp = jax.random.split(key)
    x = jax.random.uniform(kx, (B, INPUT_SIZE), jnp.float32)

    params = make_wae_params(INPUT_SIZE, kp)
    w_slab, v_slab = pack_wae_params(params, INPUT_SIZE)   # one-time packing

    x_recon, z = wae_forward(x, w_slab, v_slab, tb_max=1024)
    jax.block_until_ready((x_recon, z))

    x_recon_ref, z_ref = reference_forward(x, params)
    assert x_recon.shape == (B, INPUT_SIZE) and z.shape == (B, 2)
    assert jnp.allclose(z, z_ref, atol=1e-5, rtol=1e-5)
    assert jnp.allclose(x_recon, x_recon_ref, atol=1e-5, rtol=1e-5)
    # softmax rows sum to 1
    assert jnp.allclose(jnp.sum(x_recon, axis=1), 1.0, atol=1e-5)

    print("KERNEL_OK")
</pallas_src>

<mosaic_0001>
module attributes {stable_mosaic.version = 11 : i64} {
  func.func @kernel(%arg0: i32, %arg1: memref<128x16xf32, #tpu.memory_space<vmem>>, %arg2: memref<408x128xf32, #tpu.memory_space<vmem>>, %arg3: memref<24x128xf32, #tpu.memory_space<vmem>>, %arg4: memref<128x16xf32, #tpu.memory_space<vmem>>, %arg5: memref<128x2xf32, #tpu.memory_space<vmem>>) attributes {dimension_semantics = [#tpu.dimension_semantics<parallel>], iteration_bounds = array<i64: 2>, scalar_prefetch = 0 : i64, scratch_operands = 0 : i64, tpu.core_type = #tpu.core_type<tc>, window_params = [{transform_indices = @transform_0, window_bounds = array<i64: 128, 16>}, {pipeline_mode = #tpu.pipeline_mode<synchronous>, transform_indices = @transform_1, window_bounds = array<i64: 408, 128>}, {pipeline_mode = #tpu.pipeline_mode<synchronous>, transform_indices = @transform_2, window_bounds = array<i64: 24, 128>}, {transform_indices = @transform_3, window_bounds = array<i64: 128, 16>}, {transform_indices = @transform_4, window_bounds = array<i64: 128, 2>}]} {
    %c0 = arith.constant 0 : index
    %c0_0 = arith.constant 0 : index
    %0 = vector.load %arg1[%c0, %c0_0] : memref<128x16xf32, #tpu.memory_space<vmem>>, vector<128x16xf32>
    %c0_1 = arith.constant 0 : index
    %c0_2 = arith.constant 0 : index
    %1 = vector.load %arg2[%c0_1, %c0_2] : memref<408x128xf32, #tpu.memory_space<vmem>>, vector<16x80xf32>
    %c0_3 = arith.constant 0 : index
    %c0_4 = arith.constant 0 : index
    %2 = vector.load %arg3[%c0_3, %c0_4] : memref<24x128xf32, #tpu.memory_space<vmem>>, vector<1x80xf32>
    %cst = arith.constant dense<0.000000e+00> : vector<128x80xf32>
    %3 = tpu.matmul %0, %1, %cst {dimension_numbers = #tpu.dot_dimension_numbers<[1], [0], [0], [1], [0, 0, 1, 1], [], []>} : vector<128x16xf32>, vector<16x80xf32>, vector<128x80xf32> -> vector<128x80xf32>
    %4 = vector.broadcast %2 : vector<1x80xf32> to vector<128x80xf32>
    %5 = arith.addf %3, %4 : vector<128x80xf32>
    %cst_5 = arith.constant dense<0.000000e+00> : vector<128xf32>
    %6 = vector.multi_reduction <add>, %5, %cst_5 [1] : vector<128x80xf32> to vector<128xf32>
    %7 = vector.shape_cast %6 : vector<128xf32> to vector<128x1xf32>
    %cst_6 = arith.constant 1.250000e-02 : f32
    %8 = vector.broadcast %cst_6 : f32 to vector<128x1xf32>
    %9 = arith.mulf %7, %8 : vector<128x1xf32>
    %10 = arith.mulf %5, %5 : vector<128x80xf32>
    %cst_7 = arith.constant dense<0.000000e+00> : vector<128xf32>
    %11 = vector.multi_reduction <add>, %10, %cst_7 [1] : vector<128x80xf32> to vector<128xf32>
    %12 = vector.shape_cast %11 : vector<128xf32> to vector<128x1xf32>
    %cst_8 = arith.constant 1.250000e-02 : f32
    %13 = vector.broadcast %cst_8 : f32 to vector<128x1xf32>
    %14 = arith.mulf %12, %13 : vector<128x1xf32>
    %15 = arith.mulf %9, %9 : vector<128x1xf32>
    %16 = arith.subf %14, %15 : vector<128x1xf32>
    %cst_9 = arith.constant 0.000000e+00 : f32
    %17 = vector.broadcast %cst_9 : f32 to vector<128x1xf32>
    %18 = arith.maximumf %16, %17 : vector<128x1xf32>
    %c1 = arith.constant 1 : index
    %c0_10 = arith.constant 0 : index
    %19 = vector.load %arg3[%c1, %c0_10] : memref<24x128xf32, #tpu.memory_space<vmem>>, vector<1x80xf32>
    %c2 = arith.constant 2 : index
    %c0_11 = arith.constant 0 : index
    %20 = vector.load %arg3[%c2, %c0_11] : memref<24x128xf32, #tpu.memory_space<vmem>>, vector<1x80xf32>
    %21 = vector.broadcast %9 : vector<128x1xf32> to vector<128x80xf32>
    %22 = arith.subf %5, %21 : vector<128x80xf32>
    %cst_12 = arith.constant 9.99999974E-6 : f32
    %23 = vector.broadcast %cst_12 : f32 to vector<128x1xf32>
    %24 = arith.addf %18, %23 : vector<128x1xf32>
    %25 = math.rsqrt %24 : vector<128x1xf32>
    %26 = vector.broadcast %25 : vector<128x1xf32> to vector<128x80xf32>
    %27 = arith.mulf %22, %26 : vector<128x80xf32>
    %28 = vector.broadcast %19 : vector<1x80xf32> to vector<128x80xf32>
    %29 = arith.mulf %27, %28 : vector<128x80xf32>
    %30 = vector.broadcast %20 : vector<1x80xf32> to vector<128x80xf32>
    %31 = arith.addf %29, %30 : vector<128x80xf32>
    %cst_13 = arith.constant 0.000000e+00 : f32
    %32 = vector.broadcast %cst_13 : f32 to vector<128x80xf32>
    %33 = arith.maximumf %31, %32 : vector<128x80xf32>
    %c16 = arith.constant 16 : index
    %c0_14 = arith.constant 0 : index
    %34 = vector.load %arg2[%c16, %c0_14] : memref<408x128xf32, #tpu.memory_space<vmem>>, vector<80x64xf32>
    %c3 = arith.constant 3 : index
    %c0_15 = arith.constant 0 : index
    %35 = vector.load %arg3[%c3, %c0_15] : memref<24x128xf32, #tpu.memory_space<vmem>>, vector<1x64xf32>
    %cst_16 = arith.constant dense<0.000000e+00> : vector<128x64xf32>
    %36 = tpu.matmul %33, %34, %cst_16 {dimension_numbers = #tpu.dot_dimension_numbers<[1], [0], [0], [1], [0, 0, 1, 1], [], []>} : vector<128x80xf32>, vector<80x64xf32>, vector<128x64xf32> -> vector<128x64xf32>
    %37 = vector.broadcast %35 : vector<1x64xf32> to vector<128x64xf32>
    %38 = arith.addf %36, %37 : vector<128x64xf32>
    %cst_17 = arith.constant dense<0.000000e+00> : vector<128xf32>
    %39 = vector.multi_reduction <add>, %38, %cst_17 [1] : vector<128x64xf32> to vector<128xf32>
    %40 = vector.shape_cast %39 : vector<128xf32> to vector<128x1xf32>
    %cst_18 = arith.constant 1.562500e-02 : f32
    %41 = vector.broadcast %cst_18 : f32 to vector<128x1xf32>
    %42 = arith.mulf %40, %41 : vector<128x1xf32>
    %43 = arith.mulf %38, %38 : vector<128x64xf32>
    %cst_19 = arith.constant dense<0.000000e+00> : vector<128xf32>
    %44 = vector.multi_reduction <add>, %43, %cst_19 [1] : vector<128x64xf32> to vector<128xf32>
    %45 = vector.shape_cast %44 : vector<128xf32> to vector<128x1xf32>
    %cst_20 = arith.constant 1.562500e-02 : f32
    %46 = vector.broadcast %cst_20 : f32 to vector<128x1xf32>
    %47 = arith.mulf %45, %46 : vector<128x1xf32>
    %48 = arith.mulf %42, %42 : vector<128x1xf32>
    %49 = arith.subf %47, %48 : vector<128x1xf32>
    %cst_21 = arith.constant 0.000000e+00 : f32
    %50 = vector.broadcast %cst_21 : f32 to vector<128x1xf32>
    %51 = arith.maximumf %49, %50 : vector<128x1xf32>
    %c4 = arith.constant 4 : index
    %c0_22 = arith.constant 0 : index
    %52 = vector.load %arg3[%c4, %c0_22] : memref<24x128xf32, #tpu.memory_space<vmem>>, vector<1x64xf32>
    %c5 = arith.constant 5 : index
    %c0_23 = arith.constant 0 : index
    %53 = vector.load %arg3[%c5, %c0_23] : memref<24x128xf32, #tpu.memory_space<vmem>>, vector<1x64xf32>
    %54 = vector.broadcast %42 : vector<128x1xf32> to vector<128x64xf32>
    %55 = arith.subf %38, %54 : vector<128x64xf32>
    %cst_24 = arith.constant 9.99999974E-6 : f32
    %56 = vector.broadcast %cst_24 : f32 to vector<128x1xf32>
    %57 = arith.addf %51, %56 : vector<128x1xf32>
    %58 = math.rsqrt %57 : vector<128x1xf32>
    %59 = vector.broadcast %58 : vector<128x1xf32> to vector<128x64xf32>
    %60 = arith.mulf %55, %59 : vector<128x64xf32>
    %61 = vector.broadcast %52 : vector<1x64xf32> to vector<128x64xf32>
    %62 = arith.mulf %60, %61 : vector<128x64xf32>
    %63 = vector.broadcast %53 : vector<1x64xf32> to vector<128x64xf32>
    %64 = arith.addf %62, %63 : vector<128x64xf32>
    %cst_25 = arith.constant 0.000000e+00 : f32
    %65 = vector.broadcast %cst_25 : f32 to vector<128x64xf32>
    %66 = arith.maximumf %64, %65 : vector<128x64xf32>
    %c96 = arith.constant 96 : index
    %c0_26 = arith.constant 0 : index
    %67 = vector.load %arg2[%c96, %c0_26] : memref<408x128xf32, #tpu.memory_space<vmem>>, vector<64x48xf32>
    %c6 = arith.constant 6 : index
    %c0_27 = arith.constant 0 : index
    %68 = vector.load %arg3[%c6, %c0_27] : memref<24x128xf32, #tpu.memory_space<vmem>>, vector<1x48xf32>
    %cst_28 = arith.constant dense<0.000000e+00> : vector<128x48xf32>
    %69 = tpu.matmul %66, %67, %cst_28 {dimension_numbers = #tpu.dot_dimension_numbers<[1], [0], [0], [1], [0, 0, 1, 1], [], []>} : vector<128x64xf32>, vector<64x48xf32>, vector<128x48xf32> -> vector<128x48xf32>
    %70 = vector.broadcast %68 : vector<1x48xf32> to vector<128x48xf32>
    %71 = arith.addf %69, %70 : vector<128x48xf32>
    %cst_29 = arith.constant dense<0.000000e+00> : vector<128xf32>
    %72 = vector.multi_reduction <add>, %71, %cst_29 [1] : vector<128x48xf32> to vector<128xf32>
    %73 = vector.shape_cast %72 : vector<128xf32> to vector<128x1xf32>
    %cst_30 = arith.constant 0.020833334 : f32
    %74 = vector.broadcast %cst_30 : f32 to vector<128x1xf32>
    %75 = arith.mulf %73, %74 : vector<128x1xf32>
    %76 = arith.mulf %71, %71 : vector<128x48xf32>
    %cst_31 = arith.constant dense<0.000000e+00> : vector<128xf32>
    %77 = vector.multi_reduction <add>, %76, %cst_31 [1] : vector<128x48xf32> to vector<128xf32>
    %78 = vector.shape_cast %77 : vector<128xf32> to vector<128x1xf32>
    %cst_32 = arith.constant 0.020833334 : f32
    %79 = vector.broadcast %cst_32 : f32 to vector<128x1xf32>
    %80 = arith.mulf %78, %79 : vector<128x1xf32>
    %81 = arith.mulf %75, %75 : vector<128x1xf32>
    %82 = arith.subf %80, %81 : vector<128x1xf32>
    %cst_33 = arith.constant 0.000000e+00 : f32
    %83 = vector.broadcast %cst_33 : f32 to vector<128x1xf32>
    %84 = arith.maximumf %82, %83 : vector<128x1xf32>
    %c7 = arith.constant 7 : index
    %c0_34 = arith.constant 0 : index
    %85 = vector.load %arg3[%c7, %c0_34] : memref<24x128xf32, #tpu.memory_space<vmem>>, vector<1x48xf32>
    %c8 = arith.constant 8 : index
    %c0_35 = arith.constant 0 : index
    %86 = vector.load %arg3[%c8, %c0_35] : memref<24x128xf32, #tpu.memory_space<vmem>>, vector<1x48xf32>
    %87 = vector.broadcast %75 : vector<128x1xf32> to vector<128x48xf32>
    %88 = arith.subf %71, %87 : vector<128x48xf32>
    %cst_36 = arith.constant 9.99999974E-6 : f32
    %89 = vector.broadcast %cst_36 : f32 to vector<128x1xf32>
    %90 = arith.addf %84, %89 : vector<128x1xf32>
    %91 = math.rsqrt %90 : vector<128x1xf32>
    %92 = vector.broadcast %91 : vector<128x1xf32> to vector<128x48xf32>
    %93 = arith.mulf %88, %92 : vector<128x48xf32>
    %94 = vector.broadcast %85 : vector<1x48xf32> to vector<128x48xf32>
    %95 = arith.mulf %93, %94 : vector<128x48xf32>
    %96 = vector.broadcast %86 : vector<1x48xf32> to vector<128x48xf32>
    %97 = arith.addf %95, %96 : vector<128x48xf32>
    %cst_37 = arith.constant 0.000000e+00 : f32
    %98 = vector.broadcast %cst_37 : f32 to vector<128x48xf32>
    %99 = arith.maximumf %97, %98 : vector<128x48xf32>
    %c160 = arith.constant 160 : index
    %c0_38 = arith.constant 0 : index
    %100 = vector.load %arg2[%c160, %c0_38] : memref<408x128xf32, #tpu.memory_space<vmem>>, vector<48x2xf32>
    %c9 = arith.constant 9 : index
    %c0_39 = arith.constant 0 : index
    %101 = vector.load %arg3[%c9, %c0_39] : memref<24x128xf32, #tpu.memory_space<vmem>>, vector<1x2xf32>
    %cst_40 = arith.constant dense<0.000000e+00> : vector<128x2xf32>
    %102 = tpu.matmul %99, %100, %cst_40 {dimension_numbers = #tpu.dot_dimension_numbers<[1], [0], [0], [1], [0, 0, 1, 1], [], []>} : vector<128x48xf32>, vector<48x2xf32>, vector<128x2xf32> -> vector<128x2xf32>
    %103 = vector.broadcast %101 : vector<1x2xf32> to vector<128x2xf32>
    %104 = arith.addf %102, %103 : vector<128x2xf32>
    %c208 = arith.constant 208 : index
    %c0_41 = arith.constant 0 : index
    %105 = vector.load %arg2[%c208, %c0_41] : memref<408x128xf32, #tpu.memory_space<vmem>>, vector<2x48xf32>
    %c10 = arith.constant 10 : index
    %c0_42 = arith.constant 0 : index
    %106 = vector.load %arg3[%c10, %c0_42] : memref<24x128xf32, #tpu.memory_space<vmem>>, vector<1x48xf32>
    %cst_43 = arith.constant dense<0.000000e+00> : vector<128x48xf32>
    %107 = tpu.matmul %104, %105, %cst_43 {dimension_numbers = #tpu.dot_dimension_numbers<[1], [0], [0], [1], [0, 0, 1, 1], [], []>} : vector<128x2xf32>, vector<2x48xf32>, vector<128x48xf32> -> vector<128x48xf32>
    %108 = vector.broadcast %106 : vector<1x48xf32> to vector<128x48xf32>
    %109 = arith.addf %107, %108 : vector<128x48xf32>
    %cst_44 = arith.constant dense<0.000000e+00> : vector<128xf32>
    %110 = vector.multi_reduction <add>, %109, %cst_44 [1] : vector<128x48xf32> to vector<128xf32>
    %111 = vector.shape_cast %110 : vector<128xf32> to vector<128x1xf32>
    %cst_45 = arith.constant 0.020833334 : f32
    %112 = vector.broadcast %cst_45 : f32 to vector<128x1xf32>
    %113 = arith.mulf %111, %112 : vector<128x1xf32>
    %114 = arith.mulf %109, %109 : vector<128x48xf32>
    %cst_46 = arith.constant dense<0.000000e+00> : vector<128xf32>
    %115 = vector.multi_reduction <add>, %114, %cst_46 [1] : vector<128x48xf32> to vector<128xf32>
    %116 = vector.shape_cast %115 : vector<128xf32> to vector<128x1xf32>
    %cst_47 = arith.constant 0.020833334 : f32
    %117 = vector.broadcast %cst_47 : f32 to vector<128x1xf32>
    %118 = arith.mulf %116, %117 : vector<128x1xf32>
    %119 = arith.mulf %113, %113 : vector<128x1xf32>
    %120 = arith.subf %118, %119 : vector<128x1xf32>
    %cst_48 = arith.constant 0.000000e+00 : f32
    %121 = vector.broadcast %cst_48 : f32 to vector<128x1xf32>
    %122 = arith.maximumf %120, %121 : vector<128x1xf32>
    %c11 = arith.constant 11 : index
    %c0_49 = arith.constant 0 : index
    %123 = vector.load %arg3[%c11, %c0_49] : memref<24x128xf32, #tpu.memory_space<vmem>>, vector<1x48xf32>
    %c12 = arith.constant 12 : index
    %c0_50 = arith.constant 0 : index
    %124 = vector.load %arg3[%c12, %c0_50] : memref<24x128xf32, #tpu.memory_space<vmem>>, vector<1x48xf32>
    %125 = vector.broadcast %113 : vector<128x1xf32> to vector<128x48xf32>
    %126 = arith.subf %109, %125 : vector<128x48xf32>
    %cst_51 = arith.constant 9.99999974E-6 : f32
    %127 = vector.broadcast %cst_51 : f32 to vector<128x1xf32>
    %128 = arith.addf %122, %127 : vector<128x1xf32>
    %129 = math.rsqrt %128 : vector<128x1xf32>
    %130 = vector.broadcast %129 : vector<128x1xf32> to vector<128x48xf32>
    %131 = arith.mulf %126, %130 : vector<128x48xf32>
    %132 = vector.broadcast %123 : vector<1x48xf32> to vector<128x48xf32>
    %133 = arith.mulf %131, %132 : vector<128x48xf32>
    %134 = vector.broadcast %124 : vector<1x48xf32> to vector<128x48xf32>
    %135 = arith.addf %133, %134 : vector<128x48xf32>
    %cst_52 = arith.constant 0.000000e+00 : f32
    %136 = vector.broadcast %cst_52 : f32 to vector<128x48xf32>
    %137 = arith.maximumf %135, %136 : vector<128x48xf32>
    %c216 = arith.constant 216 : index
    %c0_53 = arith.constant 0 : index
    %138 = vector.load %arg2[%c216, %c0_53] : memref<408x128xf32, #tpu.memory_space<vmem>>, vector<48x64xf32>
    %c13 = arith.constant 13 : index
    %c0_54 = arith.constant 0 : index
    %139 = vector.load %arg3[%c13, %c0_54] : memref<24x128xf32, #tpu.memory_space<vmem>>, vector<1x64xf32>
    %cst_55 = arith.constant dense<0.000000e+00> : vector<128x64xf32>
    %140 = tpu.matmul %137, %138, %cst_55 {dimension_numbers = #tpu.dot_dimension_numbers<[1], [0], [0], [1], [0, 0, 1, 1], [], []>} : vector<128x48xf32>, vector<48x64xf32>, vector<128x64xf32> -> vector<128x64xf32>
    %141 = vector.broadcast %139 : vector<1x64xf32> to vector<128x64xf32>
    %142 = arith.addf %140, %141 : vector<128x64xf32>
    %cst_56 = arith.constant dense<0.000000e+00> : vector<128xf32>
    %143 = vector.multi_reduction <add>, %142, %cst_56 [1] : vector<128x64xf32> to vector<128xf32>
    %144 = vector.shape_cast %143 : vector<128xf32> to vector<128x1xf32>
    %cst_57 = arith.constant 1.562500e-02 : f32
    %145 = vector.broadcast %cst_57 : f32 to vector<128x1xf32>
    %146 = arith.mulf %144, %145 : vector<128x1xf32>
    %147 = arith.mulf %142, %142 : vector<128x64xf32>
    %cst_58 = arith.constant dense<0.000000e+00> : vector<128xf32>
    %148 = vector.multi_reduction <add>, %147, %cst_58 [1] : vector<128x64xf32> to vector<128xf32>
    %149 = vector.shape_cast %148 : vector<128xf32> to vector<128x1xf32>
    %cst_59 = arith.constant 1.562500e-02 : f32
    %150 = vector.broadcast %cst_59 : f32 to vector<128x1xf32>
    %151 = arith.mulf %149, %150 : vector<128x1xf32>
    %152 = arith.mulf %146, %146 : vector<128x1xf32>
    %153 = arith.subf %151, %152 : vector<128x1xf32>
    %cst_60 = arith.constant 0.000000e+00 : f32
    %154 = vector.broadcast %cst_60 : f32 to vector<128x1xf32>
    %155 = arith.maximumf %153, %154 : vector<128x1xf32>
    %c14 = arith.constant 14 : index
    %c0_61 = arith.constant 0 : index
    %156 = vector.load %arg3[%c14, %c0_61] : memref<24x128xf32, #tpu.memory_space<vmem>>, vector<1x64xf32>
    %c15 = arith.constant 15 : index
    %c0_62 = arith.constant 0 : index
    %157 = vector.load %arg3[%c15, %c0_62] : memref<24x128xf32, #tpu.memory_space<vmem>>, vector<1x64xf32>
    %158 = vector.broadcast %146 : vector<128x1xf32> to vector<128x64xf32>
    %159 = arith.subf %142, %158 : vector<128x64xf32>
    %cst_63 = arith.constant 9.99999974E-6 : f32
    %160 = vector.broadcast %cst_63 : f32 to vector<128x1xf32>
    %161 = arith.addf %155, %160 : vector<128x1xf32>
    %162 = math.rsqrt %161 : vector<128x1xf32>
    %163 = vector.broadcast %162 : vector<128x1xf32> to vector<128x64xf32>
    %164 = arith.mulf %159, %163 : vector<128x64xf32>
    %165 = vector.broadcast %156 : vector<1x64xf32> to vector<128x64xf32>
    %166 = arith.mulf %164, %165 : vector<128x64xf32>
    %167 = vector.broadcast %157 : vector<1x64xf32> to vector<128x64xf32>
    %168 = arith.addf %166, %167 : vector<128x64xf32>
    %cst_64 = arith.constant 0.000000e+00 : f32
    %169 = vector.broadcast %cst_64 : f32 to vector<128x64xf32>
    %170 = arith.maximumf %168, %169 : vector<128x64xf32>
    %c264 = arith.constant 264 : index
    %c0_65 = arith.constant 0 : index
    %171 = vector.load %arg2[%c264, %c0_65] : memref<408x128xf32, #tpu.memory_space<vmem>>, vector<64x80xf32>
    %c16_66 = arith.constant 16 : index
    %c0_67 = arith.constant 0 : index
    %172 = vector.load %arg3[%c16_66, %c0_67] : memref<24x128xf32, #tpu.memory_space<vmem>>, vector<1x80xf32>
    %cst_68 = arith.constant dense<0.000000e+00> : vector<128x80xf32>
    %173 = tpu.matmul %170, %171, %cst_68 {dimension_numbers = #tpu.dot_dimension_numbers<[1], [0], [0], [1], [0, 0, 1, 1], [], []>} : vector<128x64xf32>, vector<64x80xf32>, vector<128x80xf32> -> vector<128x80xf32>
    %174 = vector.broadcast %172 : vector<1x80xf32> to vector<128x80xf32>
    %175 = arith.addf %173, %174 : vector<128x80xf32>
    %cst_69 = arith.constant dense<0.000000e+00> : vector<128xf32>
    %176 = vector.multi_reduction <add>, %175, %cst_69 [1] : vector<128x80xf32> to vector<128xf32>
    %177 = vector.shape_cast %176 : vector<128xf32> to vector<128x1xf32>
    %cst_70 = arith.constant 1.250000e-02 : f32
    %178 = vector.broadcast %cst_70 : f32 to vector<128x1xf32>
    %179 = arith.mulf %177, %178 : vector<128x1xf32>
    %180 = arith.mulf %175, %175 : vector<128x80xf32>
    %cst_71 = arith.constant dense<0.000000e+00> : vector<128xf32>
    %181 = vector.multi_reduction <add>, %180, %cst_71 [1] : vector<128x80xf32> to vector<128xf32>
    %182 = vector.shape_cast %181 : vector<128xf32> to vector<128x1xf32>
    %cst_72 = arith.constant 1.250000e-02 : f32
    %183 = vector.broadcast %cst_72 : f32 to vector<128x1xf32>
    %184 = arith.mulf %182, %183 : vector<128x1xf32>
    %185 = arith.mulf %179, %179 : vector<128x1xf32>
    %186 = arith.subf %184, %185 : vector<128x1xf32>
    %cst_73 = arith.constant 0.000000e+00 : f32
    %187 = vector.broadcast %cst_73 : f32 to vector<128x1xf32>
    %188 = arith.maximumf %186, %187 : vector<128x1xf32>
    %c17 = arith.constant 17 : index
    %c0_74 = arith.constant 0 : index
    %189 = vector.load %arg3[%c17, %c0_74] : memref<24x128xf32, #tpu.memory_space<vmem>>, vector<1x80xf32>
    %c18 = arith.constant 18 : index
    %c0_75 = arith.constant 0 : index
    %190 = vector.load %arg3[%c18, %c0_75] : memref<24x128xf32, #tpu.memory_space<vmem>>, vector<1x80xf32>
    %191 = vector.broadcast %179 : vector<128x1xf32> to vector<128x80xf32>
    %192 = arith.subf %175, %191 : vector<128x80xf32>
    %cst_76 = arith.constant 9.99999974E-6 : f32
    %193 = vector.broadcast %cst_76 : f32 to vector<128x1xf32>
    %194 = arith.addf %188, %193 : vector<128x1xf32>
    %195 = math.rsqrt %194 : vector<128x1xf32>
    %196 = vector.broadcast %195 : vector<128x1xf32> to vector<128x80xf32>
    %197 = arith.mulf %192, %196 : vector<128x80xf32>
    %198 = vector.broadcast %189 : vector<1x80xf32> to vector<128x80xf32>
    %199 = arith.mulf %197, %198 : vector<128x80xf32>
    %200 = vector.broadcast %190 : vector<1x80xf32> to vector<128x80xf32>
    %201 = arith.addf %199, %200 : vector<128x80xf32>
    %cst_77 = arith.constant 0.000000e+00 : f32
    %202 = vector.broadcast %cst_77 : f32 to vector<128x80xf32>
    %203 = arith.maximumf %201, %202 : vector<128x80xf32>
    %c328 = arith.constant 328 : index
    %c0_78 = arith.constant 0 : index
    %204 = vector.load %arg2[%c328, %c0_78] : memref<408x128xf32, #tpu.memory_space<vmem>>, vector<80x16xf32>
    %c19 = arith.constant 19 : index
    %c0_79 = arith.constant 0 : index
    %205 = vector.load %arg3[%c19, %c0_79] : memref<24x128xf32, #tpu.memory_space<vmem>>, vector<1x16xf32>
    %cst_80 = arith.constant dense<0.000000e+00> : vector<128x16xf32>
    %206 = tpu.matmul %203, %204, %cst_80 {dimension_numbers = #tpu.dot_dimension_numbers<[1], [0], [0], [1], [0, 0, 1, 1], [], []>} : vector<128x80xf32>, vector<80x16xf32>, vector<128x16xf32> -> vector<128x16xf32>
    %207 = vector.broadcast %205 : vector<1x16xf32> to vector<128x16xf32>
    %208 = arith.addf %206, %207 : vector<128x16xf32>
    %cst_81 = arith.constant dense<0xFF800000> : vector<128xf32>
    %209 = vector.multi_reduction <maximumf>, %208, %cst_81 [1] : vector<128x16xf32> to vector<128xf32>
    %210 = vector.shape_cast %209 : vector<128xf32> to vector<128x1xf32>
    %211 = vector.broadcast %210 : vector<128x1xf32> to vector<128x16xf32>
    %212 = arith.subf %208, %211 : vector<128x16xf32>
    %213 = math.exp %212 : vector<128x16xf32>
    %cst_82 = arith.constant dense<0.000000e+00> : vector<128xf32>
    %214 = vector.multi_reduction <add>, %213, %cst_82 [1] : vector<128x16xf32> to vector<128xf32>
    %215 = vector.shape_cast %214 : vector<128xf32> to vector<128x1xf32>
    %216 = tpu.reciprocal %215 {approx = true} : vector<128x1xf32> -> vector<128x1xf32>
    %217 = arith.mulf %215, %216 : vector<128x1xf32>
    %cst_83 = arith.constant 2.000000e+00 : f32
    %218 = vector.broadcast %cst_83 : f32 to vector<128x1xf32>
    %219 = arith.subf %218, %217 : vector<128x1xf32>
    %220 = arith.mulf %216, %219 : vector<128x1xf32>
    %221 = vector.broadcast %220 : vector<128x1xf32> to vector<128x16xf32>
    %222 = arith.mulf %213, %221 : vector<128x16xf32>
    %c0_84 = arith.constant 0 : index
    %c0_85 = arith.constant 0 : index
    %223 = vector.load %arg4[%c0_84, %c0_85] : memref<128x16xf32, #tpu.memory_space<vmem>>, vector<128x16xf32>
    tpu.vector_store %arg4[%c0_84, %c0_85], %222 {strides = array<i32>} : memref<128x16xf32, #tpu.memory_space<vmem>>, vector<128x16xf32>,
    %c0_86 = arith.constant 0 : index
    %c0_87 = arith.constant 0 : index
    %224 = vector.load %arg5[%c0_86, %c0_87] : memref<128x2xf32, #tpu.memory_space<vmem>>, vector<128x2xf32>
    tpu.vector_store %arg5[%c0_86, %c0_87], %104 {strides = array<i32>} : memref<128x2xf32, #tpu.memory_space<vmem>>, vector<128x2xf32>,
    return
  }
  func.func @transform_0(%arg0: i32) -> (i32, i32) {
    %c0_i32 = arith.constant 0 : i32
    %c0_i32_0 = arith.constant 0 : i32
    return %arg0, %c0_i32 : i32, i32
  }
  func.func @transform_1(%arg0: i32) -> (i32, i32) {
    %c0_i32 = arith.constant 0 : i32
    %c0_i32_0 = arith.constant 0 : i32
    %c0_i32_1 = arith.constant 0 : i32
    return %c0_i32, %c0_i32_0 : i32, i32
  }
  func.func @transform_2(%arg0: i32) -> (i32, i32) {
    %c0_i32 = arith.constant 0 : i32
    %c0_i32_0 = arith.constant 0 : i32
    %c0_i32_1 = arith.constant 0 : i32
    return %c0_i32, %c0_i32_0 : i32, i32
  }
  func.func @transform_3(%arg0: i32) -> (i32, i32) {
    %c0_i32 = arith.constant 0 : i32
    %c0_i32_0 = arith.constant 0 : i32
    return %arg0, %c0_i32 : i32, i32
  }
  func.func @transform_4(%arg0: i32) -> (i32, i32) {
    %c0_i32 = arith.constant 0 : i32
    %c0_i32_0 = arith.constant 0 : i32
    return %arg0, %c0_i32 : i32, i32
  }
}

</mosaic_0001>

<llo_original>
// kernel: wae_forward.1
$region0: #{wae_forward.1}
  #allocation0 [shape = 'u32[]', space=smem, size = 0x4, offset = 0x4, fixed_abs, tag = 'smem constant byte address 0x4 - core index']
  #allocation1 [shape = 'u32[144,128]{1,0:T(1,128)}', space=vmem, size = 0x12000, scoped, tag = 'internal scratch']
  %s0 = inlined_call_operand.vmem [shape: f32[256,16], index: 0, kind: input, shape index: {}]
  %s1 = inlined_call_operand.hbm [shape: f32[408,128], index: 1, kind: input, shape index: {}]
  %s2 = inlined_call_operand.vmem [shape: f32[24,128], index: 2, kind: input, shape index: {}]
  %s3 = inlined_call_operand.vmem [shape: f32[256,16], index: 3, kind: output, shape index: {0}]
  %s4 = inlined_call_operand.vmem [shape: f32[256,2], index: 4, kind: output, shape index: {1}]
  %5 = xla_tuple %s3, %s4
  %s6 = sld [smem:[#allocation0]]
  $region57: #{wae_forward.1} parent=0
    _
  %s8 = ssub.s32 1, %s6
  %s9 = scalar_select 0, %s8, %s6
  $region1: #{wae_forward.1} parent=0
    #allocation2 [shape = 'u8[208896]{0}', space=vmem, size = 0x33000, scoped, tag = 'input window, operand 1, single buffered']
    #allocation3 [shape = 's32[2]{0}', space=sflag, size = 0x8, scoped, tag = 'scoped memory for wae_forward.1']
    %10 = vsyncpa [#allocation3], 0
    loop: start=0, step=1, limit=4
    $region2: #{wae_forward.1} parent=1 // loop_pre_header
      _
    $region3: #{wae_forward.1} parent=1 // loop_header
      %s12 = sphi 0, %s16
      %p13 = scmp.ge.s32.totalorder %s12, 4
      %s22 = sphi 0, %s24
      %s25 = sphi 0, %s22
      %s26 = sphi 0, %s25
      %s42 = sphi 0, %s26
      %s46 = sphi 0, %s46
      %s48 = sphi 0, %s46
      %s49 = sphi 0, %s48
      %s63 = sphi 0, %s49
      %s67 = sphi 0, %s67
      %s69 = sphi 0, %s67
      %s70 = sphi 0, %s69
      %s84 = sphi 0, %s70
      %s90 = sphi 0, %s92
      %s93 = sphi 0, %s90
      %s94 = sphi 0, %s93
      %s110 = sphi 0, %s94
      %s116 = sphi 0, %s118
      %s119 = sphi 0, %s116
      %s120 = sphi 0, %s119
      %s136 = sphi 0, %s120
    $region4: #{wae_forward.1} parent=1 // loop_header_branch
      %15 = sbr.rel (%p13) target = $region8
    $region5: #{wae_forward.1} parent=1 // loop_body
      %s17 = ssub.s32 %s12, 1
      %s18 = ssub.s32 %s12, 2
      %s19 = sadd.s32 %s12, 1
      %s20 = ssub.s32 %s12, %s19
      %p21 = scmp.eq.s32.totalorder %s20, 0
      %s23 = sadd.s32 %s22, 1
      %s24 = scalar_select %p21, %s22, %s23
      %p27 = pneg %p21
      %p28 = scmp.eq.s32.totalorder %s12, 1
      %p29 = por %p27, %p28
      %p30 = scmp.ne.s32.totalorder %s22, %s25
      %p31 = scmp.eq.s32.totalorder %s12, 0
      %p32 = por %p30, %p31
      %p33 = scmp.ne.s32.totalorder %s22, %s25
      %p34 = scmp.eq.s32.totalorder %s17, 1
      %p35 = por %p33, %p34
      %p36 = scmp.ne.s32.totalorder %s25, %s26
      %p37 = scmp.eq.s32.totalorder %s17, 0
      %p38 = por %p36, %p37
      %p39 = scmp.ne.s32.totalorder %s25, %s26
      %p40 = scmp.eq.s32.totalorder %s18, 1
      %p41 = por %p39, %p40
      %p43 = scmp.ne.s32.totalorder %s26, %s42
      %p44 = scmp.eq.s32.totalorder %s18, 0
      %p45 = por %p43, %p44
      %s47 = sadd.s32 %s46, 1
      %p50 = scmp.eq.s32.totalorder %s12, 1
      %p51 = scmp.ne.s32.totalorder %s46, %s48
      %p52 = scmp.eq.s32.totalorder %s12, 0
      %p53 = por %p51, %p52
      %p54 = scmp.ne.s32.totalorder %s46, %s48
      %p55 = scmp.eq.s32.totalorder %s17, 1
      %p56 = por %p54, %p55
      %p57 = scmp.ne.s32.totalorder %s48, %s49
      %p58 = scmp.eq.s32.totalorder %s17, 0
      %p59 = por %p57, %p58
      %p60 = scmp.ne.s32.totalorder %s48, %s49
      %p61 = scmp.eq.s32.totalorder %s18, 1
      %p62 = por %p60, %p61
      %p64 = scmp.ne.s32.totalorder %s49, %s63
      %p65 = scmp.eq.s32.totalorder %s18, 0
      %p66 = por %p64, %p65
      %s68 = sadd.s32 %s67, 1
      %p71 = scmp.eq.s32.totalorder %s12, 1
      %p72 = scmp.ne.s32.totalorder %s67, %s69
      %p73 = scmp.eq.s32.totalorder %s12, 0
      %p74 = por %p72, %p73
      %p75 = scmp.ne.s32.totalorder %s67, %s69
      %p76 = scmp.eq.s32.totalorder %s17, 1
      %p77 = por %p75, %p76
      %p78 = scmp.ne.s32.totalorder %s69, %s70
      %p79 = scmp.eq.s32.totalorder %s17, 0
      %p80 = por %p78, %p79
      %p81 = scmp.ne.s32.totalorder %s69, %s70
      %p82 = scmp.eq.s32.totalorder %s18, 1
      %p83 = por %p81, %p82
      %p85 = scmp.ne.s32.totalorder %s70, %s84
      %p86 = scmp.eq.s32.totalorder %s18, 0
      %p87 = por %p85, %p86
      %s88 = ssub.s32 %s12, %s19
      %p89 = scmp.eq.s32.totalorder %s88, 0
      %s91 = sadd.s32 %s90, 1
      %s92 = scalar_select %p89, %s90, %s91
      %p95 = pneg %p89
      %p96 = scmp.eq.s32.totalorder %s12, 1
      %p97 = por %p95, %p96
      %p98 = scmp.ne.s32.totalorder %s90, %s93
      %p99 = scmp.eq.s32.totalorder %s12, 0
      %p100 = por %p98, %p99
      %p101 = scmp.ne.s32.totalorder %s90, %s93
      %p102 = scmp.eq.s32.totalorder %s17, 1
      %p103 = por %p101, %p102
      %p104 = scmp.ne.s32.totalorder %s93, %s94
      %p105 = scmp.eq.s32.totalorder %s17, 0
      %p106 = por %p104, %p105
      %p107 = scmp.ne.s32.totalorder %s93, %s94
      %p108 = scmp.eq.s32.totalorder %s18, 1
      %p109 = por %p107, %p108
      %p111 = scmp.ne.s32.totalorder %s94, %s110
      %p112 = scmp.eq.s32.totalorder %s18, 0
      %p113 = por %p111, %p112
      %s114 = ssub.s32 %s12, %s19
      %p115 = scmp.eq.s32.totalorder %s114, 0
      %s117 = sadd.s32 %s116, 1
      %s118 = scalar_select %p115, %s116, %s117
      %p121 = pneg %p115
      %p122 = scmp.eq.s32.totalorder %s12, 1
      %p123 = por %p121, %p122
      %p124 = scmp.ne.s32.totalorder %s116, %s119
      %p125 = scmp.eq.s32.totalorder %s12, 0
      %p126 = por %p124, %p125
      %p127 = scmp.ne.s32.totalorder %s116, %s119
      %p128 = scmp.eq.s32.totalorder %s17, 1
      %p129 = por %p127, %p128
      %p130 = scmp.ne.s32.totalorder %s119, %s120
      %p131 = scmp.eq.s32.totalorder %s17, 0
      %p132 = por %p130, %p131
      %p133 = scmp.ne.s32.totalorder %s119, %s120
      %p134 = scmp.eq.s32.totalorder %s18, 1
      %p135 = por %p133, %p134
      %p137 = scmp.ne.s32.totalorder %s120, %s136
      %p138 = scmp.eq.s32.totalorder %s18, 0
      %p139 = por %p137, %p138
      %p140 = scmp.le.s32.totalorder 1, %s12
      %p141 = scmp.lt.s32.totalorder %s12, 3
      %p142 = pnand %p140, %p141
      %p143 = pneg %p142
      // Predicated region
      $region9: #{wae_forward.1} parent=5 // pred_check
        _
      $region10: #{wae_forward.1} parent=5 // pred_check_branch
        %145 = sbr.rel (%p142) target = $region12
      $region11: #{wae_forward.1} parent=5 // pred_region
        %s146 = ssub.s32 %s12, 1
        // Predicated region
        $region13: #{wae_forward.1} parent=11 // pred_check
          %p147 = pneg %p59
        $region14: #{wae_forward.1} parent=11 // pred_check_branch
          %149 = sbr.rel (%p147) target = $region16
        $region15: #{wae_forward.1} parent=11 // pred_region
          %s151 = ssub.s32 6528, 6528
          %152 = vsyncadd [#allocation3], %s151
          %s153 = sshll.u32 [#allocation2], 4
          %s154 = int_to_ptr.vmem [resolvable:$true] %s153
          %159 = dma.hbm_to_vmem [thread:$0]  %s1, 6528, %s154, [#allocation3], 128, 128, 8
        $region16: #{wae_forward.1} parent=11 // pred_fallthru
          _
        // Predicated region
        $region17: #{wae_forward.1} parent=11 // pred_check
          %p160 = pneg %p80
        $region18: #{wae_forward.1} parent=11 // pred_check_branch
          %162 = sbr.rel (%p160) target = $region20
        $region19: #{wae_forward.1} parent=11 // pred_region
          _
        $region20: #{wae_forward.1} parent=11 // pred_fallthru
          _
      $region12: #{wae_forward.1} parent=5 // pred_fallthru
        _
      %p163 = scmp.lt.s32.totalorder %s12, 2
      // Predicated region
      $region21: #{wae_forward.1} parent=5 // pred_check
        %p164 = pneg %p163
      $region22: #{wae_forward.1} parent=5 // pred_check_branch
        %166 = sbr.rel (%p164) target = $region24
      $region23: #{wae_forward.1} parent=5 // pred_region
        // Predicated region
        $region25: #{wae_forward.1} parent=23 // pred_check
          %p167 = pneg %p32
        $region26: #{wae_forward.1} parent=23 // pred_check_branch
          %169 = sbr.rel (%p167) target = $region28
        $region27: #{wae_forward.1} parent=23 // pred_region
          %s170 = smul.u32 16, %s12
          %p171 = scmp.lt.s32.totalorder %s170, 31
          %s172 = scalar_select %p171, %s170, 31
          %s173 = smul.addr %s172, 8
          %s174 = scalar_lea.vmem %s0, %s173
          %s175 = smul.u32 16, %s12
        $region28: #{wae_forward.1} parent=23 // pred_fallthru
          _
      $region24: #{wae_forward.1} parent=5 // pred_fallthru
        _
      %p176 = scmp.le.s32.totalorder 1, %s12
      %p177 = scmp.lt.s32.totalorder %s12, 3
      %p178 = pnand %p176, %p177
      %p179 = pneg %p178
      // Predicated region
      $region29: #{wae_forward.1} parent=5 // pred_check
        _
      $region30: #{wae_forward.1} parent=5 // pred_check_branch
        %181 = sbr.rel (%p178) target = $region32
      $region31: #{wae_forward.1} parent=5 // pred_region
        %s182 = ssub.s32 %s12, 1
        // Predicated region
        $region33: #{wae_forward.1} parent=31 // pred_check
          %p183 = pneg %p59
        $region34: #{wae_forward.1} parent=31 // pred_check_branch
          %185 = sbr.rel (%p183) target = $region36
        $region35: #{wae_forward.1} parent=31 // pred_region
          %186 = dma.done [#allocation3], 6528
        $region36: #{wae_forward.1} parent=31 // pred_fallthru
          _
        %s187 = smul.u32 16, %s17
        %p188 = scmp.lt.s32.totalorder %s187, 31
        %s189 = scalar_select %p188, %s187, 31
        %s190 = smul.addr %s189, 8
        %s191 = scalar_lea.vmem %s0, %s190
        %p192 = pneg %p38
        %p193 = pneg %p35
        %p194 = pneg %p59
        %p195 = pneg %p56
        %p196 = pneg %p80
        %p197 = pneg %p77
        %p198 = pneg %p106
        %p199 = pneg %p103
        %s200 = smul.u32 16, %s17
        %p201 = scmp.lt.s32.totalorder %s200, 31
        %s202 = scalar_select %p201, %s200, 31
        %s203 = smul.addr %s202, 8
        %s204 = scalar_lea.vmem %s3, %s203
        %p205 = pneg %p132
        %p206 = pneg %p129
        %s207 = smul.u32 16, %s17
        %p208 = scmp.lt.s32.totalorder %s207, 31
        %s209 = scalar_select %p208, %s207, 31
        %s210 = smul.addr %s209, 8
        %s211 = scalar_lea.vmem %s4, %s210
        %s212 = smul.u32 16, %s17
        %p213 = scmp.lt.s32.totalorder %s212, 31
        %s214 = scalar_select %p213, %s212, 31
        %s215 = smul.addr %s214, 8
        %s216 = scalar_lea.vmem %s0, %s215
        %s217 = smul.u32 16, %s17
        %s218 = smul.u32 16, %s17
        %p219 = scmp.lt.s32.totalorder %s218, 31
        %s220 = scalar_select %p219, %s218, 31
        %s221 = smul.addr %s220, 8
        %s222 = scalar_lea.vmem %s3, %s221
        %s223 = smul.u32 16, %s17
        %s224 = smul.u32 16, %s17
        %p225 = scmp.lt.s32.totalorder %s224, 31
        %s226 = scalar_select %p225, %s224, 31
        %s227 = smul.addr %s226, 8
        %s228 = scalar_lea.vmem %s4, %s227
        %s229 = smul.u32 16, %s17
        %v230 = vld [vmem:[%s216] sm:$0xff]
        %v231 = vld [vmem:[%s216 + $0x8] sm:$0xff]
        %v232 = vld [vmem:[%s216 + $0x10] sm:$0xff]
        %v233 = vld [vmem:[%s216 + $0x18] sm:$0xff]
        %v234 = vld [vmem:[%s216 + $0x20] sm:$0xff]
        %v235 = vld [vmem:[%s216 + $0x28] sm:$0xff]
        %v236 = vld [vmem:[%s216 + $0x30] sm:$0xff]
        %v237 = vld [vmem:[%s216 + $0x38] sm:$0xff]
        %v238 = vld [vmem:[%s216 + $0x40] sm:$0xff]
        %v239 = vld [vmem:[%s216 + $0x48] sm:$0xff]
        %v240 = vld [vmem:[%s216 + $0x50] sm:$0xff]
        %v241 = vld [vmem:[%s216 + $0x58] sm:$0xff]
        %v242 = vld [vmem:[%s216 + $0x60] sm:$0xff]
        %v243 = vld [vmem:[%s216 + $0x68] sm:$0xff]
        %v244 = vld [vmem:[%s216 + $0x70] sm:$0xff]
        %v245 = vld [vmem:[%s216 + $0x78] sm:$0xff]
        %v246 = vld [vmem:[#allocation2] sm:$0xff]
        %v247 = vld [vmem:[#allocation2 + $0x8] sm:$0xff]
        %v248 = vld [vmem:[%s2] sm:$0x1]
        %v249 = vlaneseq
        %v250 = vshrl.u32 %v249, 7
        %v251 = vsub.s32 0, %v250
        %v252 = vrot.slane %v248, %v251
        %vm253 = vcmask 130048
        %v255 = vsel %vm253, %v230, 0
        %v258 = vsel %vm253, %v231, 0
        %v261 = vsel %vm253, %v232, 0
        %v264 = vsel %vm253, %v233, 0
        %v267 = vsel %vm253, %v234, 0
        %v270 = vsel %vm253, %v235, 0
        %v273 = vsel %vm253, %v236, 0
        %v276 = vsel %vm253, %v237, 0
        %v279 = vsel %vm253, %v238, 0
        %v282 = vsel %vm253, %v239, 0
        %v285 = vsel %vm253, %v240, 0
        %v288 = vsel %vm253, %v241, 0
        %v291 = vsel %vm253, %v242, 0
        %v294 = vsel %vm253, %v243, 0
        %v297 = vsel %vm253, %v244, 0
        %v300 = vsel %vm253, %v245, 0
        %302 = vmatprep.subr.mxu0 0.0
        %303 = vmatpush1.msra.mxu0 0.0
        %304 = vmatprep.subr.mxu0 0.0
        %305 = vmatpush1.msra.mxu0 0.0
        %306 = vmatprep.subr.mxu0 0.0
        %307 = vmatpush1.msra.mxu0 0.0
        %308 = vmatprep.subr.mxu0 0.0
        %309 = vmatpush1.msra.mxu0 0.0
        %310 = vmatprep.subr.mxu0 0.0
        %311 = vmatpush1.msra.mxu0 0.0
        %312 = vmatprep.subr.mxu0 0.0
        %313 = vmatpush1.msra.mxu0 0.0
        %314 = vmatprep.subr.mxu0 0.0
        %315 = vmatpush1.msra.mxu0 0.0
        %316 = vmatprep.subr.mxu0 0.0
        %317 = vmatpush1.msra.mxu0 0.0
        %318 = vmatprep.subr.mxu0 0.0
        %319 = vmatpush1.msra.mxu0 0.0
        %320 = vmatprep.subr.mxu0 0.0
        %321 = vmatpush1.msra.mxu0 0.0
        %322 = vmatprep.subr.mxu0 0.0
        %323 = vmatpush1.msra.mxu0 0.0
        %324 = vmatprep.subr.mxu0 0.0
        %325 = vmatpush1.msra.mxu0 0.0
        %326 = vmatprep.subr.mxu0 0.0
        %327 = vmatpush1.msra.mxu0 0.0
        %328 = vmatprep.subr.mxu0 0.0
        %329 = vmatpush1.msra.mxu0 0.0
        %330 = vmatprep.subr.mxu0 0.0
        %331 = vmatpush1.msra.mxu0 %v247
        %332 = vmatprep.subr.mxu0 0.0
        %333 = vmatpush1.msra.mxu0 %v246
        %334 = vmatprep.subr.mxu0 0.0
        %335 = vmatpush2.msra.mxu0 0.0
        %336 = vmatprep.subr.mxu0 0.0
        %337 = vmatpush2.msra.mxu0 0.0
        %338 = vmatprep.subr.mxu0 0.0
        %339 = vmatpush2.msra.mxu0 0.0
        %340 = vmatprep.subr.mxu0 0.0
        %341 = vmatpush2.msra.mxu0 0.0
        %342 = vmatprep.subr.mxu0 0.0
        %343 = vmatpush2.msra.mxu0 0.0
        %344 = vmatprep.subr.mxu0 0.0
        %345 = vmatpush2.msra.mxu0 0.0
        %346 = vmatprep.subr.mxu0 0.0
        %347 = vmatpush2.msra.mxu0 0.0
        %348 = vmatprep.subr.mxu0 0.0
        %349 = vmatpush2.msra.mxu0 0.0
        %350 = vmatprep.subr.mxu0 0.0
        %351 = vmatpush2.msra.mxu0 0.0
        %352 = vmatprep.subr.mxu0 0.0
        %353 = vmatpush2.msra.mxu0 0.0
        %354 = vmatprep.subr.mxu0 0.0
        %355 = vmatpush2.msra.mxu0 0.0
        %356 = vmatprep.subr.mxu0 0.0
        %357 = vmatpush2.msra.mxu0 0.0
        %358 = vmatprep.subr.mxu0 0.0
        %359 = vmatpush2.msra.mxu0 0.0
        %360 = vmatprep.subr.mxu0 0.0
        %361 = vmatpush2.msra.mxu0 0.0
        %362 = vmatprep.subr.mxu0 0.0
        %363 = vmatpush2.msra.mxu0 0.0
        %364 = vmatprep.subr.mxu0 0.0
        %365 = vmatpush2.msra.mxu0 0.0
        %366 = vmatprep.mubr.f32.mxu0 0.0
        %367 = vmatmul.mubr.f32.gmra.mxu0 %v255
        %v368 = vpop.f32.mrf.mxu0
        %v369 = vadd.f32 %v252, %v368
        %v370 = vpop.f32.mrf.mxu0
        %371 = vmatprep.mubr.f32.mxu0 0.0
        %372 = vmatmul.mubr.f32.gmra.mxu0 %v258
        %v373 = vpop.f32.mrf.mxu0
        %v374 = vadd.f32 %v252, %v373
        %v375 = vpop.f32.mrf.mxu0
        %376 = vmatprep.mubr.f32.mxu0 0.0
        %377 = vmatmul.mubr.f32.gmra.mxu0 %v261
        %v378 = vpop.f32.mrf.mxu0
        %v379 = vadd.f32 %v252, %v378
        %v380 = vpop.f32.mrf.mxu0
        %381 = vmatprep.mubr.f32.mxu0 0.0
        %382 = vmatmul.mubr.f32.gmra.mxu0 %v264
        %v383 = vpop.f32.mrf.mxu0
        %v384 = vadd.f32 %v252, %v383
        %v385 = vpop.f32.mrf.mxu0
        %386 = vmatprep.mubr.f32.mxu0 0.0
        %387 = vmatmul.mubr.f32.gmra.mxu0 %v267
        %v388 = vpop.f32.mrf.mxu0
        %v389 = vadd.f32 %v252, %v388
        %v390 = vpop.f32.mrf.mxu0
        %391 = vmatprep.mubr.f32.mxu0 0.0
        %392 = vmatmul.mubr.f32.gmra.mxu0 %v270
        %v393 = vpop.f32.mrf.mxu0
        %v394 = vadd.f32 %v252, %v393
        %v395 = vpop.f32.mrf.mxu0
        %396 = vmatprep.mubr.f32.mxu0 0.0
        %397 = vmatmul.mubr.f32.gmra.mxu0 %v273
        %v398 = vpop.f32.mrf.mxu0
        %v399 = vadd.f32 %v252, %v398
        %v400 = vpop.f32.mrf.mxu0
        %401 = vmatprep.mubr.f32.mxu0 0.0
        %402 = vmatmul.mubr.f32.gmra.mxu0 %v276
        %v403 = vpop.f32.mrf.mxu0
        %v404 = vadd.f32 %v252, %v403
        %v405 = vpop.f32.mrf.mxu0
        %406 = vmatprep.mubr.f32.mxu0 0.0
        %407 = vmatmul.mubr.f32.gmra.mxu0 %v279
        %v408 = vpop.f32.mrf.mxu0
        %v409 = vadd.f32 %v252, %v408
        %v410 = vpop.f32.mrf.mxu0
        %411 = vmatprep.mubr.f32.mxu0 0.0
        %412 = vmatmul.mubr.f32.gmra.mxu0 %v282
        %v413 = vpop.f32.mrf.mxu0
        %v414 = vadd.f32 %v252, %v413
        %v415 = vpop.f32.mrf.mxu0
        %416 = vmatprep.mubr.f32.mxu0 0.0
        %417 = vmatmul.mubr.f32.gmra.mxu0 %v285
        %v418 = vpop.f32.mrf.mxu0
        %v419 = vadd.f32 %v252, %v418
        %v420 = vpop.f32.mrf.mxu0
        %421 = vmatprep.mubr.f32.mxu0 0.0
        %422 = vmatmul.mubr.f32.gmra.mxu0 %v288
        %v423 = vpop.f32.mrf.mxu0
        %v424 = vadd.f32 %v252, %v423
        %v425 = vpop.f32.mrf.mxu0
        %426 = vmatprep.mubr.f32.mxu0 0.0
        %427 = vmatmul.mubr.f32.gmra.mxu0 %v291
        %v428 = vpop.f32.mrf.mxu0
        %v429 = vadd.f32 %v252, %v428
        %v430 = vpop.f32.mrf.mxu0
        %431 = vmatprep.mubr.f32.mxu0 0.0
        %432 = vmatmul.mubr.f32.gmra.mxu0 %v294
        %v433 = vpop.f32.mrf.mxu0
        %v434 = vadd.f32 %v252, %v433
        %v435 = vpop.f32.mrf.mxu0
        %436 = vmatprep.mubr.f32.mxu0 0.0
        %437 = vmatmul.mubr.f32.gmra.mxu0 %v297
        %v438 = vpop.f32.mrf.mxu0
        %v439 = vadd.f32 %v252, %v438
        %v440 = vpop.f32.mrf.mxu0
        %441 = vmatprep.mubr.f32.mxu0 0.0
        %442 = vmatmul.mubr.f32.gmra.mxu0 %v300
        %v443 = vpop.f32.mrf.mxu0
        %v444 = vadd.f32 %v252, %v443
        %v445 = vpop.f32.mrf.mxu0
        %446 = vdwg.mxu0
        %vm447 = vcmask 654336
        %v448 = vsel %vm447, %v369, 0.0
        %449 = vadd.xlane.f32.xlu0 %v448
        %v450 = vpop.xlane.xlu0 %449
        %v451 = vsel %vm447, %v374, 0.0
        %452 = vadd.xlane.f32.xlu0 %v451
        %v453 = vpop.xlane.xlu0 %452
        %v454 = vsel %vm447, %v379, 0.0
        %455 = vadd.xlane.f32.xlu0 %v454
        %v456 = vpop.xlane.xlu0 %455
        %v457 = vsel %vm447, %v384, 0.0
        %458 = vadd.xlane.f32.xlu0 %v457
        %v459 = vpop.xlane.xlu0 %458
        %v460 = vsel %vm447, %v389, 0.0
        %461 = vadd.xlane.f32.xlu0 %v460
        %v462 = vpop.xlane.xlu0 %461
        %v463 = vsel %vm447, %v394, 0.0
        %464 = vadd.xlane.f32.xlu0 %v463
        %v465 = vpop.xlane.xlu0 %464
        %v466 = vsel %vm447, %v399, 0.0
        %467 = vadd.xlane.f32.xlu0 %v466
        %v468 = vpop.xlane.xlu0 %467
        %v469 = vsel %vm447, %v404, 0.0
        %470 = vadd.xlane.f32.xlu0 %v469
        %v471 = vpop.xlane.xlu0 %470
        %v472 = vsel %vm447, %v409, 0.0
        %473 = vadd.xlane.f32.xlu0 %v472
        %v474 = vpop.xlane.xlu0 %473
        %v475 = vsel %vm447, %v414, 0.0
        %476 = vadd.xlane.f32.xlu0 %v475
        %v477 = vpop.xlane.xlu0 %476
        %v478 = vsel %vm447, %v419, 0.0
        %479 = vadd.xlane.f32.xlu0 %v478
        %v480 = vpop.xlane.xlu0 %479
        %v481 = vsel %vm447, %v424, 0.0
        %482 = vadd.xlane.f32.xlu0 %v481
        %v483 = vpop.xlane.xlu0 %482
        %v484 = vsel %vm447, %v429, 0.0
        %485 = vadd.xlane.f32.xlu0 %v484
        %v486 = vpop.xlane.xlu0 %485
        %v487 = vsel %vm447, %v434, 0.0
        %488 = vadd.xlane.f32.xlu0 %v487
        %v489 = vpop.xlane.xlu0 %488
        %v490 = vsel %vm447, %v439, 0.0
        %491 = vadd.xlane.f32.xlu0 %v490
        %v492 = vpop.xlane.xlu0 %491
        %v493 = vsel %vm447, %v444, 0.0
        %494 = vadd.xlane.f32.xlu0 %v493
        %v495 = vpop.xlane.xlu0 %494
        %v496 = vmul.f32 %v450, 0.0125
        %v497 = vmul.f32 %v453, 0.0125
        %v498 = vmul.f32 %v456, 0.0125
        %v499 = vmul.f32 %v459, 0.0125
        %v500 = vmul.f32 %v462, 0.0125
        %v501 = vmul.f32 %v465, 0.0125
        %v502 = vmul.f32 %v468, 0.0125
        %v503 = vmul.f32 %v471, 0.0125
        %v504 = vmul.f32 %v474, 0.0125
        %v505 = vmul.f32 %v477, 0.0125
        %v506 = vmul.f32 %v480, 0.0125
        %v507 = vmul.f32 %v483, 0.0125
        %v508 = vmul.f32 %v486, 0.0125
        %v509 = vmul.f32 %v489, 0.0125
        %v510 = vmul.f32 %v492, 0.0125
        %v511 = vmul.f32 %v495, 0.0125
        %v512 = vmul.f32 %v369, %v369
        %v513 = vmul.f32 %v374, %v374
        %v514 = vmul.f32 %v379, %v379
        %v515 = vmul.f32 %v384, %v384
        %v516 = vmul.f32 %v389, %v389
        %v517 = vmul.f32 %v394, %v394
        %v518 = vmul.f32 %v399, %v399
        %v519 = vmul.f32 %v404, %v404
        %v520 = vmul.f32 %v409, %v409
        %v521 = vmul.f32 %v414, %v414
        %v522 = vmul.f32 %v419, %v419
        %v523 = vmul.f32 %v424, %v424
        %v524 = vmul.f32 %v429, %v429
        %v525 = vmul.f32 %v434, %v434
        %v526 = vmul.f32 %v439, %v439
        %v527 = vmul.f32 %v444, %v444
        %v528 = vsel %vm447, %v512, 0.0
        %529 = vadd.xlane.f32.xlu0 %v528
        %v530 = vpop.xlane.xlu0 %529
        %v531 = vsel %vm447, %v513, 0.0
        %532 = vadd.xlane.f32.xlu0 %v531
        %v533 = vpop.xlane.xlu0 %532
        %v534 = vsel %vm447, %v514, 0.0
        %535 = vadd.xlane.f32.xlu0 %v534
        %v536 = vpop.xlane.xlu0 %535
        %v537 = vsel %vm447, %v515, 0.0
        %538 = vadd.xlane.f32.xlu0 %v537
        %v539 = vpop.xlane.xlu0 %538
        %v540 = vsel %vm447, %v516, 0.0
        %541 = vadd.xlane.f32.xlu0 %v540
        %v542 = vpop.xlane.xlu0 %541
        %v543 = vsel %vm447, %v517, 0.0
        %544 = vadd.xlane.f32.xlu0 %v543
        %v545 = vpop.xlane.xlu0 %544
        %v546 = vsel %vm447, %v518, 0.0
        %547 = vadd.xlane.f32.xlu0 %v546
        %v548 = vpop.xlane.xlu0 %547
        %v549 = vsel %vm447, %v519, 0.0
        %550 = vadd.xlane.f32.xlu0 %v549
        %v551 = vpop.xlane.xlu0 %550
        %v552 = vsel %vm447, %v520, 0.0
        %553 = vadd.xlane.f32.xlu0 %v552
        %v554 = vpop.xlane.xlu0 %553
        %v555 = vsel %vm447, %v521, 0.0
        %556 = vadd.xlane.f32.xlu0 %v555
        %v557 = vpop.xlane.xlu0 %556
        %v558 = vsel %vm447, %v522, 0.0
        %559 = vadd.xlane.f32.xlu0 %v558
        %v560 = vpop.xlane.xlu0 %559
        %v561 = vsel %vm447, %v523, 0.0
        %562 = vadd.xlane.f32.xlu0 %v561
        %v563 = vpop.xlane.xlu0 %562
        %v564 = vsel %vm447, %v524, 0.0
        %565 = vadd.xlane.f32.xlu0 %v564
        %v566 = vpop.xlane.xlu0 %565
        %v567 = vsel %vm447, %v525, 0.0
        %568 = vadd.xlane.f32.xlu0 %v567
        %v569 = vpop.xlane.xlu0 %568
        %v570 = vsel %vm447, %v526, 0.0
        %571 = vadd.xlane.f32.xlu0 %v570
        %v572 = vpop.xlane.xlu0 %571
        %v573 = vsel %vm447, %v527, 0.0
        %574 = vadd.xlane.f32.xlu0 %v573
        %v575 = vpop.xlane.xlu0 %574
        %v576 = vmul.f32 %v530, 0.0125
        %v577 = vmul.f32 %v533, 0.0125
        %v578 = vmul.f32 %v536, 0.0125
        %v579 = vmul.f32 %v539, 0.0125
        %v580 = vmul.f32 %v542, 0.0125
        %v581 = vmul.f32 %v545, 0.0125
        %v582 = vmul.f32 %v548, 0.0125
        %v583 = vmul.f32 %v551, 0.0125
        %v584 = vmul.f32 %v554, 0.0125
        %v585 = vmul.f32 %v557, 0.0125
        %v586 = vmul.f32 %v560, 0.0125
        %v587 = vmul.f32 %v563, 0.0125
        %v588 = vmul.f32 %v566, 0.0125
        %v589 = vmul.f32 %v569, 0.0125
        %v590 = vmul.f32 %v572, 0.0125
        %v591 = vmul.f32 %v575, 0.0125
        %v592 = vmul.f32 %v496, %v496
        %v593 = vmul.f32 %v497, %v497
        %v594 = vmul.f32 %v498, %v498
        %v595 = vmul.f32 %v499, %v499
        %v596 = vmul.f32 %v500, %v500
        %v597 = vmul.f32 %v501, %v501
        %v598 = vmul.f32 %v502, %v502
        %v599 = vmul.f32 %v503, %v503
        %v600 = vmul.f32 %v504, %v504
        %v601 = vmul.f32 %v505, %v505
        %v602 = vmul.f32 %v506, %v506
        %v603 = vmul.f32 %v507, %v507
        %v604 = vmul.f32 %v508, %v508
        %v605 = vmul.f32 %v509, %v509
        %v606 = vmul.f32 %v510, %v510
        %v607 = vmul.f32 %v511, %v511
        %v608 = vsub.f32 %v576, %v592
        %v609 = vsub.f32 %v577, %v593
        %v610 = vsub.f32 %v578, %v594
        %v611 = vsub.f32 %v579, %v595
        %v612 = vsub.f32 %v580, %v596
        %v613 = vsub.f32 %v581, %v597
        %v614 = vsub.f32 %v582, %v598
        %v615 = vsub.f32 %v583, %v599
        %v616 = vsub.f32 %v584, %v600
        %v617 = vsub.f32 %v585, %v601
        %v618 = vsub.f32 %v586, %v602
        %v619 = vsub.f32 %v587, %v603
        %v620 = vsub.f32 %v588, %v604
        %v621 = vsub.f32 %v589, %v605
        %v622 = vsub.f32 %v590, %v606
        %v623 = vsub.f32 %v591, %v607
        %v624 = vmax.f32 %v608, 0.0
        %v625 = vmax.f32 %v609, 0.0
        %v626 = vmax.f32 %v610, 0.0
        %v627 = vmax.f32 %v611, 0.0
        %v628 = vmax.f32 %v612, 0.0
        %v629 = vmax.f32 %v613, 0.0
        %v630 = vmax.f32 %v614, 0.0
        %v631 = vmax.f32 %v615, 0.0
        %v632 = vmax.f32 %v616, 0.0
        %v633 = vmax.f32 %v617, 0.0
        %v634 = vmax.f32 %v618, 0.0
        %v635 = vmax.f32 %v619, 0.0
        %v636 = vmax.f32 %v620, 0.0
        %v637 = vmax.f32 %v621, 0.0
        %v638 = vmax.f32 %v622, 0.0
        %v639 = vmax.f32 %v623, 0.0
        %v640 = vld [vmem:[%s2 + $0x1] sm:$0x1]
        %v641 = vld [vmem:[%s2 + $0x2] sm:$0x1]
        %v642 = vsub.f32 %v369, %v496
        %v643 = vsub.f32 %v374, %v497
        %v644 = vsub.f32 %v379, %v498
        %v645 = vsub.f32 %v384, %v499
        %v646 = vsub.f32 %v389, %v500
        %v647 = vsub.f32 %v394, %v501
        %v648 = vsub.f32 %v399, %v502
        %v649 = vsub.f32 %v404, %v503
        %v650 = vsub.f32 %v409, %v504
        %v651 = vsub.f32 %v414, %v505
        %v652 = vsub.f32 %v419, %v506
        %v653 = vsub.f32 %v424, %v507
        %v654 = vsub.f32 %v429, %v508
        %v655 = vsub.f32 %v434, %v509
        %v656 = vsub.f32 %v439, %v510
        %v657 = vsub.f32 %v444, %v511
        %v658 = vadd.f32 %v624, 1e-05
        %v659 = vadd.f32 %v625, 1e-05
        %v660 = vadd.f32 %v626, 1e-05
        %v661 = vadd.f32 %v627, 1e-05
        %v662 = vadd.f32 %v628, 1e-05
        %v663 = vadd.f32 %v629, 1e-05
        %v664 = vadd.f32 %v630, 1e-05
        %v665 = vadd.f32 %v631, 1e-05
        %v666 = vadd.f32 %v632, 1e-05
        %v667 = vadd.f32 %v633, 1e-05
        %v668 = vadd.f32 %v634, 1e-05
        %v669 = vadd.f32 %v635, 1e-05
        %v670 = vadd.f32 %v636, 1e-05
        %v671 = vadd.f32 %v637, 1e-05
        %v672 = vadd.f32 %v638, 1e-05
        %v673 = vadd.f32 %v639, 1e-05
        %v674 = vrsqrt.pop %v658
        %v675 = vrsqrt.pop %v659
        %v676 = vrsqrt.pop %v660
        %v677 = vrsqrt.pop %v661
        %v678 = vrsqrt.pop %v662
        %v679 = vrsqrt.pop %v663
        %v680 = vrsqrt.pop %v664
        %v681 = vrsqrt.pop %v665
        %v682 = vrsqrt.pop %v666
        %v683 = vrsqrt.pop %v667
        %v684 = vrsqrt.pop %v668
        %v685 = vrsqrt.pop %v669
        %v686 = vrsqrt.pop %v670
        %v687 = vrsqrt.pop %v671
        %v688 = vrsqrt.pop %v672
        %v689 = vrsqrt.pop %v673
        %v690 = vmul.f32 %v642, %v674
        %v691 = vmul.f32 %v643, %v675
        %v692 = vmul.f32 %v644, %v676
        %v693 = vmul.f32 %v645, %v677
        %v694 = vmul.f32 %v646, %v678
        %v695 = vmul.f32 %v647, %v679
        %v696 = vmul.f32 %v648, %v680
        %v697 = vmul.f32 %v649, %v681
        %v698 = vmul.f32 %v650, %v682
        %v699 = vmul.f32 %v651, %v683
        %v700 = vmul.f32 %v652, %v684
        %v701 = vmul.f32 %v653, %v685
        %v702 = vmul.f32 %v654, %v686
        %v703 = vmul.f32 %v655, %v687
        %v704 = vmul.f32 %v656, %v688
        %v705 = vmul.f32 %v657, %v689
        %v706 = vlaneseq
        %v707 = vshrl.u32 %v706, 7
        %v708 = vsub.s32 0, %v707
        %v709 = vrot.slane %v640, %v708
        %v710 = vmul.f32 %v690, %v709
        %v711 = vmul.f32 %v691, %v709
        %v712 = vmul.f32 %v692, %v709
        %v713 = vmul.f32 %v693, %v709
        %v714 = vmul.f32 %v694, %v709
        %v715 = vmul.f32 %v695, %v709
        %v716 = vmul.f32 %v696, %v709
        %v717 = vmul.f32 %v697, %v709
        %v718 = vmul.f32 %v698, %v709
        %v719 = vmul.f32 %v699, %v709
        %v720 = vmul.f32 %v700, %v709
        %v721 = vmul.f32 %v701, %v709
        %v722 = vmul.f32 %v702, %v709
        %v723 = vmul.f32 %v703, %v709
        %v724 = vmul.f32 %v704, %v709
        %v725 = vmul.f32 %v705, %v709
        %v726 = vlaneseq
        %v727 = vshrl.u32 %v726, 7
        %v728 = vsub.s32 0, %v727
        %v729 = vrot.slane %v641, %v728
        %v730 = vadd.f32 %v710, %v729
        %v731 = vadd.f32 %v711, %v729
        %v732 = vadd.f32 %v712, %v729
        %v733 = vadd.f32 %v713, %v729
        %v734 = vadd.f32 %v714, %v729
        %v735 = vadd.f32 %v715, %v729
        %v736 = vadd.f32 %v716, %v729
        %v737 = vadd.f32 %v717, %v729
        %v738 = vadd.f32 %v718, %v729
        %v739 = vadd.f32 %v719, %v729
        %v740 = vadd.f32 %v720, %v729
        %v741 = vadd.f32 %v721, %v729
        %v742 = vadd.f32 %v722, %v729
        %v743 = vadd.f32 %v723, %v729
        %v744 = vadd.f32 %v724, %v729
        %v745 = vadd.f32 %v725, %v729
        %v746 = vmax.f32 %v730, 0.0
        %v747 = vmax.f32 %v731, 0.0
        %v748 = vmax.f32 %v732, 0.0
        %v749 = vmax.f32 %v733, 0.0
        %v750 = vmax.f32 %v734, 0.0
        %v751 = vmax.f32 %v735, 0.0
        %v752 = vmax.f32 %v736, 0.0
        %v753 = vmax.f32 %v737, 0.0
        %v754 = vmax.f32 %v738, 0.0
        %v755 = vmax.f32 %v739, 0.0
        %v756 = vmax.f32 %v740, 0.0
        %v757 = vmax.f32 %v741, 0.0
        %v758 = vmax.f32 %v742, 0.0
        %v759 = vmax.f32 %v743, 0.0
        %v760 = vmax.f32 %v744, 0.0
        %v761 = vmax.f32 %v745, 0.0
        %v762 = vld [vmem:[#allocation2 + $0x10] sm:$0xff]
        %v763 = vld [vmem:[#allocation2 + $0x18] sm:$0xff]
        %v764 = vld [vmem:[#allocation2 + $0x20] sm:$0xff]
        %v765 = vld [vmem:[#allocation2 + $0x28] sm:$0xff]
        %v766 = vld [vmem:[#allocation2 + $0x30] sm:$0xff]
        %v767 = vld [vmem:[#allocation2 + $0x38] sm:$0xff]
        %v768 = vld [vmem:[#allocation2 + $0x40] sm:$0xff]
        %v769 = vld [vmem:[#allocation2 + $0x48] sm:$0xff]
        %v770 = vld [vmem:[#allocation2 + $0x50] sm:$0xff]
        %v771 = vld [vmem:[#allocation2 + $0x58] sm:$0xff]
        %v772 = vld [vmem:[%s2 + $0x3] sm:$0x1]
        %v773 = vlaneseq
        %v774 = vshrl.u32 %v773, 7
        %v775 = vsub.s32 0, %v774
        %v776 = vrot.slane %v772, %v775
        %v778 = vsel %vm447, %v746, 0
        %v781 = vsel %vm447, %v747, 0
        %v784 = vsel %vm447, %v748, 0
        %v787 = vsel %vm447, %v749, 0
        %v790 = vsel %vm447, %v750, 0
        %v793 = vsel %vm447, %v751, 0
        %v796 = vsel %vm447, %v752, 0
        %v799 = vsel %vm447, %v753, 0
        %v802 = vsel %vm447, %v754, 0
        %v805 = vsel %vm447, %v755, 0
        %v808 = vsel %vm447, %v756, 0
        %v811 = vsel %vm447, %v757, 0
        %v814 = vsel %vm447, %v758, 0
        %v817 = vsel %vm447, %v759, 0
        %v820 = vsel %vm447, %v760, 0
        %v823 = vsel %vm447, %v761, 0
        %825 = vmatprep.subr.mxu0 0.0
        %826 = vmatpush1.msra.mxu0 0.0
        %827 = vmatprep.subr.mxu0 0.0
        %828 = vmatpush1.msra.mxu0 0.0
        %829 = vmatprep.subr.mxu0 0.0
        %830 = vmatpush1.msra.mxu0 0.0
        %831 = vmatprep.subr.mxu0 0.0
        %832 = vmatpush1.msra.mxu0 0.0
        %833 = vmatprep.subr.mxu0 0.0
        %834 = vmatpush1.msra.mxu0 0.0
        %835 = vmatprep.subr.mxu0 0.0
        %836 = vmatpush1.msra.mxu0 0.0
        %837 = vmatprep.subr.mxu0 0.0
        %838 = vmatpush1.msra.mxu0 %v771
        %839 = vmatprep.subr.mxu0 0.0
        %840 = vmatpush1.msra.mxu0 %v770
        %841 = vmatprep.subr.mxu0 0.0
        %842 = vmatpush1.msra.mxu0 %v769
        %843 = vmatprep.subr.mxu0 0.0
        %844 = vmatpush1.msra.mxu0 %v768
        %845 = vmatprep.subr.mxu0 0.0
        %846 = vmatpush1.msra.mxu0 %v767
        %847 = vmatprep.subr.mxu0 0.0
        %848 = vmatpush1.msra.mxu0 %v766
        %849 = vmatprep.subr.mxu0 0.0
        %850 = vmatpush1.msra.mxu0 %v765
        %851 = vmatprep.subr.mxu0 0.0
        %852 = vmatpush1.msra.mxu0 %v764
        %853 = vmatprep.subr.mxu0 0.0
        %854 = vmatpush1.msra.mxu0 %v763
        %855 = vmatprep.subr.mxu0 0.0
        %856 = vmatpush1.msra.mxu0 %v762
        %857 = vmatprep.subr.mxu0 0.0
        %858 = vmatpush2.msra.mxu0 0.0
        %859 = vmatprep.subr.mxu0 0.0
        %860 = vmatpush2.msra.mxu0 0.0
        %861 = vmatprep.subr.mxu0 0.0
        %862 = vmatpush2.msra.mxu0 0.0
        %863 = vmatprep.subr.mxu0 0.0
        %864 = vmatpush2.msra.mxu0 0.0
        %865 = vmatprep.subr.mxu0 0.0
        %866 = vmatpush2.msra.mxu0 0.0
        %867 = vmatprep.subr.mxu0 0.0
        %868 = vmatpush2.msra.mxu0 0.0
        %869 = vmatprep.subr.mxu0 0.0
        %870 = vmatpush2.msra.mxu0 0.0
        %871 = vmatprep.subr.mxu0 0.0
        %872 = vmatpush2.msra.mxu0 0.0
        %873 = vmatprep.subr.mxu0 0.0
        %874 = vmatpush2.msra.mxu0 0.0
        %875 = vmatprep.subr.mxu0 0.0
        %876 = vmatpush2.msra.mxu0 0.0
        %877 = vmatprep.subr.mxu0 0.0
        %878 = vmatpush2.msra.mxu0 0.0
        %879 = vmatprep.subr.mxu0 0.0
        %880 = vmatpush2.msra.mxu0 0.0
        %881 = vmatprep.subr.mxu0 0.0
        %882 = vmatpush2.msra.mxu0 0.0
        %883 = vmatprep.subr.mxu0 0.0
        %884 = vmatpush2.msra.mxu0 0.0
        %885 = vmatprep.subr.mxu0 0.0
        %886 = vmatpush2.msra.mxu0 0.0
        %887 = vmatprep.subr.mxu0 0.0
        %888 = vmatpush2.msra.mxu0 0.0
        %889 = vmatprep.mubr.f32.mxu0 0.0
        %890 = vmatmul.mubr.f32.gmra.mxu0 %v778
        %v891 = vpop.f32.mrf.mxu0
        %v892 = vadd.f32 %v776, %v891
        %v893 = vpop.f32.mrf.mxu0
        %894 = vmatprep.mubr.f32.mxu0 0.0
        %895 = vmatmul.mubr.f32.gmra.mxu0 %v781
        %v896 = vpop.f32.mrf.mxu0
        %v897 = vadd.f32 %v776, %v896
        %v898 = vpop.f32.mrf.mxu0
        %899 = vmatprep.mubr.f32.mxu0 0.0
        %900 = vmatmul.mubr.f32.gmra.mxu0 %v784
        %v901 = vpop.f32.mrf.mxu0
        %v902 = vadd.f32 %v776, %v901
        %v903 = vpop.f32.mrf.mxu0
        %904 = vmatprep.mubr.f32.mxu0 0.0
        %905 = vmatmul.mubr.f32.gmra.mxu0 %v787
        %v906 = vpop.f32.mrf.mxu0
        %v907 = vadd.f32 %v776, %v906
        %v908 = vpop.f32.mrf.mxu0
        %909 = vmatprep.mubr.f32.mxu0 0.0
        %910 = vmatmul.mubr.f32.gmra.mxu0 %v790
        %v911 = vpop.f32.mrf.mxu0
        %v912 = vadd.f32 %v776, %v911
        %v913 = vpop.f32.mrf.mxu0
        %914 = vmatprep.mubr.f32.mxu0 0.0
        %915 = vmatmul.mubr.f32.gmra.mxu0 %v793
        %v916 = vpop.f32.mrf.mxu0
        %v917 = vadd.f32 %v776, %v916
        %v918 = vpop.f32.mrf.mxu0
        %919 = vmatprep.mubr.f32.mxu0 0.0
        %920 = vmatmul.mubr.f32.gmra.mxu0 %v796
        %v921 = vpop.f32.mrf.mxu0
        %v922 = vadd.f32 %v776, %v921
        %v923 = vpop.f32.mrf.mxu0
        %924 = vmatprep.mubr.f32.mxu0 0.0
        %925 = vmatmul.mubr.f32.gmra.mxu0 %v799
        %v926 = vpop.f32.mrf.mxu0
        %v927 = vadd.f32 %v776, %v926
        %v928 = vpop.f32.mrf.mxu0
        %929 = vmatprep.mubr.f32.mxu0 0.0
        %930 = vmatmul.mubr.f32.gmra.mxu0 %v802
        %v931 = vpop.f32.mrf.mxu0
        %v932 = vadd.f32 %v776, %v931
        %v933 = vpop.f32.mrf.mxu0
        %934 = vmatprep.mubr.f32.mxu0 0.0
        %935 = vmatmul.mubr.f32.gmra.mxu0 %v805
        %v936 = vpop.f32.mrf.mxu0
        %v937 = vadd.f32 %v776, %v936
        %v938 = vpop.f32.mrf.mxu0
        %939 = vmatprep.mubr.f32.mxu0 0.0
        %940 = vmatmul.mubr.f32.gmra.mxu0 %v808
        %v941 = vpop.f32.mrf.mxu0
        %v942 = vadd.f32 %v776, %v941
        %v943 = vpop.f32.mrf.mxu0
        %944 = vmatprep.mubr.f32.mxu0 0.0
        %945 = vmatmul.mubr.f32.gmra.mxu0 %v811
        %v946 = vpop.f32.mrf.mxu0
        %v947 = vadd.f32 %v776, %v946
        %v948 = vpop.f32.mrf.mxu0
        %949 = vmatprep.mubr.f32.mxu0 0.0
        %950 = vmatmul.mubr.f32.gmra.mxu0 %v814
        %v951 = vpop.f32.mrf.mxu0
        %v952 = vadd.f32 %v776, %v951
        %v953 = vpop.f32.mrf.mxu0
        %954 = vmatprep.mubr.f32.mxu0 0.0
        %955 = vmatmul.mubr.f32.gmra.mxu0 %v817
        %v956 = vpop.f32.mrf.mxu0
        %v957 = vadd.f32 %v776, %v956
        %v958 = vpop.f32.mrf.mxu0
        %959 = vmatprep.mubr.f32.mxu0 0.0
        %960 = vmatmul.mubr.f32.gmra.mxu0 %v820
        %v961 = vpop.f32.mrf.mxu0
        %v962 = vadd.f32 %v776, %v961
        %v963 = vpop.f32.mrf.mxu0
        %964 = vmatprep.mubr.f32.mxu0 0.0
        %965 = vmatmul.mubr.f32.gmra.mxu0 %v823
        %v966 = vpop.f32.mrf.mxu0
        %v967 = vadd.f32 %v776, %v966
        %v968 = vpop.f32.mrf.mxu0
        %969 = vdwg.mxu0
        %vm970 = vcmask 523264
        %v971 = vsel %vm970, %v892, 0.0
        %972 = vadd.xlane.f32.xlu0 %v971
        %v973 = vpop.xlane.xlu0 %972
        %v974 = vsel %vm970, %v897, 0.0
        %975 = vadd.xlane.f32.xlu0 %v974
        %v976 = vpop.xlane.xlu0 %975
        %v977 = vsel %vm970, %v902, 0.0
        %978 = vadd.xlane.f32.xlu0 %v977
        %v979 = vpop.xlane.xlu0 %978
        %v980 = vsel %vm970, %v907, 0.0
        %981 = vadd.xlane.f32.xlu0 %v980
        %v982 = vpop.xlane.xlu0 %981
        %v983 = vsel %vm970, %v912, 0.0
        %984 = vadd.xlane.f32.xlu0 %v983
        %v985 = vpop.xlane.xlu0 %984
        %v986 = vsel %vm970, %v917, 0.0
        %987 = vadd.xlane.f32.xlu0 %v986
        %v988 = vpop.xlane.xlu0 %987
        %v989 = vsel %vm970, %v922, 0.0
        %990 = vadd.xlane.f32.xlu0 %v989
        %v991 = vpop.xlane.xlu0 %990
        %v992 = vsel %vm970, %v927, 0.0
        %993 = vadd.xlane.f32.xlu0 %v992
        %v994 = vpop.xlane.xlu0 %993
        %v995 = vsel %vm970, %v932, 0.0
        %996 = vadd.xlane.f32.xlu0 %v995
        %v997 = vpop.xlane.xlu0 %996
        %v998 = vsel %vm970, %v937, 0.0
        %999 = vadd.xlane.f32.xlu0 %v998
        %v1000 = vpop.xlane.xlu0 %999
        %v1001 = vsel %vm970, %v942, 0.0
        %1002 = vadd.xlane.f32.xlu0 %v1001
        %v1003 = vpop.xlane.xlu0 %1002
        %v1004 = vsel %vm970, %v947, 0.0
        %1005 = vadd.xlane.f32.xlu0 %v1004
        %v1006 = vpop.xlane.xlu0 %1005
        %v1007 = vsel %vm970, %v952, 0.0
        %1008 = vadd.xlane.f32.xlu0 %v1007
        %v1009 = vpop.xlane.xlu0 %1008
        %v1010 = vsel %vm970, %v957, 0.0
        %1011 = vadd.xlane.f32.xlu0 %v1010
        %v1012 = vpop.xlane.xlu0 %1011
        %v1013 = vsel %vm970, %v962, 0.0
        %1014 = vadd.xlane.f32.xlu0 %v1013
        %v1015 = vpop.xlane.xlu0 %1014
        %v1016 = vsel %vm970, %v967, 0.0
        %1017 = vadd.xlane.f32.xlu0 %v1016
        %v1018 = vpop.xlane.xlu0 %1017
        %v1019 = vmul.f32 %v973, 0.015625
        %v1020 = vmul.f32 %v976, 0.015625
        %v1021 = vmul.f32 %v979, 0.015625
        %v1022 = vmul.f32 %v982, 0.015625
        %v1023 = vmul.f32 %v985, 0.015625
        %v1024 = vmul.f32 %v988, 0.015625
        %v1025 = vmul.f32 %v991, 0.015625
        %v1026 = vmul.f32 %v994, 0.015625
        %v1027 = vmul.f32 %v997, 0.015625
        %v1028 = vmul.f32 %v1000, 0.015625
        %v1029 = vmul.f32 %v1003, 0.015625
        %v1030 = vmul.f32 %v1006, 0.015625
        %v1031 = vmul.f32 %v1009, 0.015625
        %v1032 = vmul.f32 %v1012, 0.015625
        %v1033 = vmul.f32 %v1015, 0.015625
        %v1034 = vmul.f32 %v1018, 0.015625
        %v1035 = vmul.f32 %v892, %v892
        %v1036 = vmul.f32 %v897, %v897
        %v1037 = vmul.f32 %v902, %v902
        %v1038 = vmul.f32 %v907, %v907
        %v1039 = vmul.f32 %v912, %v912
        %v1040 = vmul.f32 %v917, %v917
        %v1041 = vmul.f32 %v922, %v922
        %v1042 = vmul.f32 %v927, %v927
        %v1043 = vmul.f32 %v932, %v932
        %v1044 = vmul.f32 %v937, %v937
        %v1045 = vmul.f32 %v942, %v942
        %v1046 = vmul.f32 %v947, %v947
        %v1047 = vmul.f32 %v952, %v952
        %v1048 = vmul.f32 %v957, %v957
        %v1049 = vmul.f32 %v962, %v962
        %v1050 = vmul.f32 %v967, %v967
        %v1051 = vsel %vm970, %v1035, 0.0
        %1052 = vadd.xlane.f32.xlu0 %v1051
        %v1053 = vpop.xlane.xlu0 %1052
        %v1054 = vsel %vm970, %v1036, 0.0
        %1055 = vadd.xlane.f32.xlu0 %v1054
        %v1056 = vpop.xlane.xlu0 %1055
        %v1057 = vsel %vm970, %v1037, 0.0
        %1058 = vadd.xlane.f32.xlu0 %v1057
        %v1059 = vpop.xlane.xlu0 %1058
        %v1060 = vsel %vm970, %v1038, 0.0
        %1061 = vadd.xlane.f32.xlu0 %v1060
        %v1062 = vpop.xlane.xlu0 %1061
        %v1063 = vsel %vm970, %v1039, 0.0
        %1064 = vadd.xlane.f32.xlu0 %v1063
        %v1065 = vpop.xlane.xlu0 %1064
        %v1066 = vsel %vm970, %v1040, 0.0
        %1067 = vadd.xlane.f32.xlu0 %v1066
        %v1068 = vpop.xlane.xlu0 %1067
        %v1069 = vsel %vm970, %v1041, 0.0
        %1070 = vadd.xlane.f32.xlu0 %v1069
        %v1071 = vpop.xlane.xlu0 %1070
        %v1072 = vsel %vm970, %v1042, 0.0
        %1073 = vadd.xlane.f32.xlu0 %v1072
        %v1074 = vpop.xlane.xlu0 %1073
        %v1075 = vsel %vm970, %v1043, 0.0
        %1076 = vadd.xlane.f32.xlu0 %v1075
        %v1077 = vpop.xlane.xlu0 %1076
        %v1078 = vsel %vm970, %v1044, 0.0
        %1079 = vadd.xlane.f32.xlu0 %v1078
        %v1080 = vpop.xlane.xlu0 %1079
        %v1081 = vsel %vm970, %v1045, 0.0
        %1082 = vadd.xlane.f32.xlu0 %v1081
        %v1083 = vpop.xlane.xlu0 %1082
        %v1084 = vsel %vm970, %v1046, 0.0
        %1085 = vadd.xlane.f32.xlu0 %v1084
        %v1086 = vpop.xlane.xlu0 %1085
        %v1087 = vsel %vm970, %v1047, 0.0
        %1088 = vadd.xlane.f32.xlu0 %v1087
        %v1089 = vpop.xlane.xlu0 %1088
        %v1090 = vsel %vm970, %v1048, 0.0
        %1091 = vadd.xlane.f32.xlu0 %v1090
        %v1092 = vpop.xlane.xlu0 %1091
        %v1093 = vsel %vm970, %v1049, 0.0
        %1094 = vadd.xlane.f32.xlu0 %v1093
        %v1095 = vpop.xlane.xlu0 %1094
        %v1096 = vsel %vm970, %v1050, 0.0
        %1097 = vadd.xlane.f32.xlu0 %v1096
        %v1098 = vpop.xlane.xlu0 %1097
        %v1099 = vmul.f32 %v1053, 0.015625
        %v1100 = vmul.f32 %v1056, 0.015625
        %v1101 = vmul.f32 %v1059, 0.015625
        %v1102 = vmul.f32 %v1062, 0.015625
        %v1103 = vmul.f32 %v1065, 0.015625
        %v1104 = vmul.f32 %v1068, 0.015625
        %v1105 = vmul.f32 %v1071, 0.015625
        %v1106 = vmul.f32 %v1074, 0.015625
        %v1107 = vmul.f32 %v1077, 0.015625
        %v1108 = vmul.f32 %v1080, 0.015625
        %v1109 = vmul.f32 %v1083, 0.015625
        %v1110 = vmul.f32 %v1086, 0.015625
        %v1111 = vmul.f32 %v1089, 0.015625
        %v1112 = vmul.f32 %v1092, 0.015625
        %v1113 = vmul.f32 %v1095, 0.015625
        %v1114 = vmul.f32 %v1098, 0.015625
        %v1115 = vmul.f32 %v1019, %v1019
        %v1116 = vmul.f32 %v1020, %v1020
        %v1117 = vmul.f32 %v1021, %v1021
        %v1118 = vmul.f32 %v1022, %v1022
        %v1119 = vmul.f32 %v1023, %v1023
        %v1120 = vmul.f32 %v1024, %v1024
        %v1121 = vmul.f32 %v1025, %v1025
        %v1122 = vmul.f32 %v1026, %v1026
        %v1123 = vmul.f32 %v1027, %v1027
        %v1124 = vmul.f32 %v1028, %v1028
        %v1125 = vmul.f32 %v1029, %v1029
        %v1126 = vmul.f32 %v1030, %v1030
        %v1127 = vmul.f32 %v1031, %v1031
        %v1128 = vmul.f32 %v1032, %v1032
        %v1129 = vmul.f32 %v1033, %v1033
        %v1130 = vmul.f32 %v1034, %v1034
        %v1131 = vsub.f32 %v1099, %v1115
        %v1132 = vsub.f32 %v1100, %v1116
        %v1133 = vsub.f32 %v1101, %v1117
        %v1134 = vsub.f32 %v1102, %v1118
        %v1135 = vsub.f32 %v1103, %v1119
        %v1136 = vsub.f32 %v1104, %v1120
        %v1137 = vsub.f32 %v1105, %v1121
        %v1138 = vsub.f32 %v1106, %v1122
        %v1139 = vsub.f32 %v1107, %v1123
        %v1140 = vsub.f32 %v1108, %v1124
        %v1141 = vsub.f32 %v1109, %v1125
        %v1142 = vsub.f32 %v1110, %v1126
        %v1143 = vsub.f32 %v1111, %v1127
        %v1144 = vsub.f32 %v1112, %v1128
        %v1145 = vsub.f32 %v1113, %v1129
        %v1146 = vsub.f32 %v1114, %v1130
        %v1147 = vmax.f32 %v1131, 0.0
        %v1148 = vmax.f32 %v1132, 0.0
        %v1149 = vmax.f32 %v1133, 0.0
        %v1150 = vmax.f32 %v1134, 0.0
        %v1151 = vmax.f32 %v1135, 0.0
        %v1152 = vmax.f32 %v1136, 0.0
        %v1153 = vmax.f32 %v1137, 0.0
        %v1154 = vmax.f32 %v1138, 0.0
        %v1155 = vmax.f32 %v1139, 0.0
        %v1156 = vmax.f32 %v1140, 0.0
        %v1157 = vmax.f32 %v1141, 0.0
        %v1158 = vmax.f32 %v1142, 0.0
        %v1159 = vmax.f32 %v1143, 0.0
        %v1160 = vmax.f32 %v1144, 0.0
        %v1161 = vmax.f32 %v1145, 0.0
        %v1162 = vmax.f32 %v1146, 0.0
        %v1163 = vld [vmem:[%s2 + $0x4] sm:$0x1]
        %v1164 = vld [vmem:[%s2 + $0x5] sm:$0x1]
        %v1165 = vsub.f32 %v892, %v1019
        %v1166 = vsub.f32 %v897, %v1020
        %v1167 = vsub.f32 %v902, %v1021
        %v1168 = vsub.f32 %v907, %v1022
        %v1169 = vsub.f32 %v912, %v1023
        %v1170 = vsub.f32 %v917, %v1024
        %v1171 = vsub.f32 %v922, %v1025
        %v1172 = vsub.f32 %v927, %v1026
        %v1173 = vsub.f32 %v932, %v1027
        %v1174 = vsub.f32 %v937, %v1028
        %v1175 = vsub.f32 %v942, %v1029
        %v1176 = vsub.f32 %v947, %v1030
        %v1177 = vsub.f32 %v952, %v1031
        %v1178 = vsub.f32 %v957, %v1032
        %v1179 = vsub.f32 %v962, %v1033
        %v1180 = vsub.f32 %v967, %v1034
        %v1181 = vadd.f32 %v1147, 1e-05
        %v1182 = vadd.f32 %v1148, 1e-05
        %v1183 = vadd.f32 %v1149, 1e-05
        %v1184 = vadd.f32 %v1150, 1e-05
        %v1185 = vadd.f32 %v1151, 1e-05
        %v1186 = vadd.f32 %v1152, 1e-05
        %v1187 = vadd.f32 %v1153, 1e-05
        %v1188 = vadd.f32 %v1154, 1e-05
        %v1189 = vadd.f32 %v1155, 1e-05
        %v1190 = vadd.f32 %v1156, 1e-05
        %v1191 = vadd.f32 %v1157, 1e-05
        %v1192 = vadd.f32 %v1158, 1e-05
        %v1193 = vadd.f32 %v1159, 1e-05
        %v1194 = vadd.f32 %v1160, 1e-05
        %v1195 = vadd.f32 %v1161, 1e-05
        %v1196 = vadd.f32 %v1162, 1e-05
        %v1197 = vrsqrt.pop %v1181
        %v1198 = vrsqrt.pop %v1182
        %v1199 = vrsqrt.pop %v1183
        %v1200 = vrsqrt.pop %v1184
        %v1201 = vrsqrt.pop %v1185
        %v1202 = vrsqrt.pop %v1186
        %v1203 = vrsqrt.pop %v1187
        %v1204 = vrsqrt.pop %v1188
        %v1205 = vrsqrt.pop %v1189
        %v1206 = vrsqrt.pop %v1190
        %v1207 = vrsqrt.pop %v1191
        %v1208 = vrsqrt.pop %v1192
        %v1209 = vrsqrt.pop %v1193
        %v1210 = vrsqrt.pop %v1194
        %v1211 = vrsqrt.pop %v1195
        %v1212 = vrsqrt.pop %v1196
        %v1213 = vmul.f32 %v1165, %v1197
        %v1214 = vmul.f32 %v1166, %v1198
        %v1215 = vmul.f32 %v1167, %v1199
        %v1216 = vmul.f32 %v1168, %v1200
        %v1217 = vmul.f32 %v1169, %v1201
        %v1218 = vmul.f32 %v1170, %v1202
        %v1219 = vmul.f32 %v1171, %v1203
        %v1220 = vmul.f32 %v1172, %v1204
        %v1221 = vmul.f32 %v1173, %v1205
        %v1222 = vmul.f32 %v1174, %v1206
        %v1223 = vmul.f32 %v1175, %v1207
        %v1224 = vmul.f32 %v1176, %v1208
        %v1225 = vmul.f32 %v1177, %v1209
        %v1226 = vmul.f32 %v1178, %v1210
        %v1227 = vmul.f32 %v1179, %v1211
        %v1228 = vmul.f32 %v1180, %v1212
        %v1229 = vlaneseq
        %v1230 = vshrl.u32 %v1229, 7
        %v1231 = vsub.s32 0, %v1230
        %v1232 = vrot.slane %v1163, %v1231
        %v1233 = vmul.f32 %v1213, %v1232
        %v1234 = vmul.f32 %v1214, %v1232
        %v1235 = vmul.f32 %v1215, %v1232
        %v1236 = vmul.f32 %v1216, %v1232
        %v1237 = vmul.f32 %v1217, %v1232
        %v1238 = vmul.f32 %v1218, %v1232
        %v1239 = vmul.f32 %v1219, %v1232
        %v1240 = vmul.f32 %v1220, %v1232
        %v1241 = vmul.f32 %v1221, %v1232
        %v1242 = vmul.f32 %v1222, %v1232
        %v1243 = vmul.f32 %v1223, %v1232
        %v1244 = vmul.f32 %v1224, %v1232
        %v1245 = vmul.f32 %v1225, %v1232
        %v1246 = vmul.f32 %v1226, %v1232
        %v1247 = vmul.f32 %v1227, %v1232
        %v1248 = vmul.f32 %v1228, %v1232
        %v1249 = vlaneseq
        %v1250 = vshrl.u32 %v1249, 7
        %v1251 = vsub.s32 0, %v1250
        %v1252 = vrot.slane %v1164, %v1251
        %v1253 = vadd.f32 %v1233, %v1252
        %v1254 = vadd.f32 %v1234, %v1252
        %v1255 = vadd.f32 %v1235, %v1252
        %v1256 = vadd.f32 %v1236, %v1252
        %v1257 = vadd.f32 %v1237, %v1252
        %v1258 = vadd.f32 %v1238, %v1252
        %v1259 = vadd.f32 %v1239, %v1252
        %v1260 = vadd.f32 %v1240, %v1252
        %v1261 = vadd.f32 %v1241, %v1252
        %v1262 = vadd.f32 %v1242, %v1252
        %v1263 = vadd.f32 %v1243, %v1252
        %v1264 = vadd.f32 %v1244, %v1252
        %v1265 = vadd.f32 %v1245, %v1252
        %v1266 = vadd.f32 %v1246, %v1252
        %v1267 = vadd.f32 %v1247, %v1252
        %v1268 = vadd.f32 %v1248, %v1252
        %v1269 = vmax.f32 %v1253, 0.0
        %v1270 = vmax.f32 %v1254, 0.0
        %v1271 = vmax.f32 %v1255, 0.0
        %v1272 = vmax.f32 %v1256, 0.0
        %v1273 = vmax.f32 %v1257, 0.0
        %v1274 = vmax.f32 %v1258, 0.0
        %v1275 = vmax.f32 %v1259, 0.0
        %v1276 = vmax.f32 %v1260, 0.0
        %v1277 = vmax.f32 %v1261, 0.0
        %v1278 = vmax.f32 %v1262, 0.0
        %v1279 = vmax.f32 %v1263, 0.0
        %v1280 = vmax.f32 %v1264, 0.0
        %v1281 = vmax.f32 %v1265, 0.0
        %v1282 = vmax.f32 %v1266, 0.0
        %v1283 = vmax.f32 %v1267, 0.0
        %v1284 = vmax.f32 %v1268, 0.0
        %v1285 = vld [vmem:[#allocation2 + $0x60] sm:$0xff]
        %v1286 = vld [vmem:[#allocation2 + $0x68] sm:$0xff]
        %v1287 = vld [vmem:[#allocation2 + $0x70] sm:$0xff]
        %v1288 = vld [vmem:[#allocation2 + $0x78] sm:$0xff]
        %v1289 = vld [vmem:[#allocation2 + $0x80] sm:$0xff]
        %v1290 = vld [vmem:[#allocation2 + $0x88] sm:$0xff]
        %v1291 = vld [vmem:[#allocation2 + $0x90] sm:$0xff]
        %v1292 = vld [vmem:[#allocation2 + $0x98] sm:$0xff]
        %v1293 = vld [vmem:[%s2 + $0x6] sm:$0x1]
        %v1294 = vlaneseq
        %v1295 = vshrl.u32 %v1294, 7
        %v1296 = vsub.s32 0, %v1295
        %v1297 = vrot.slane %v1293, %v1296
        %v1299 = vsel %vm970, %v1269, 0
        %v1302 = vsel %vm970, %v1270, 0
        %v1305 = vsel %vm970, %v1271, 0
        %v1308 = vsel %vm970, %v1272, 0
        %v1311 = vsel %vm970, %v1273, 0
        %v1314 = vsel %vm970, %v1274, 0
        %v1317 = vsel %vm970, %v1275, 0
        %v1320 = vsel %vm970, %v1276, 0
        %v1323 = vsel %vm970, %v1277, 0
        %v1326 = vsel %vm970, %v1278, 0
        %v1329 = vsel %vm970, %v1279, 0
        %v1332 = vsel %vm970, %v1280, 0
        %v1335 = vsel %vm970, %v1281, 0
        %v1338 = vsel %vm970, %v1282, 0
        %v1341 = vsel %vm970, %v1283, 0
        %v1344 = vsel %vm970, %v1284, 0
        %1346 = vmatprep.subr.mxu0 0.0
        %1347 = vmatpush1.msra.mxu0 0.0
        %1348 = vmatprep.subr.mxu0 0.0
        %1349 = vmatpush1.msra.mxu0 0.0
        %1350 = vmatprep.subr.mxu0 0.0
        %1351 = vmatpush1.msra.mxu0 0.0
        %1352 = vmatprep.subr.mxu0 0.0
        %1353 = vmatpush1.msra.mxu0 0.0
        %1354 = vmatprep.subr.mxu0 0.0
        %1355 = vmatpush1.msra.mxu0 0.0
        %1356 = vmatprep.subr.mxu0 0.0
        %1357 = vmatpush1.msra.mxu0 0.0
        %1358 = vmatprep.subr.mxu0 0.0
        %1359 = vmatpush1.msra.mxu0 0.0
        %1360 = vmatprep.subr.mxu0 0.0
        %1361 = vmatpush1.msra.mxu0 0.0
        %1362 = vmatprep.subr.mxu0 0.0
        %1363 = vmatpush1.msra.mxu0 %v1292
        %1364 = vmatprep.subr.mxu0 0.0
        %1365 = vmatpush1.msra.mxu0 %v1291
        %1366 = vmatprep.subr.mxu0 0.0
        %1367 = vmatpush1.msra.mxu0 %v1290
        %1368 = vmatprep.subr.mxu0 0.0
        %1369 = vmatpush1.msra.mxu0 %v1289
        %1370 = vmatprep.subr.mxu0 0.0
        %1371 = vmatpush1.msra.mxu0 %v1288
        %1372 = vmatprep.subr.mxu0 0.0
        %1373 = vmatpush1.msra.mxu0 %v1287
        %1374 = vmatprep.subr.mxu0 0.0
        %1375 = vmatpush1.msra.mxu0 %v1286
        %1376 = vmatprep.subr.mxu0 0.0
        %1377 = vmatpush1.msra.mxu0 %v1285
        %1378 = vmatprep.subr.mxu0 0.0
        %1379 = vmatpush2.msra.mxu0 0.0
        %1380 = vmatprep.subr.mxu0 0.0
        %1381 = vmatpush2.msra.mxu0 0.0
        %1382 = vmatprep.subr.mxu0 0.0
        %1383 = vmatpush2.msra.mxu0 0.0
        %1384 = vmatprep.subr.mxu0 0.0
        %1385 = vmatpush2.msra.mxu0 0.0
        %1386 = vmatprep.subr.mxu0 0.0
        %1387 = vmatpush2.msra.mxu0 0.0
        %1388 = vmatprep.subr.mxu0 0.0
        %1389 = vmatpush2.msra.mxu0 0.0
        %1390 = vmatprep.subr.mxu0 0.0
        %1391 = vmatpush2.msra.mxu0 0.0
        %1392 = vmatprep.subr.mxu0 0.0
        %1393 = vmatpush2.msra.mxu0 0.0
        %1394 = vmatprep.subr.mxu0 0.0
        %1395 = vmatpush2.msra.mxu0 0.0
        %1396 = vmatprep.subr.mxu0 0.0
        %1397 = vmatpush2.msra.mxu0 0.0
        %1398 = vmatprep.subr.mxu0 0.0
        %1399 = vmatpush2.msra.mxu0 0.0
        %1400 = vmatprep.subr.mxu0 0.0
        %1401 = vmatpush2.msra.mxu0 0.0
        %1402 = vmatprep.subr.mxu0 0.0
        %1403 = vmatpush2.msra.mxu0 0.0
        %1404 = vmatprep.subr.mxu0 0.0
        %1405 = vmatpush2.msra.mxu0 0.0
        %1406 = vmatprep.subr.mxu0 0.0
        %1407 = vmatpush2.msra.mxu0 0.0
        %1408 = vmatprep.subr.mxu0 0.0
        %1409 = vmatpush2.msra.mxu0 0.0
        %1410 = vmatprep.mubr.f32.mxu0 0.0
        %1411 = vmatmul.mubr.f32.gmra.mxu0 %v1299
        %v1412 = vpop.f32.mrf.mxu0
        %v1413 = vadd.f32 %v1297, %v1412
        %v1414 = vpop.f32.mrf.mxu0
        %1415 = vmatprep.mubr.f32.mxu0 0.0
        %1416 = vmatmul.mubr.f32.gmra.mxu0 %v1302
        %v1417 = vpop.f32.mrf.mxu0
        %v1418 = vadd.f32 %v1297, %v1417
        %v1419 = vpop.f32.mrf.mxu0
        %1420 = vmatprep.mubr.f32.mxu0 0.0
        %1421 = vmatmul.mubr.f32.gmra.mxu0 %v1305
        %v1422 = vpop.f32.mrf.mxu0
        %v1423 = vadd.f32 %v1297, %v1422
        %v1424 = vpop.f32.mrf.mxu0
        %1425 = vmatprep.mubr.f32.mxu0 0.0
        %1426 = vmatmul.mubr.f32.gmra.mxu0 %v1308
        %v1427 = vpop.f32.mrf.mxu0
        %v1428 = vadd.f32 %v1297, %v1427
        %v1429 = vpop.f32.mrf.mxu0
        %1430 = vmatprep.mubr.f32.mxu0 0.0
        %1431 = vmatmul.mubr.f32.gmra.mxu0 %v1311
        %v1432 = vpop.f32.mrf.mxu0
        %v1433 = vadd.f32 %v1297, %v1432
        %v1434 = vpop.f32.mrf.mxu0
        %1435 = vmatprep.mubr.f32.mxu0 0.0
        %1436 = vmatmul.mubr.f32.gmra.mxu0 %v1314
        %v1437 = vpop.f32.mrf.mxu0
        %v1438 = vadd.f32 %v1297, %v1437
        %v1439 = vpop.f32.mrf.mxu0
        %1440 = vmatprep.mubr.f32.mxu0 0.0
        %1441 = vmatmul.mubr.f32.gmra.mxu0 %v1317
        %v1442 = vpop.f32.mrf.mxu0
        %v1443 = vadd.f32 %v1297, %v1442
        %v1444 = vpop.f32.mrf.mxu0
        %1445 = vmatprep.mubr.f32.mxu0 0.0
        %1446 = vmatmul.mubr.f32.gmra.mxu0 %v1320
        %v1447 = vpop.f32.mrf.mxu0
        %v1448 = vadd.f32 %v1297, %v1447
        %v1449 = vpop.f32.mrf.mxu0
        %1450 = vmatprep.mubr.f32.mxu0 0.0
        %1451 = vmatmul.mubr.f32.gmra.mxu0 %v1323
        %v1452 = vpop.f32.mrf.mxu0
        %v1453 = vadd.f32 %v1297, %v1452
        %v1454 = vpop.f32.mrf.mxu0
        %1455 = vmatprep.mubr.f32.mxu0 0.0
        %1456 = vmatmul.mubr.f32.gmra.mxu0 %v1326
        %v1457 = vpop.f32.mrf.mxu0
        %v1458 = vadd.f32 %v1297, %v1457
        %v1459 = vpop.f32.mrf.mxu0
        %1460 = vmatprep.mubr.f32.mxu0 0.0
        %1461 = vmatmul.mubr.f32.gmra.mxu0 %v1329
        %v1462 = vpop.f32.mrf.mxu0
        %v1463 = vadd.f32 %v1297, %v1462
        %v1464 = vpop.f32.mrf.mxu0
        %1465 = vmatprep.mubr.f32.mxu0 0.0
        %1466 = vmatmul.mubr.f32.gmra.mxu0 %v1332
        %v1467 = vpop.f32.mrf.mxu0
        %v1468 = vadd.f32 %v1297, %v1467
        %v1469 = vpop.f32.mrf.mxu0
        %1470 = vmatprep.mubr.f32.mxu0 0.0
        %1471 = vmatmul.mubr.f32.gmra.mxu0 %v1335
        %v1472 = vpop.f32.mrf.mxu0
        %v1473 = vadd.f32 %v1297, %v1472
        %v1474 = vpop.f32.mrf.mxu0
        %1475 = vmatprep.mubr.f32.mxu0 0.0
        %1476 = vmatmul.mubr.f32.gmra.mxu0 %v1338
        %v1477 = vpop.f32.mrf.mxu0
        %v1478 = vadd.f32 %v1297, %v1477
        %v1479 = vpop.f32.mrf.mxu0
        %1480 = vmatprep.mubr.f32.mxu0 0.0
        %1481 = vmatmul.mubr.f32.gmra.mxu0 %v1341
        %v1482 = vpop.f32.mrf.mxu0
        %v1483 = vadd.f32 %v1297, %v1482
        %v1484 = vpop.f32.mrf.mxu0
        %1485 = vmatprep.mubr.f32.mxu0 0.0
        %1486 = vmatmul.mubr.f32.gmra.mxu0 %v1344
        %v1487 = vpop.f32.mrf.mxu0
        %v1488 = vadd.f32 %v1297, %v1487
        %v1489 = vpop.f32.mrf.mxu0
        %1490 = vdwg.mxu0
        %vm1491 = vcmask 392192
        %v1492 = vsel %vm1491, %v1413, 0.0
        %1493 = vadd.xlane.f32.xlu0 %v1492
        %v1494 = vpop.xlane.xlu0 %1493
        %v1495 = vsel %vm1491, %v1418, 0.0
        %1496 = vadd.xlane.f32.xlu0 %v1495
        %v1497 = vpop.xlane.xlu0 %1496
        %v1498 = vsel %vm1491, %v1423, 0.0
        %1499 = vadd.xlane.f32.xlu0 %v1498
        %v1500 = vpop.xlane.xlu0 %1499
        %v1501 = vsel %vm1491, %v1428, 0.0
        %1502 = vadd.xlane.f32.xlu0 %v1501
        %v1503 = vpop.xlane.xlu0 %1502
        %v1504 = vsel %vm1491, %v1433, 0.0
        %1505 = vadd.xlane.f32.xlu0 %v1504
        %v1506 = vpop.xlane.xlu0 %1505
        %v1507 = vsel %vm1491, %v1438, 0.0
        %1508 = vadd.xlane.f32.xlu0 %v1507
        %v1509 = vpop.xlane.xlu0 %1508
        %v1510 = vsel %vm1491, %v1443, 0.0
        %1511 = vadd.xlane.f32.xlu0 %v1510
        %v1512 = vpop.xlane.xlu0 %1511
        %v1513 = vsel %vm1491, %v1448, 0.0
        %1514 = vadd.xlane.f32.xlu0 %v1513
        %v1515 = vpop.xlane.xlu0 %1514
        %v1516 = vsel %vm1491, %v1453, 0.0
        %1517 = vadd.xlane.f32.xlu0 %v1516
        %v1518 = vpop.xlane.xlu0 %1517
        %v1519 = vsel %vm1491, %v1458, 0.0
        %1520 = vadd.xlane.f32.xlu0 %v1519
        %v1521 = vpop.xlane.xlu0 %1520
        %v1522 = vsel %vm1491, %v1463, 0.0
        %1523 = vadd.xlane.f32.xlu0 %v1522
        %v1524 = vpop.xlane.xlu0 %1523
        %v1525 = vsel %vm1491, %v1468, 0.0
        %1526 = vadd.xlane.f32.xlu0 %v1525
        %v1527 = vpop.xlane.xlu0 %1526
        %v1528 = vsel %vm1491, %v1473, 0.0
        %1529 = vadd.xlane.f32.xlu0 %v1528
        %v1530 = vpop.xlane.xlu0 %1529
        %v1531 = vsel %vm1491, %v1478, 0.0
        %1532 = vadd.xlane.f32.xlu0 %v1531
        %v1533 = vpop.xlane.xlu0 %1532
        %v1534 = vsel %vm1491, %v1483, 0.0
        %1535 = vadd.xlane.f32.xlu0 %v1534
        %v1536 = vpop.xlane.xlu0 %1535
        %v1537 = vsel %vm1491, %v1488, 0.0
        %1538 = vadd.xlane.f32.xlu0 %v1537
        %v1539 = vpop.xlane.xlu0 %1538
        %v1540 = vmul.f32 %v1494, 0.020833334
        %v1541 = vmul.f32 %v1497, 0.020833334
        %v1542 = vmul.f32 %v1500, 0.020833334
        %v1543 = vmul.f32 %v1503, 0.020833334
        %v1544 = vmul.f32 %v1506, 0.020833334
        %v1545 = vmul.f32 %v1509, 0.020833334
        %v1546 = vmul.f32 %v1512, 0.020833334
        %v1547 = vmul.f32 %v1515, 0.020833334
        %v1548 = vmul.f32 %v1518, 0.020833334
        %v1549 = vmul.f32 %v1521, 0.020833334
        %v1550 = vmul.f32 %v1524, 0.020833334
        %v1551 = vmul.f32 %v1527, 0.020833334
        %v1552 = vmul.f32 %v1530, 0.020833334
        %v1553 = vmul.f32 %v1533, 0.020833334
        %v1554 = vmul.f32 %v1536, 0.020833334
        %v1555 = vmul.f32 %v1539, 0.020833334
        %v1556 = vmul.f32 %v1413, %v1413
        %v1557 = vmul.f32 %v1418, %v1418
        %v1558 = vmul.f32 %v1423, %v1423
        %v1559 = vmul.f32 %v1428, %v1428
        %v1560 = vmul.f32 %v1433, %v1433
        %v1561 = vmul.f32 %v1438, %v1438
        %v1562 = vmul.f32 %v1443, %v1443
        %v1563 = vmul.f32 %v1448, %v1448
        %v1564 = vmul.f32 %v1453, %v1453
        %v1565 = vmul.f32 %v1458, %v1458
        %v1566 = vmul.f32 %v1463, %v1463
        %v1567 = vmul.f32 %v1468, %v1468
        %v1568 = vmul.f32 %v1473, %v1473
        %v1569 = vmul.f32 %v1478, %v1478
        %v1570 = vmul.f32 %v1483, %v1483
        %v1571 = vmul.f32 %v1488, %v1488
        %v1572 = vsel %vm1491, %v1556, 0.0
        %1573 = vadd.xlane.f32.xlu0 %v1572
        %v1574 = vpop.xlane.xlu0 %1573
        %v1575 = vsel %vm1491, %v1557, 0.0
        %1576 = vadd.xlane.f32.xlu0 %v1575
        %v1577 = vpop.xlane.xlu0 %1576
        %v1578 = vsel %vm1491, %v1558, 0.0
        %1579 = vadd.xlane.f32.xlu0 %v1578
        %v1580 = vpop.xlane.xlu0 %1579
        %v1581 = vsel %vm1491, %v1559, 0.0
        %1582 = vadd.xlane.f32.xlu0 %v1581
        %v1583 = vpop.xlane.xlu0 %1582
        %v1584 = vsel %vm1491, %v1560, 0.0
        %1585 = vadd.xlane.f32.xlu0 %v1584
        %v1586 = vpop.xlane.xlu0 %1585
        %v1587 = vsel %vm1491, %v1561, 0.0
        %1588 = vadd.xlane.f32.xlu0 %v1587
        %v1589 = vpop.xlane.xlu0 %1588
        %v1590 = vsel %vm1491, %v1562, 0.0
        %1591 = vadd.xlane.f32.xlu0 %v1590
        %v1592 = vpop.xlane.xlu0 %1591
        %v1593 = vsel %vm1491, %v1563, 0.0
        %1594 = vadd.xlane.f32.xlu0 %v1593
        %v1595 = vpop.xlane.xlu0 %1594
        %v1596 = vsel %vm1491, %v1564, 0.0
        %1597 = vadd.xlane.f32.xlu0 %v1596
        %v1598 = vpop.xlane.xlu0 %1597
        %v1599 = vsel %vm1491, %v1565, 0.0
        %1600 = vadd.xlane.f32.xlu0 %v1599
        %v1601 = vpop.xlane.xlu0 %1600
        %v1602 = vsel %vm1491, %v1566, 0.0
        %1603 = vadd.xlane.f32.xlu0 %v1602
        %v1604 = vpop.xlane.xlu0 %1603
        %v1605 = vsel %vm1491, %v1567, 0.0
        %1606 = vadd.xlane.f32.xlu0 %v1605
        %v1607 = vpop.xlane.xlu0 %1606
        %v1608 = vsel %vm1491, %v1568, 0.0
        %1609 = vadd.xlane.f32.xlu0 %v1608
        %v1610 = vpop.xlane.xlu0 %1609
        %v1611 = vsel %vm1491, %v1569, 0.0
        %1612 = vadd.xlane.f32.xlu0 %v1611
        %v1613 = vpop.xlane.xlu0 %1612
        %v1614 = vsel %vm1491, %v1570, 0.0
        %1615 = vadd.xlane.f32.xlu0 %v1614
        %v1616 = vpop.xlane.xlu0 %1615
        %v1617 = vsel %vm1491, %v1571, 0.0
        %1618 = vadd.xlane.f32.xlu0 %v1617
        %v1619 = vpop.xlane.xlu0 %1618
        %v1620 = vmul.f32 %v1574, 0.020833334
        %v1621 = vmul.f32 %v1577, 0.020833334
        %v1622 = vmul.f32 %v1580, 0.020833334
        %v1623 = vmul.f32 %v1583, 0.020833334
        %v1624 = vmul.f32 %v1586, 0.020833334
        %v1625 = vmul.f32 %v1589, 0.020833334
        %v1626 = vmul.f32 %v1592, 0.020833334
        %v1627 = vmul.f32 %v1595, 0.020833334
        %v1628 = vmul.f32 %v1598, 0.020833334
        %v1629 = vmul.f32 %v1601, 0.020833334
        %v1630 = vmul.f32 %v1604, 0.020833334
        %v1631 = vmul.f32 %v1607, 0.020833334
        %v1632 = vmul.f32 %v1610, 0.020833334
        %v1633 = vmul.f32 %v1613, 0.020833334
        %v1634 = vmul.f32 %v1616, 0.020833334
        %v1635 = vmul.f32 %v1619, 0.020833334
        %v1636 = vmul.f32 %v1540, %v1540
        %v1637 = vmul.f32 %v1541, %v1541
        %v1638 = vmul.f32 %v1542, %v1542
        %v1639 = vmul.f32 %v1543, %v1543
        %v1640 = vmul.f32 %v1544, %v1544
        %v1641 = vmul.f32 %v1545, %v1545
        %v1642 = vmul.f32 %v1546, %v1546
        %v1643 = vmul.f32 %v1547, %v1547
        %v1644 = vmul.f32 %v1548, %v1548
        %v1645 = vmul.f32 %v1549, %v1549
        %v1646 = vmul.f32 %v1550, %v1550
        %v1647 = vmul.f32 %v1551, %v1551
        %v1648 = vmul.f32 %v1552, %v1552
        %v1649 = vmul.f32 %v1553, %v1553
        %v1650 = vmul.f32 %v1554, %v1554
        %v1651 = vmul.f32 %v1555, %v1555
        %v1652 = vsub.f32 %v1620, %v1636
        %v1653 = vsub.f32 %v1621, %v1637
        %v1654 = vsub.f32 %v1622, %v1638
        %v1655 = vsub.f32 %v1623, %v1639
        %v1656 = vsub.f32 %v1624, %v1640
        %v1657 = vsub.f32 %v1625, %v1641
        %v1658 = vsub.f32 %v1626, %v1642
        %v1659 = vsub.f32 %v1627, %v1643
        %v1660 = vsub.f32 %v1628, %v1644
        %v1661 = vsub.f32 %v1629, %v1645
        %v1662 = vsub.f32 %v1630, %v1646
        %v1663 = vsub.f32 %v1631, %v1647
        %v1664 = vsub.f32 %v1632, %v1648
        %v1665 = vsub.f32 %v1633, %v1649
        %v1666 = vsub.f32 %v1634, %v1650
        %v1667 = vsub.f32 %v1635, %v1651
        %v1668 = vmax.f32 %v1652, 0.0
        %v1669 = vmax.f32 %v1653, 0.0
        %v1670 = vmax.f32 %v1654, 0.0
        %v1671 = vmax.f32 %v1655, 0.0
        %v1672 = vmax.f32 %v1656, 0.0
        %v1673 = vmax.f32 %v1657, 0.0
        %v1674 = vmax.f32 %v1658, 0.0
        %v1675 = vmax.f32 %v1659, 0.0
        %v1676 = vmax.f32 %v1660, 0.0
        %v1677 = vmax.f32 %v1661, 0.0
        %v1678 = vmax.f32 %v1662, 0.0
        %v1679 = vmax.f32 %v1663, 0.0
        %v1680 = vmax.f32 %v1664, 0.0
        %v1681 = vmax.f32 %v1665, 0.0
        %v1682 = vmax.f32 %v1666, 0.0
        %v1683 = vmax.f32 %v1667, 0.0
        %v1684 = vld [vmem:[%s2 + $0x7] sm:$0x1]
        %v1685 = vld [vmem:[%s2 + $0x8] sm:$0x1]
        %v1686 = vsub.f32 %v1413, %v1540
        %v1687 = vsub.f32 %v1418, %v1541
        %v1688 = vsub.f32 %v1423, %v1542
        %v1689 = vsub.f32 %v1428, %v1543
        %v1690 = vsub.f32 %v1433, %v1544
        %v1691 = vsub.f32 %v1438, %v1545
        %v1692 = vsub.f32 %v1443, %v1546
        %v1693 = vsub.f32 %v1448, %v1547
        %v1694 = vsub.f32 %v1453, %v1548
        %v1695 = vsub.f32 %v1458, %v1549
        %v1696 = vsub.f32 %v1463, %v1550
        %v1697 = vsub.f32 %v1468, %v1551
        %v1698 = vsub.f32 %v1473, %v1552
        %v1699 = vsub.f32 %v1478, %v1553
        %v1700 = vsub.f32 %v1483, %v1554
        %v1701 = vsub.f32 %v1488, %v1555
        %v1702 = vadd.f32 %v1668, 1e-05
        %v1703 = vadd.f32 %v1669, 1e-05
        %v1704 = vadd.f32 %v1670, 1e-05
        %v1705 = vadd.f32 %v1671, 1e-05
        %v1706 = vadd.f32 %v1672, 1e-05
        %v1707 = vadd.f32 %v1673, 1e-05
        %v1708 = vadd.f32 %v1674, 1e-05
        %v1709 = vadd.f32 %v1675, 1e-05
        %v1710 = vadd.f32 %v1676, 1e-05
        %v1711 = vadd.f32 %v1677, 1e-05
        %v1712 = vadd.f32 %v1678, 1e-05
        %v1713 = vadd.f32 %v1679, 1e-05
        %v1714 = vadd.f32 %v1680, 1e-05
        %v1715 = vadd.f32 %v1681, 1e-05
        %v1716 = vadd.f32 %v1682, 1e-05
        %v1717 = vadd.f32 %v1683, 1e-05
        %v1718 = vrsqrt.pop %v1702
        %v1719 = vrsqrt.pop %v1703
        %v1720 = vrsqrt.pop %v1704
        %v1721 = vrsqrt.pop %v1705
        %v1722 = vrsqrt.pop %v1706
        %v1723 = vrsqrt.pop %v1707
        %v1724 = vrsqrt.pop %v1708
        %v1725 = vrsqrt.pop %v1709
        %v1726 = vrsqrt.pop %v1710
        %v1727 = vrsqrt.pop %v1711
        %v1728 = vrsqrt.pop %v1712
        %v1729 = vrsqrt.pop %v1713
        %v1730 = vrsqrt.pop %v1714
        %v1731 = vrsqrt.pop %v1715
        %v1732 = vrsqrt.pop %v1716
        %v1733 = vrsqrt.pop %v1717
        %v1734 = vmul.f32 %v1686, %v1718
        %v1735 = vmul.f32 %v1687, %v1719
        %v1736 = vmul.f32 %v1688, %v1720
        %v1737 = vmul.f32 %v1689, %v1721
        %v1738 = vmul.f32 %v1690, %v1722
        %v1739 = vmul.f32 %v1691, %v1723
        %v1740 = vmul.f32 %v1692, %v1724
        %v1741 = vmul.f32 %v1693, %v1725
        %v1742 = vmul.f32 %v1694, %v1726
        %v1743 = vmul.f32 %v1695, %v1727
        %v1744 = vmul.f32 %v1696, %v1728
        %v1745 = vmul.f32 %v1697, %v1729
        %v1746 = vmul.f32 %v1698, %v1730
        %v1747 = vmul.f32 %v1699, %v1731
        %v1748 = vmul.f32 %v1700, %v1732
        %v1749 = vmul.f32 %v1701, %v1733
        %v1750 = vlaneseq
        %v1751 = vshrl.u32 %v1750, 7
        %v1752 = vsub.s32 0, %v1751
        %v1753 = vrot.slane %v1684, %v1752
        %v1754 = vmul.f32 %v1734, %v1753
        %v1755 = vmul.f32 %v1735, %v1753
        %v1756 = vmul.f32 %v1736, %v1753
        %v1757 = vmul.f32 %v1737, %v1753
        %v1758 = vmul.f32 %v1738, %v1753
        %v1759 = vmul.f32 %v1739, %v1753
        %v1760 = vmul.f32 %v1740, %v1753
        %v1761 = vmul.f32 %v1741, %v1753
        %v1762 = vmul.f32 %v1742, %v1753
        %v1763 = vmul.f32 %v1743, %v1753
        %v1764 = vmul.f32 %v1744, %v1753
        %v1765 = vmul.f32 %v1745, %v1753
        %v1766 = vmul.f32 %v1746, %v1753
        %v1767 = vmul.f32 %v1747, %v1753
        %v1768 = vmul.f32 %v1748, %v1753
        %v1769 = vmul.f32 %v1749, %v1753
        %v1770 = vlaneseq
        %v1771 = vshrl.u32 %v1770, 7
        %v1772 = vsub.s32 0, %v1771
        %v1773 = vrot.slane %v1685, %v1772
        %v1774 = vadd.f32 %v1754, %v1773
        %v1775 = vadd.f32 %v1755, %v1773
        %v1776 = vadd.f32 %v1756, %v1773
        %v1777 = vadd.f32 %v1757, %v1773
        %v1778 = vadd.f32 %v1758, %v1773
        %v1779 = vadd.f32 %v1759, %v1773
        %v1780 = vadd.f32 %v1760, %v1773
        %v1781 = vadd.f32 %v1761, %v1773
        %v1782 = vadd.f32 %v1762, %v1773
        %v1783 = vadd.f32 %v1763, %v1773
        %v1784 = vadd.f32 %v1764, %v1773
        %v1785 = vadd.f32 %v1765, %v1773
        %v1786 = vadd.f32 %v1766, %v1773
        %v1787 = vadd.f32 %v1767, %v1773
        %v1788 = vadd.f32 %v1768, %v1773
        %v1789 = vadd.f32 %v1769, %v1773
        %v1790 = vmax.f32 %v1774, 0.0
        %v1791 = vmax.f32 %v1775, 0.0
        %v1792 = vmax.f32 %v1776, 0.0
        %v1793 = vmax.f32 %v1777, 0.0
        %v1794 = vmax.f32 %v1778, 0.0
        %v1795 = vmax.f32 %v1779, 0.0
        %v1796 = vmax.f32 %v1780, 0.0
        %v1797 = vmax.f32 %v1781, 0.0
        %v1798 = vmax.f32 %v1782, 0.0
        %v1799 = vmax.f32 %v1783, 0.0
        %v1800 = vmax.f32 %v1784, 0.0
        %v1801 = vmax.f32 %v1785, 0.0
        %v1802 = vmax.f32 %v1786, 0.0
        %v1803 = vmax.f32 %v1787, 0.0
        %v1804 = vmax.f32 %v1788, 0.0
        %v1805 = vmax.f32 %v1789, 0.0
        %v1806 = vld [vmem:[#allocation2 + $0xa0] sm:$0xff]
        %v1807 = vld [vmem:[#allocation2 + $0xa8] sm:$0xff]
        %v1808 = vld [vmem:[#allocation2 + $0xb0] sm:$0xff]
        %v1809 = vld [vmem:[#allocation2 + $0xb8] sm:$0xff]
        %v1810 = vld [vmem:[#allocation2 + $0xc0] sm:$0xff]
        %v1811 = vld [vmem:[#allocation2 + $0xc8] sm:$0xff]
        %v1812 = vld [vmem:[%s2 + $0x9] sm:$0x1]
        %v1813 = vlaneseq
        %v1814 = vshrl.u32 %v1813, 7
        %v1815 = vsub.s32 0, %v1814
        %v1816 = vrot.slane %v1812, %v1815
        %v1818 = vsel %vm1491, %v1790, 0
        %v1821 = vsel %vm1491, %v1791, 0
        %v1824 = vsel %vm1491, %v1792, 0
        %v1827 = vsel %vm1491, %v1793, 0
        %v1830 = vsel %vm1491, %v1794, 0
        %v1833 = vsel %vm1491, %v1795, 0
        %v1836 = vsel %vm1491, %v1796, 0
        %v1839 = vsel %vm1491, %v1797, 0
        %v1842 = vsel %vm1491, %v1798, 0
        %v1845 = vsel %vm1491, %v1799, 0
        %v1848 = vsel %vm1491, %v1800, 0
        %v1851 = vsel %vm1491, %v1801, 0
        %v1854 = vsel %vm1491, %v1802, 0
        %v1857 = vsel %vm1491, %v1803, 0
        %v1860 = vsel %vm1491, %v1804, 0
        %v1863 = vsel %vm1491, %v1805, 0
        %1865 = vmatprep.subr.mxu0 0.0
        %1866 = vmatpush1.msra.mxu0 0.0
        %1867 = vmatprep.subr.mxu0 0.0
        %1868 = vmatpush1.msra.mxu0 0.0
        %1869 = vmatprep.subr.mxu0 0.0
        %1870 = vmatpush1.msra.mxu0 0.0
        %1871 = vmatprep.subr.mxu0 0.0
        %1872 = vmatpush1.msra.mxu0 0.0
        %1873 = vmatprep.subr.mxu0 0.0
        %1874 = vmatpush1.msra.mxu0 0.0
        %1875 = vmatprep.subr.mxu0 0.0
        %1876 = vmatpush1.msra.mxu0 0.0
        %1877 = vmatprep.subr.mxu0 0.0
        %1878 = vmatpush1.msra.mxu0 0.0
        %1879 = vmatprep.subr.mxu0 0.0
        %1880 = vmatpush1.msra.mxu0 0.0
        %1881 = vmatprep.subr.mxu0 0.0
        %1882 = vmatpush1.msra.mxu0 0.0
        %1883 = vmatprep.subr.mxu0 0.0
        %1884 = vmatpush1.msra.mxu0 0.0
        %1885 = vmatprep.subr.mxu0 0.0
        %1886 = vmatpush1.msra.mxu0 %v1811
        %1887 = vmatprep.subr.mxu0 0.0
        %1888 = vmatpush1.msra.mxu0 %v1810
        %1889 = vmatprep.subr.mxu0 0.0
        %1890 = vmatpush1.msra.mxu0 %v1809
        %1891 = vmatprep.subr.mxu0 0.0
        %1892 = vmatpush1.msra.mxu0 %v1808
        %1893 = vmatprep.subr.mxu0 0.0
        %1894 = vmatpush1.msra.mxu0 %v1807
        %1895 = vmatprep.subr.mxu0 0.0
        %1896 = vmatpush1.msra.mxu0 %v1806
        %1897 = vmatprep.subr.mxu0 0.0
        %1898 = vmatpush2.msra.mxu0 0.0
        %1899 = vmatprep.subr.mxu0 0.0
        %1900 = vmatpush2.msra.mxu0 0.0
        %1901 = vmatprep.subr.mxu0 0.0
        %1902 = vmatpush2.msra.mxu0 0.0
        %1903 = vmatprep.subr.mxu0 0.0
        %1904 = vmatpush2.msra.mxu0 0.0
        %1905 = vmatprep.subr.mxu0 0.0
        %1906 = vmatpush2.msra.mxu0 0.0
        %1907 = vmatprep.subr.mxu0 0.0
        %1908 = vmatpush2.msra.mxu0 0.0
        %1909 = vmatprep.subr.mxu0 0.0
        %1910 = vmatpush2.msra.mxu0 0.0
        %1911 = vmatprep.subr.mxu0 0.0
        %1912 = vmatpush2.msra.mxu0 0.0
        %1913 = vmatprep.subr.mxu0 0.0
        %1914 = vmatpush2.msra.mxu0 0.0
        %1915 = vmatprep.subr.mxu0 0.0
        %1916 = vmatpush2.msra.mxu0 0.0
        %1917 = vmatprep.subr.mxu0 0.0
        %1918 = vmatpush2.msra.mxu0 0.0
        %1919 = vmatprep.subr.mxu0 0.0
        %1920 = vmatpush2.msra.mxu0 0.0
        %1921 = vmatprep.subr.mxu0 0.0
        %1922 = vmatpush2.msra.mxu0 0.0
        %1923 = vmatprep.subr.mxu0 0.0
        %1924 = vmatpush2.msra.mxu0 0.0
        %1925 = vmatprep.subr.mxu0 0.0
        %1926 = vmatpush2.msra.mxu0 0.0
        %1927 = vmatprep.subr.mxu0 0.0
        %1928 = vmatpush2.msra.mxu0 0.0
        %1929 = vmatprep.mubr.f32.mxu0 0.0
        %1930 = vmatmul.mubr.f32.gmra.mxu0 %v1818
        %v1931 = vpop.f32.mrf.mxu0
        %v1932 = vadd.f32 %v1816, %v1931
        %v1933 = vpop.f32.mrf.mxu0
        %1934 = vmatprep.mubr.f32.mxu0 0.0
        %1935 = vmatmul.mubr.f32.gmra.mxu0 %v1821
        %v1936 = vpop.f32.mrf.mxu0
        %v1937 = vadd.f32 %v1816, %v1936
        %v1938 = vpop.f32.mrf.mxu0
        %1939 = vmatprep.mubr.f32.mxu0 0.0
        %1940 = vmatmul.mubr.f32.gmra.mxu0 %v1824
        %v1941 = vpop.f32.mrf.mxu0
        %v1942 = vadd.f32 %v1816, %v1941
        %v1943 = vpop.f32.mrf.mxu0
        %1944 = vmatprep.mubr.f32.mxu0 0.0
        %1945 = vmatmul.mubr.f32.gmra.mxu0 %v1827
        %v1946 = vpop.f32.mrf.mxu0
        %v1947 = vadd.f32 %v1816, %v1946
        %v1948 = vpop.f32.mrf.mxu0
        %1949 = vmatprep.mubr.f32.mxu0 0.0
        %1950 = vmatmul.mubr.f32.gmra.mxu0 %v1830
        %v1951 = vpop.f32.mrf.mxu0
        %v1952 = vadd.f32 %v1816, %v1951
        %v1953 = vpop.f32.mrf.mxu0
        %1954 = vmatprep.mubr.f32.mxu0 0.0
        %1955 = vmatmul.mubr.f32.gmra.mxu0 %v1833
        %v1956 = vpop.f32.mrf.mxu0
        %v1957 = vadd.f32 %v1816, %v1956
        %v1958 = vpop.f32.mrf.mxu0
        %1959 = vmatprep.mubr.f32.mxu0 0.0
        %1960 = vmatmul.mubr.f32.gmra.mxu0 %v1836
        %v1961 = vpop.f32.mrf.mxu0
        %v1962 = vadd.f32 %v1816, %v1961
        %v1963 = vpop.f32.mrf.mxu0
        %1964 = vmatprep.mubr.f32.mxu0 0.0
        %1965 = vmatmul.mubr.f32.gmra.mxu0 %v1839
        %v1966 = vpop.f32.mrf.mxu0
        %v1967 = vadd.f32 %v1816, %v1966
        %v1968 = vpop.f32.mrf.mxu0
        %1969 = vmatprep.mubr.f32.mxu0 0.0
        %1970 = vmatmul.mubr.f32.gmra.mxu0 %v1842
        %v1971 = vpop.f32.mrf.mxu0
        %v1972 = vadd.f32 %v1816, %v1971
        %v1973 = vpop.f32.mrf.mxu0
        %1974 = vmatprep.mubr.f32.mxu0 0.0
        %1975 = vmatmul.mubr.f32.gmra.mxu0 %v1845
        %v1976 = vpop.f32.mrf.mxu0
        %v1977 = vadd.f32 %v1816, %v1976
        %v1978 = vpop.f32.mrf.mxu0
        %1979 = vmatprep.mubr.f32.mxu0 0.0
        %1980 = vmatmul.mubr.f32.gmra.mxu0 %v1848
        %v1981 = vpop.f32.mrf.mxu0
        %v1982 = vadd.f32 %v1816, %v1981
        %v1983 = vpop.f32.mrf.mxu0
        %1984 = vmatprep.mubr.f32.mxu0 0.0
        %1985 = vmatmul.mubr.f32.gmra.mxu0 %v1851
        %v1986 = vpop.f32.mrf.mxu0
        %v1987 = vadd.f32 %v1816, %v1986
        %v1988 = vpop.f32.mrf.mxu0
        %1989 = vmatprep.mubr.f32.mxu0 0.0
        %1990 = vmatmul.mubr.f32.gmra.mxu0 %v1854
        %v1991 = vpop.f32.mrf.mxu0
        %v1992 = vadd.f32 %v1816, %v1991
        %v1993 = vpop.f32.mrf.mxu0
        %1994 = vmatprep.mubr.f32.mxu0 0.0
        %1995 = vmatmul.mubr.f32.gmra.mxu0 %v1857
        %v1996 = vpop.f32.mrf.mxu0
        %v1997 = vadd.f32 %v1816, %v1996
        %v1998 = vpop.f32.mrf.mxu0
        %1999 = vmatprep.mubr.f32.mxu0 0.0
        %2000 = vmatmul.mubr.f32.gmra.mxu0 %v1860
        %v2001 = vpop.f32.mrf.mxu0
        %v2002 = vadd.f32 %v1816, %v2001
        %v2003 = vpop.f32.mrf.mxu0
        %2004 = vmatprep.mubr.f32.mxu0 0.0
        %2005 = vmatmul.mubr.f32.gmra.mxu0 %v1863
        %v2006 = vpop.f32.mrf.mxu0
        %v2007 = vadd.f32 %v1816, %v2006
        %v2008 = vpop.f32.mrf.mxu0
        %2009 = vdwg.mxu0
        %v2010 = vld [vmem:[#allocation2 + $0xd0] sm:$0x3]
        %v2011 = vld [vmem:[%s2 + $0xa] sm:$0x1]
        %v2012 = vlaneseq
        %v2013 = vshrl.u32 %v2012, 7
        %v2014 = vsub.s32 0, %v2013
        %v2015 = vrot.slane %v2011, %v2014
        %vm2016 = vcmask 15360
        %v2018 = vsel %vm2016, %v1932, 0
        %v2021 = vsel %vm2016, %v1937, 0
        %v2024 = vsel %vm2016, %v1942, 0
        %v2027 = vsel %vm2016, %v1947, 0
        %v2030 = vsel %vm2016, %v1952, 0
        %v2033 = vsel %vm2016, %v1957, 0
        %v2036 = vsel %vm2016, %v1962, 0
        %v2039 = vsel %vm2016, %v1967, 0
        %v2042 = vsel %vm2016, %v1972, 0
        %v2045 = vsel %vm2016, %v1977, 0
        %v2048 = vsel %vm2016, %v1982, 0
        %v2051 = vsel %vm2016, %v1987, 0
        %v2054 = vsel %vm2016, %v1992, 0
        %v2057 = vsel %vm2016, %v1997, 0
        %v2060 = vsel %vm2016, %v2002, 0
        %v2063 = vsel %vm2016, %v2007, 0
        %vm2065 = vcmask 1041408
        %v2067 = vsel %vm2065, %v2010, 0
        %2069 = vmatprep.subr.mxu0 0.0
        %2070 = vmatpush1.msra.mxu0 0.0
        %2071 = vmatprep.subr.mxu0 0.0
        %2072 = vmatpush1.msra.mxu0 0.0
        %2073 = vmatprep.subr.mxu0 0.0
        %2074 = vmatpush1.msra.mxu0 0.0
        %2075 = vmatprep.subr.mxu0 0.0
        %2076 = vmatpush1.msra.mxu0 0.0
        %2077 = vmatprep.subr.mxu0 0.0
        %2078 = vmatpush1.msra.mxu0 0.0
        %2079 = vmatprep.subr.mxu0 0.0
        %2080 = vmatpush1.msra.mxu0 0.0
        %2081 = vmatprep.subr.mxu0 0.0
        %2082 = vmatpush1.msra.mxu0 0.0
        %2083 = vmatprep.subr.mxu0 0.0
        %2084 = vmatpush1.msra.mxu0 0.0
        %2085 = vmatprep.subr.mxu0 0.0
        %2086 = vmatpush1.msra.mxu0 0.0
        %2087 = vmatprep.subr.mxu0 0.0
        %2088 = vmatpush1.msra.mxu0 0.0
        %2089 = vmatprep.subr.mxu0 0.0
        %2090 = vmatpush1.msra.mxu0 0.0
        %2091 = vmatprep.subr.mxu0 0.0
        %2092 = vmatpush1.msra.mxu0 0.0
        %2093 = vmatprep.subr.mxu0 0.0
        %2094 = vmatpush1.msra.mxu0 0.0
        %2095 = vmatprep.subr.mxu0 0.0
        %2096 = vmatpush1.msra.mxu0 0.0
        %2097 = vmatprep.subr.mxu0 0.0
        %2098 = vmatpush1.msra.mxu0 0.0
        %2099 = vmatprep.subr.mxu0 0.0
        %2100 = vmatpush1.msra.mxu0 %v2067
        %2101 = vmatprep.subr.mxu0 0.0
        %2102 = vmatpush2.msra.mxu0 0.0
        %2103 = vmatprep.subr.mxu0 0.0
        %2104 = vmatpush2.msra.mxu0 0.0
        %2105 = vmatprep.subr.mxu0 0.0
        %2106 = vmatpush2.msra.mxu0 0.0
        %2107 = vmatprep.subr.mxu0 0.0
        %2108 = vmatpush2.msra.mxu0 0.0
        %2109 = vmatprep.subr.mxu0 0.0
        %2110 = vmatpush2.msra.mxu0 0.0
        %2111 = vmatprep.subr.mxu0 0.0
        %2112 = vmatpush2.msra.mxu0 0.0
        %2113 = vmatprep.subr.mxu0 0.0
        %2114 = vmatpush2.msra.mxu0 0.0
        %2115 = vmatprep.subr.mxu0 0.0
        %2116 = vmatpush2.msra.mxu0 0.0
        %2117 = vmatprep.subr.mxu0 0.0
        %2118 = vmatpush2.msra.mxu0 0.0
        %2119 = vmatprep.subr.mxu0 0.0
        %2120 = vmatpush2.msra.mxu0 0.0
        %2121 = vmatprep.subr.mxu0 0.0
        %2122 = vmatpush2.msra.mxu0 0.0
        %2123 = vmatprep.subr.mxu0 0.0
        %2124 = vmatpush2.msra.mxu0 0.0
        %2125 = vmatprep.subr.mxu0 0.0
        %2126 = vmatpush2.msra.mxu0 0.0
        %2127 = vmatprep.subr.mxu0 0.0
        %2128 = vmatpush2.msra.mxu0 0.0
        %2129 = vmatprep.subr.mxu0 0.0
        %2130 = vmatpush2.msra.mxu0 0.0
        %2131 = vmatprep.subr.mxu0 0.0
        %2132 = vmatpush2.msra.mxu0 0.0
        %2133 = vmatprep.mubr.f32.mxu0 0.0
        %2134 = vmatmul.mubr.f32.gmra.mxu0 %v2018
        %v2135 = vpop.f32.mrf.mxu0
        %v2136 = vadd.f32 %v2015, %v2135
        %v2137 = vpop.f32.mrf.mxu0
        %2138 = vmatprep.mubr.f32.mxu0 0.0
        %2139 = vmatmul.mubr.f32.gmra.mxu0 %v2021
        %v2140 = vpop.f32.mrf.mxu0
        %v2141 = vadd.f32 %v2015, %v2140
        %v2142 = vpop.f32.mrf.mxu0
        %2143 = vmatprep.mubr.f32.mxu0 0.0
        %2144 = vmatmul.mubr.f32.gmra.mxu0 %v2024
        %v2145 = vpop.f32.mrf.mxu0
        %v2146 = vadd.f32 %v2015, %v2145
        %v2147 = vpop.f32.mrf.mxu0
        %2148 = vmatprep.mubr.f32.mxu0 0.0
        %2149 = vmatmul.mubr.f32.gmra.mxu0 %v2027
        %v2150 = vpop.f32.mrf.mxu0
        %v2151 = vadd.f32 %v2015, %v2150
        %v2152 = vpop.f32.mrf.mxu0
        %2153 = vmatprep.mubr.f32.mxu0 0.0
        %2154 = vmatmul.mubr.f32.gmra.mxu0 %v2030
        %v2155 = vpop.f32.mrf.mxu0
        %v2156 = vadd.f32 %v2015, %v2155
        %v2157 = vpop.f32.mrf.mxu0
        %2158 = vmatprep.mubr.f32.mxu0 0.0
        %2159 = vmatmul.mubr.f32.gmra.mxu0 %v2033
        %v2160 = vpop.f32.mrf.mxu0
        %v2161 = vadd.f32 %v2015, %v2160
        %v2162 = vpop.f32.mrf.mxu0
        %2163 = vmatprep.mubr.f32.mxu0 0.0
        %2164 = vmatmul.mubr.f32.gmra.mxu0 %v2036
        %v2165 = vpop.f32.mrf.mxu0
        %v2166 = vadd.f32 %v2015, %v2165
        %v2167 = vpop.f32.mrf.mxu0
        %2168 = vmatprep.mubr.f32.mxu0 0.0
        %2169 = vmatmul.mubr.f32.gmra.mxu0 %v2039
        %v2170 = vpop.f32.mrf.mxu0
        %v2171 = vadd.f32 %v2015, %v2170
        %v2172 = vpop.f32.mrf.mxu0
        %2173 = vmatprep.mubr.f32.mxu0 0.0
        %2174 = vmatmul.mubr.f32.gmra.mxu0 %v2042
        %v2175 = vpop.f32.mrf.mxu0
        %v2176 = vadd.f32 %v2015, %v2175
        %v2177 = vpop.f32.mrf.mxu0
        %2178 = vmatprep.mubr.f32.mxu0 0.0
        %2179 = vmatmul.mubr.f32.gmra.mxu0 %v2045
        %v2180 = vpop.f32.mrf.mxu0
        %v2181 = vadd.f32 %v2015, %v2180
        %v2182 = vpop.f32.mrf.mxu0
        %2183 = vmatprep.mubr.f32.mxu0 0.0
        %2184 = vmatmul.mubr.f32.gmra.mxu0 %v2048
        %v2185 = vpop.f32.mrf.mxu0
        %v2186 = vadd.f32 %v2015, %v2185
        %v2187 = vpop.f32.mrf.mxu0
        %2188 = vmatprep.mubr.f32.mxu0 0.0
        %2189 = vmatmul.mubr.f32.gmra.mxu0 %v2051
        %v2190 = vpop.f32.mrf.mxu0
        %v2191 = vadd.f32 %v2015, %v2190
        %v2192 = vpop.f32.mrf.mxu0
        %2193 = vmatprep.mubr.f32.mxu0 0.0
        %2194 = vmatmul.mubr.f32.gmra.mxu0 %v2054
        %v2195 = vpop.f32.mrf.mxu0
        %v2196 = vadd.f32 %v2015, %v2195
        %v2197 = vpop.f32.mrf.mxu0
        %2198 = vmatprep.mubr.f32.mxu0 0.0
        %2199 = vmatmul.mubr.f32.gmra.mxu0 %v2057
        %v2200 = vpop.f32.mrf.mxu0
        %v2201 = vadd.f32 %v2015, %v2200
        %v2202 = vpop.f32.mrf.mxu0
        %2203 = vmatprep.mubr.f32.mxu0 0.0
        %2204 = vmatmul.mubr.f32.gmra.mxu0 %v2060
        %v2205 = vpop.f32.mrf.mxu0
        %v2206 = vadd.f32 %v2015, %v2205
        %v2207 = vpop.f32.mrf.mxu0
        %2208 = vmatprep.mubr.f32.mxu0 0.0
        %2209 = vmatmul.mubr.f32.gmra.mxu0 %v2063
        %v2210 = vpop.f32.mrf.mxu0
        %v2211 = vadd.f32 %v2015, %v2210
        %v2212 = vpop.f32.mrf.mxu0
        %2213 = vdwg.mxu0
        %v2214 = vsel %vm1491, %v2136, 0.0
        %2215 = vadd.xlane.f32.xlu0 %v2214
        %v2216 = vpop.xlane.xlu0 %2215
        %v2217 = vsel %vm1491, %v2141, 0.0
        %2218 = vadd.xlane.f32.xlu0 %v2217
        %v2219 = vpop.xlane.xlu0 %2218
        %v2220 = vsel %vm1491, %v2146, 0.0
        %2221 = vadd.xlane.f32.xlu0 %v2220
        %v2222 = vpop.xlane.xlu0 %2221
        %v2223 = vsel %vm1491, %v2151, 0.0
        %2224 = vadd.xlane.f32.xlu0 %v2223
        %v2225 = vpop.xlane.xlu0 %2224
        %v2226 = vsel %vm1491, %v2156, 0.0
        %2227 = vadd.xlane.f32.xlu0 %v2226
        %v2228 = vpop.xlane.xlu0 %2227
        %v2229 = vsel %vm1491, %v2161, 0.0
        %2230 = vadd.xlane.f32.xlu0 %v2229
        %v2231 = vpop.xlane.xlu0 %2230
        %v2232 = vsel %vm1491, %v2166, 0.0
        %2233 = vadd.xlane.f32.xlu0 %v2232
        %v2234 = vpop.xlane.xlu0 %2233
        %v2235 = vsel %vm1491, %v2171, 0.0
        %2236 = vadd.xlane.f32.xlu0 %v2235
        %v2237 = vpop.xlane.xlu0 %2236
        %v2238 = vsel %vm1491, %v2176, 0.0
        %2239 = vadd.xlane.f32.xlu0 %v2238
        %v2240 = vpop.xlane.xlu0 %2239
        %v2241 = vsel %vm1491, %v2181, 0.0
        %2242 = vadd.xlane.f32.xlu0 %v2241
        %v2243 = vpop.xlane.xlu0 %2242
        %v2244 = vsel %vm1491, %v2186, 0.0
        %2245 = vadd.xlane.f32.xlu0 %v2244
        %v2246 = vpop.xlane.xlu0 %2245
        %v2247 = vsel %vm1491, %v2191, 0.0
        %2248 = vadd.xlane.f32.xlu0 %v2247
        %v2249 = vpop.xlane.xlu0 %2248
        %v2250 = vsel %vm1491, %v2196, 0.0
        %2251 = vadd.xlane.f32.xlu0 %v2250
        %v2252 = vpop.xlane.xlu0 %2251
        %v2253 = vsel %vm1491, %v2201, 0.0
        %2254 = vadd.xlane.f32.xlu0 %v2253
        %v2255 = vpop.xlane.xlu0 %2254
        %v2256 = vsel %vm1491, %v2206, 0.0
        %2257 = vadd.xlane.f32.xlu0 %v2256
        %v2258 = vpop.xlane.xlu0 %2257
        %v2259 = vsel %vm1491, %v2211, 0.0
        %2260 = vadd.xlane.f32.xlu0 %v2259
        %v2261 = vpop.xlane.xlu0 %2260
        %v2262 = vmul.f32 %v2216, 0.020833334
        %v2263 = vmul.f32 %v2219, 0.020833334
        %v2264 = vmul.f32 %v2222, 0.020833334
        %v2265 = vmul.f32 %v2225, 0.020833334
        %v2266 = vmul.f32 %v2228, 0.020833334
        %v2267 = vmul.f32 %v2231, 0.020833334
        %v2268 = vmul.f32 %v2234, 0.020833334
        %v2269 = vmul.f32 %v2237, 0.020833334
        %v2270 = vmul.f32 %v2240, 0.020833334
        %v2271 = vmul.f32 %v2243, 0.020833334
        %v2272 = vmul.f32 %v2246, 0.020833334
        %v2273 = vmul.f32 %v2249, 0.020833334
        %v2274 = vmul.f32 %v2252, 0.020833334
        %v2275 = vmul.f32 %v2255, 0.020833334
        %v2276 = vmul.f32 %v2258, 0.020833334
        %v2277 = vmul.f32 %v2261, 0.020833334
        %v2278 = vmul.f32 %v2136, %v2136
        %v2279 = vmul.f32 %v2141, %v2141
        %v2280 = vmul.f32 %v2146, %v2146
        %v2281 = vmul.f32 %v2151, %v2151
        %v2282 = vmul.f32 %v2156, %v2156
        %v2283 = vmul.f32 %v2161, %v2161
        %v2284 = vmul.f32 %v2166, %v2166
        %v2285 = vmul.f32 %v2171, %v2171
        %v2286 = vmul.f32 %v2176, %v2176
        %v2287 = vmul.f32 %v2181, %v2181
        %v2288 = vmul.f32 %v2186, %v2186
        %v2289 = vmul.f32 %v2191, %v2191
        %v2290 = vmul.f32 %v2196, %v2196
        %v2291 = vmul.f32 %v2201, %v2201
        %v2292 = vmul.f32 %v2206, %v2206
        %v2293 = vmul.f32 %v2211, %v2211
        %v2294 = vsel %vm1491, %v2278, 0.0
        %2295 = vadd.xlane.f32.xlu0 %v2294
        %v2296 = vpop.xlane.xlu0 %2295
        %v2297 = vsel %vm1491, %v2279, 0.0
        %2298 = vadd.xlane.f32.xlu0 %v2297
        %v2299 = vpop.xlane.xlu0 %2298
        %v2300 = vsel %vm1491, %v2280, 0.0
        %2301 = vadd.xlane.f32.xlu0 %v2300
        %v2302 = vpop.xlane.xlu0 %2301
        %v2303 = vsel %vm1491, %v2281, 0.0
        %2304 = vadd.xlane.f32.xlu0 %v2303
        %v2305 = vpop.xlane.xlu0 %2304
        %v2306 = vsel %vm1491, %v2282, 0.0
        %2307 = vadd.xlane.f32.xlu0 %v2306
        %v2308 = vpop.xlane.xlu0 %2307
        %v2309 = vsel %vm1491, %v2283, 0.0
        %2310 = vadd.xlane.f32.xlu0 %v2309
        %v2311 = vpop.xlane.xlu0 %2310
        %v2312 = vsel %vm1491, %v2284, 0.0
        %2313 = vadd.xlane.f32.xlu0 %v2312
        %v2314 = vpop.xlane.xlu0 %2313
        %v2315 = vsel %vm1491, %v2285, 0.0
        %2316 = vadd.xlane.f32.xlu0 %v2315
        %v2317 = vpop.xlane.xlu0 %2316
        %v2318 = vsel %vm1491, %v2286, 0.0
        %2319 = vadd.xlane.f32.xlu0 %v2318
        %v2320 = vpop.xlane.xlu0 %2319
        %v2321 = vsel %vm1491, %v2287, 0.0
        %2322 = vadd.xlane.f32.xlu0 %v2321
        %v2323 = vpop.xlane.xlu0 %2322
        %v2324 = vsel %vm1491, %v2288, 0.0
        %2325 = vadd.xlane.f32.xlu0 %v2324
        %v2326 = vpop.xlane.xlu0 %2325
        %v2327 = vsel %vm1491, %v2289, 0.0
        %2328 = vadd.xlane.f32.xlu0 %v2327
        %v2329 = vpop.xlane.xlu0 %2328
        %v2330 = vsel %vm1491, %v2290, 0.0
        %2331 = vadd.xlane.f32.xlu0 %v2330
        %v2332 = vpop.xlane.xlu0 %2331
        %v2333 = vsel %vm1491, %v2291, 0.0
        %2334 = vadd.xlane.f32.xlu0 %v2333
        %v2335 = vpop.xlane.xlu0 %2334
        %v2336 = vsel %vm1491, %v2292, 0.0
        %2337 = vadd.xlane.f32.xlu0 %v2336
        %v2338 = vpop.xlane.xlu0 %2337
        %v2339 = vsel %vm1491, %v2293, 0.0
        %2340 = vadd.xlane.f32.xlu0 %v2339
        %v2341 = vpop.xlane.xlu0 %2340
        %v2342 = vmul.f32 %v2296, 0.020833334
        %v2343 = vmul.f32 %v2299, 0.020833334
        %v2344 = vmul.f32 %v2302, 0.020833334
        %v2345 = vmul.f32 %v2305, 0.020833334
        %v2346 = vmul.f32 %v2308, 0.020833334
        %v2347 = vmul.f32 %v2311, 0.020833334
        %v2348 = vmul.f32 %v2314, 0.020833334
        %v2349 = vmul.f32 %v2317, 0.020833334
        %v2350 = vmul.f32 %v2320, 0.020833334
        %v2351 = vmul.f32 %v2323, 0.020833334
        %v2352 = vmul.f32 %v2326, 0.020833334
        %v2353 = vmul.f32 %v2329, 0.020833334
        %v2354 = vmul.f32 %v2332, 0.020833334
        %v2355 = vmul.f32 %v2335, 0.020833334
        %v2356 = vmul.f32 %v2338, 0.020833334
        %v2357 = vmul.f32 %v2341, 0.020833334
        %v2358 = vmul.f32 %v2262, %v2262
        %v2359 = vmul.f32 %v2263, %v2263
        %v2360 = vmul.f32 %v2264, %v2264
        %v2361 = vmul.f32 %v2265, %v2265
        %v2362 = vmul.f32 %v2266, %v2266
        %v2363 = vmul.f32 %v2267, %v2267
        %v2364 = vmul.f32 %v2268, %v2268
        %v2365 = vmul.f32 %v2269, %v2269
        %v2366 = vmul.f32 %v2270, %v2270
        %v2367 = vmul.f32 %v2271, %v2271
        %v2368 = vmul.f32 %v2272, %v2272
        %v2369 = vmul.f32 %v2273, %v2273
        %v2370 = vmul.f32 %v2274, %v2274
        %v2371 = vmul.f32 %v2275, %v2275
        %v2372 = vmul.f32 %v2276, %v2276
        %v2373 = vmul.f32 %v2277, %v2277
        %v2374 = vsub.f32 %v2342, %v2358
        %v2375 = vsub.f32 %v2343, %v2359
        %v2376 = vsub.f32 %v2344, %v2360
        %v2377 = vsub.f32 %v2345, %v2361
        %v2378 = vsub.f32 %v2346, %v2362
        %v2379 = vsub.f32 %v2347, %v2363
        %v2380 = vsub.f32 %v2348, %v2364
        %v2381 = vsub.f32 %v2349, %v2365
        %v2382 = vsub.f32 %v2350, %v2366
        %v2383 = vsub.f32 %v2351, %v2367
        %v2384 = vsub.f32 %v2352, %v2368
        %v2385 = vsub.f32 %v2353, %v2369
        %v2386 = vsub.f32 %v2354, %v2370
        %v2387 = vsub.f32 %v2355, %v2371
        %v2388 = vsub.f32 %v2356, %v2372
        %v2389 = vsub.f32 %v2357, %v2373
        %v2390 = vmax.f32 %v2374, 0.0
        %v2391 = vmax.f32 %v2375, 0.0
        %v2392 = vmax.f32 %v2376, 0.0
        %v2393 = vmax.f32 %v2377, 0.0
        %v2394 = vmax.f32 %v2378, 0.0
        %v2395 = vmax.f32 %v2379, 0.0
        %v2396 = vmax.f32 %v2380, 0.0
        %v2397 = vmax.f32 %v2381, 0.0
        %v2398 = vmax.f32 %v2382, 0.0
        %v2399 = vmax.f32 %v2383, 0.0
        %v2400 = vmax.f32 %v2384, 0.0
        %v2401 = vmax.f32 %v2385, 0.0
        %v2402 = vmax.f32 %v2386, 0.0
        %v2403 = vmax.f32 %v2387, 0.0
        %v2404 = vmax.f32 %v2388, 0.0
        %v2405 = vmax.f32 %v2389, 0.0
        %v2406 = vld [vmem:[%s2 + $0xb] sm:$0x1]
        %v2407 = vld [vmem:[%s2 + $0xc] sm:$0x1]
        %v2408 = vsub.f32 %v2136, %v2262
        %v2409 = vsub.f32 %v2141, %v2263
        %v2410 = vsub.f32 %v2146, %v2264
        %v2411 = vsub.f32 %v2151, %v2265
        %v2412 = vsub.f32 %v2156, %v2266
        %v2413 = vsub.f32 %v2161, %v2267
        %v2414 = vsub.f32 %v2166, %v2268
        %v2415 = vsub.f32 %v2171, %v2269
        %v2416 = vsub.f32 %v2176, %v2270
        %v2417 = vsub.f32 %v2181, %v2271
        %v2418 = vsub.f32 %v2186, %v2272
        %v2419 = vsub.f32 %v2191, %v2273
        %v2420 = vsub.f32 %v2196, %v2274
        %v2421 = vsub.f32 %v2201, %v2275
        %v2422 = vsub.f32 %v2206, %v2276
        %v2423 = vsub.f32 %v2211, %v2277
        %v2424 = vadd.f32 %v2390, 1e-05
        %v2425 = vadd.f32 %v2391, 1e-05
        %v2426 = vadd.f32 %v2392, 1e-05
        %v2427 = vadd.f32 %v2393, 1e-05
        %v2428 = vadd.f32 %v2394, 1e-05
        %v2429 = vadd.f32 %v2395, 1e-05
        %v2430 = vadd.f32 %v2396, 1e-05
        %v2431 = vadd.f32 %v2397, 1e-05
        %v2432 = vadd.f32 %v2398, 1e-05
        %v2433 = vadd.f32 %v2399, 1e-05
        %v2434 = vadd.f32 %v2400, 1e-05
        %v2435 = vadd.f32 %v2401, 1e-05
        %v2436 = vadd.f32 %v2402, 1e-05
        %v2437 = vadd.f32 %v2403, 1e-05
        %v2438 = vadd.f32 %v2404, 1e-05
        %v2439 = vadd.f32 %v2405, 1e-05
        %v2440 = vrsqrt.pop %v2424
        %v2441 = vrsqrt.pop %v2425
        %v2442 = vrsqrt.pop %v2426
        %v2443 = vrsqrt.pop %v2427
        %v2444 = vrsqrt.pop %v2428
        %v2445 = vrsqrt.pop %v2429
        %v2446 = vrsqrt.pop %v2430
        %v2447 = vrsqrt.pop %v2431
        %v2448 = vrsqrt.pop %v2432
        %v2449 = vrsqrt.pop %v2433
        %v2450 = vrsqrt.pop %v2434
        %v2451 = vrsqrt.pop %v2435
        %v2452 = vrsqrt.pop %v2436
        %v2453 = vrsqrt.pop %v2437
        %v2454 = vrsqrt.pop %v2438
        %v2455 = vrsqrt.pop %v2439
        %v2456 = vmul.f32 %v2408, %v2440
        %v2457 = vmul.f32 %v2409, %v2441
        %v2458 = vmul.f32 %v2410, %v2442
        %v2459 = vmul.f32 %v2411, %v2443
        %v2460 = vmul.f32 %v2412, %v2444
        %v2461 = vmul.f32 %v2413, %v2445
        %v2462 = vmul.f32 %v2414, %v2446
        %v2463 = vmul.f32 %v2415, %v2447
        %v2464 = vmul.f32 %v2416, %v2448
        %v2465 = vmul.f32 %v2417, %v2449
        %v2466 = vmul.f32 %v2418, %v2450
        %v2467 = vmul.f32 %v2419, %v2451
        %v2468 = vmul.f32 %v2420, %v2452
        %v2469 = vmul.f32 %v2421, %v2453
        %v2470 = vmul.f32 %v2422, %v2454
        %v2471 = vmul.f32 %v2423, %v2455
        %v2472 = vlaneseq
        %v2473 = vshrl.u32 %v2472, 7
        %v2474 = vsub.s32 0, %v2473
        %v2475 = vrot.slane %v2406, %v2474
        %v2476 = vmul.f32 %v2456, %v2475
        %v2477 = vmul.f32 %v2457, %v2475
        %v2478 = vmul.f32 %v2458, %v2475
        %v2479 = vmul.f32 %v2459, %v2475
        %v2480 = vmul.f32 %v2460, %v2475
        %v2481 = vmul.f32 %v2461, %v2475
        %v2482 = vmul.f32 %v2462, %v2475
        %v2483 = vmul.f32 %v2463, %v2475
        %v2484 = vmul.f32 %v2464, %v2475
        %v2485 = vmul.f32 %v2465, %v2475
        %v2486 = vmul.f32 %v2466, %v2475
        %v2487 = vmul.f32 %v2467, %v2475
        %v2488 = vmul.f32 %v2468, %v2475
        %v2489 = vmul.f32 %v2469, %v2475
        %v2490 = vmul.f32 %v2470, %v2475
        %v2491 = vmul.f32 %v2471, %v2475
        %v2492 = vlaneseq
        %v2493 = vshrl.u32 %v2492, 7
        %v2494 = vsub.s32 0, %v2493
        %v2495 = vrot.slane %v2407, %v2494
        %v2496 = vadd.f32 %v2476, %v2495
        %v2497 = vadd.f32 %v2477, %v2495
        %v2498 = vadd.f32 %v2478, %v2495
        %v2499 = vadd.f32 %v2479, %v2495
        %v2500 = vadd.f32 %v2480, %v2495
        %v2501 = vadd.f32 %v2481, %v2495
        %v2502 = vadd.f32 %v2482, %v2495
        %v2503 = vadd.f32 %v2483, %v2495
        %v2504 = vadd.f32 %v2484, %v2495
        %v2505 = vadd.f32 %v2485, %v2495
        %v2506 = vadd.f32 %v2486, %v2495
        %v2507 = vadd.f32 %v2487, %v2495
        %v2508 = vadd.f32 %v2488, %v2495
        %v2509 = vadd.f32 %v2489, %v2495
        %v2510 = vadd.f32 %v2490, %v2495
        %v2511 = vadd.f32 %v2491, %v2495
        %v2512 = vmax.f32 %v2496, 0.0
        %v2513 = vmax.f32 %v2497, 0.0
        %v2514 = vmax.f32 %v2498, 0.0
        %v2515 = vmax.f32 %v2499, 0.0
        %v2516 = vmax.f32 %v2500, 0.0
        %v2517 = vmax.f32 %v2501, 0.0
        %v2518 = vmax.f32 %v2502, 0.0
        %v2519 = vmax.f32 %v2503, 0.0
        %v2520 = vmax.f32 %v2504, 0.0
        %v2521 = vmax.f32 %v2505, 0.0
        %v2522 = vmax.f32 %v2506, 0.0
        %v2523 = vmax.f32 %v2507, 0.0
        %v2524 = vmax.f32 %v2508, 0.0
        %v2525 = vmax.f32 %v2509, 0.0
        %v2526 = vmax.f32 %v2510, 0.0
        %v2527 = vmax.f32 %v2511, 0.0
        %v2528 = vld [vmem:[#allocation2 + $0xd8] sm:$0xff]
        %v2529 = vld [vmem:[#allocation2 + $0xe0] sm:$0xff]
        %v2530 = vld [vmem:[#allocation2 + $0xe8] sm:$0xff]
        %v2531 = vld [vmem:[#allocation2 + $0xf0] sm:$0xff]
        %v2532 = vld [vmem:[#allocation2 + $0xf8] sm:$0xff]
        %v2533 = vld [vmem:[#allocation2 + $0x100] sm:$0xff]
        %v2534 = vld [vmem:[%s2 + $0xd] sm:$0x1]
        %v2535 = vlaneseq
        %v2536 = vshrl.u32 %v2535, 7
        %v2537 = vsub.s32 0, %v2536
        %v2538 = vrot.slane %v2534, %v2537
        %v2540 = vsel %vm1491, %v2512, 0
        %v2543 = vsel %vm1491, %v2513, 0
        %v2546 = vsel %vm1491, %v2514, 0
        %v2549 = vsel %vm1491, %v2515, 0
        %v2552 = vsel %vm1491, %v2516, 0
        %v2555 = vsel %vm1491, %v2517, 0
        %v2558 = vsel %vm1491, %v2518, 0
        %v2561 = vsel %vm1491, %v2519, 0
        %v2564 = vsel %vm1491, %v2520, 0
        %v2567 = vsel %vm1491, %v2521, 0
        %v2570 = vsel %vm1491, %v2522, 0
        %v2573 = vsel %vm1491, %v2523, 0
        %v2576 = vsel %vm1491, %v2524, 0
        %v2579 = vsel %vm1491, %v2525, 0
        %v2582 = vsel %vm1491, %v2526, 0
        %v2585 = vsel %vm1491, %v2527, 0
        %2587 = vmatprep.subr.mxu0 0.0
        %2588 = vmatpush1.msra.mxu0 0.0
        %2589 = vmatprep.subr.mxu0 0.0
        %2590 = vmatpush1.msra.mxu0 0.0
        %2591 = vmatprep.subr.mxu0 0.0
        %2592 = vmatpush1.msra.mxu0 0.0
        %2593 = vmatprep.subr.mxu0 0.0
        %2594 = vmatpush1.msra.mxu0 0.0
        %2595 = vmatprep.subr.mxu0 0.0
        %2596 = vmatpush1.msra.mxu0 0.0
        %2597 = vmatprep.subr.mxu0 0.0
        %2598 = vmatpush1.msra.mxu0 0.0
        %2599 = vmatprep.subr.mxu0 0.0
        %2600 = vmatpush1.msra.mxu0 0.0
        %2601 = vmatprep.subr.mxu0 0.0
        %2602 = vmatpush1.msra.mxu0 0.0
        %2603 = vmatprep.subr.mxu0 0.0
        %2604 = vmatpush1.msra.mxu0 0.0
        %2605 = vmatprep.subr.mxu0 0.0
        %2606 = vmatpush1.msra.mxu0 0.0
        %2607 = vmatprep.subr.mxu0 0.0
        %2608 = vmatpush1.msra.mxu0 %v2533
        %2609 = vmatprep.subr.mxu0 0.0
        %2610 = vmatpush1.msra.mxu0 %v2532
        %2611 = vmatprep.subr.mxu0 0.0
        %2612 = vmatpush1.msra.mxu0 %v2531
        %2613 = vmatprep.subr.mxu0 0.0
        %2614 = vmatpush1.msra.mxu0 %v2530
        %2615 = vmatprep.subr.mxu0 0.0
        %2616 = vmatpush1.msra.mxu0 %v2529
        %2617 = vmatprep.subr.mxu0 0.0
        %2618 = vmatpush1.msra.mxu0 %v2528
        %2619 = vmatprep.subr.mxu0 0.0
        %2620 = vmatpush2.msra.mxu0 0.0
        %2621 = vmatprep.subr.mxu0 0.0
        %2622 = vmatpush2.msra.mxu0 0.0
        %2623 = vmatprep.subr.mxu0 0.0
        %2624 = vmatpush2.msra.mxu0 0.0
        %2625 = vmatprep.subr.mxu0 0.0
        %2626 = vmatpush2.msra.mxu0 0.0
        %2627 = vmatprep.subr.mxu0 0.0
        %2628 = vmatpush2.msra.mxu0 0.0
        %2629 = vmatprep.subr.mxu0 0.0
        %2630 = vmatpush2.msra.mxu0 0.0
        %2631 = vmatprep.subr.mxu0 0.0
        %2632 = vmatpush2.msra.mxu0 0.0
        %2633 = vmatprep.subr.mxu0 0.0
        %2634 = vmatpush2.msra.mxu0 0.0
        %2635 = vmatprep.subr.mxu0 0.0
        %2636 = vmatpush2.msra.mxu0 0.0
        %2637 = vmatprep.subr.mxu0 0.0
        %2638 = vmatpush2.msra.mxu0 0.0
        %2639 = vmatprep.subr.mxu0 0.0
        %2640 = vmatpush2.msra.mxu0 0.0
        %2641 = vmatprep.subr.mxu0 0.0
        %2642 = vmatpush2.msra.mxu0 0.0
        %2643 = vmatprep.subr.mxu0 0.0
        %2644 = vmatpush2.msra.mxu0 0.0
        %2645 = vmatprep.subr.mxu0 0.0
        %2646 = vmatpush2.msra.mxu0 0.0
        %2647 = vmatprep.subr.mxu0 0.0
        %2648 = vmatpush2.msra.mxu0 0.0
        %2649 = vmatprep.subr.mxu0 0.0
        %2650 = vmatpush2.msra.mxu0 0.0
        %2651 = vmatprep.mubr.f32.mxu0 0.0
        %2652 = vmatmul.mubr.f32.gmra.mxu0 %v2540
        %v2653 = vpop.f32.mrf.mxu0
        %v2654 = vadd.f32 %v2538, %v2653
        %v2655 = vpop.f32.mrf.mxu0
        %2656 = vmatprep.mubr.f32.mxu0 0.0
        %2657 = vmatmul.mubr.f32.gmra.mxu0 %v2543
        %v2658 = vpop.f32.mrf.mxu0
        %v2659 = vadd.f32 %v2538, %v2658
        %v2660 = vpop.f32.mrf.mxu0
        %2661 = vmatprep.mubr.f32.mxu0 0.0
        %2662 = vmatmul.mubr.f32.gmra.mxu0 %v2546
        %v2663 = vpop.f32.mrf.mxu0
        %v2664 = vadd.f32 %v2538, %v2663
        %v2665 = vpop.f32.mrf.mxu0
        %2666 = vmatprep.mubr.f32.mxu0 0.0
        %2667 = vmatmul.mubr.f32.gmra.mxu0 %v2549
        %v2668 = vpop.f32.mrf.mxu0
        %v2669 = vadd.f32 %v2538, %v2668
        %v2670 = vpop.f32.mrf.mxu0
        %2671 = vmatprep.mubr.f32.mxu0 0.0
        %2672 = vmatmul.mubr.f32.gmra.mxu0 %v2552
        %v2673 = vpop.f32.mrf.mxu0
        %v2674 = vadd.f32 %v2538, %v2673
        %v2675 = vpop.f32.mrf.mxu0
        %2676 = vmatprep.mubr.f32.mxu0 0.0
        %2677 = vmatmul.mubr.f32.gmra.mxu0 %v2555
        %v2678 = vpop.f32.mrf.mxu0
        %v2679 = vadd.f32 %v2538, %v2678
        %v2680 = vpop.f32.mrf.mxu0
        %2681 = vmatprep.mubr.f32.mxu0 0.0
        %2682 = vmatmul.mubr.f32.gmra.mxu0 %v2558
        %v2683 = vpop.f32.mrf.mxu0
        %v2684 = vadd.f32 %v2538, %v2683
        %v2685 = vpop.f32.mrf.mxu0
        %2686 = vmatprep.mubr.f32.mxu0 0.0
        %2687 = vmatmul.mubr.f32.gmra.mxu0 %v2561
        %v2688 = vpop.f32.mrf.mxu0
        %v2689 = vadd.f32 %v2538, %v2688
        %v2690 = vpop.f32.mrf.mxu0
        %2691 = vmatprep.mubr.f32.mxu0 0.0
        %2692 = vmatmul.mubr.f32.gmra.mxu0 %v2564
        %v2693 = vpop.f32.mrf.mxu0
        %v2694 = vadd.f32 %v2538, %v2693
        %v2695 = vpop.f32.mrf.mxu0
        %2696 = vmatprep.mubr.f32.mxu0 0.0
        %2697 = vmatmul.mubr.f32.gmra.mxu0 %v2567
        %v2698 = vpop.f32.mrf.mxu0
        %v2699 = vadd.f32 %v2538, %v2698
        %v2700 = vpop.f32.mrf.mxu0
        %2701 = vmatprep.mubr.f32.mxu0 0.0
        %2702 = vmatmul.mubr.f32.gmra.mxu0 %v2570
        %v2703 = vpop.f32.mrf.mxu0
        %v2704 = vadd.f32 %v2538, %v2703
        %v2705 = vpop.f32.mrf.mxu0
        %2706 = vmatprep.mubr.f32.mxu0 0.0
        %2707 = vmatmul.mubr.f32.gmra.mxu0 %v2573
        %v2708 = vpop.f32.mrf.mxu0
        %v2709 = vadd.f32 %v2538, %v2708
        %v2710 = vpop.f32.mrf.mxu0
        %2711 = vmatprep.mubr.f32.mxu0 0.0
        %2712 = vmatmul.mubr.f32.gmra.mxu0 %v2576
        %v2713 = vpop.f32.mrf.mxu0
        %v2714 = vadd.f32 %v2538, %v2713
        %v2715 = vpop.f32.mrf.mxu0
        %2716 = vmatprep.mubr.f32.mxu0 0.0
        %2717 = vmatmul.mubr.f32.gmra.mxu0 %v2579
        %v2718 = vpop.f32.mrf.mxu0
        %v2719 = vadd.f32 %v2538, %v2718
        %v2720 = vpop.f32.mrf.mxu0
        %2721 = vmatprep.mubr.f32.mxu0 0.0
        %2722 = vmatmul.mubr.f32.gmra.mxu0 %v2582
        %v2723 = vpop.f32.mrf.mxu0
        %v2724 = vadd.f32 %v2538, %v2723
        %v2725 = vpop.f32.mrf.mxu0
        %2726 = vmatprep.mubr.f32.mxu0 0.0
        %2727 = vmatmul.mubr.f32.gmra.mxu0 %v2585
        %v2728 = vpop.f32.mrf.mxu0
        %v2729 = vadd.f32 %v2538, %v2728
        %v2730 = vpop.f32.mrf.mxu0
        %2731 = vdwg.mxu0
        %v2732 = vsel %vm970, %v2654, 0.0
        %2733 = vadd.xlane.f32.xlu0 %v2732
        %v2734 = vpop.xlane.xlu0 %2733
        %v2735 = vsel %vm970, %v2659, 0.0
        %2736 = vadd.xlane.f32.xlu0 %v2735
        %v2737 = vpop.xlane.xlu0 %2736
        %v2738 = vsel %vm970, %v2664, 0.0
        %2739 = vadd.xlane.f32.xlu0 %v2738
        %v2740 = vpop.xlane.xlu0 %2739
        %v2741 = vsel %vm970, %v2669, 0.0
        %2742 = vadd.xlane.f32.xlu0 %v2741
        %v2743 = vpop.xlane.xlu0 %2742
        %v2744 = vsel %vm970, %v2674, 0.0
        %2745 = vadd.xlane.f32.xlu0 %v2744
        %v2746 = vpop.xlane.xlu0 %2745
        %v2747 = vsel %vm970, %v2679, 0.0
        %2748 = vadd.xlane.f32.xlu0 %v2747
        %v2749 = vpop.xlane.xlu0 %2748
        %v2750 = vsel %vm970, %v2684, 0.0
        %2751 = vadd.xlane.f32.xlu0 %v2750
        %v2752 = vpop.xlane.xlu0 %2751
        %v2753 = vsel %vm970, %v2689, 0.0
        %2754 = vadd.xlane.f32.xlu0 %v2753
        %v2755 = vpop.xlane.xlu0 %2754
        %v2756 = vsel %vm970, %v2694, 0.0
        %2757 = vadd.xlane.f32.xlu0 %v2756
        %v2758 = vpop.xlane.xlu0 %2757
        %v2759 = vsel %vm970, %v2699, 0.0
        %2760 = vadd.xlane.f32.xlu0 %v2759
        %v2761 = vpop.xlane.xlu0 %2760
        %v2762 = vsel %vm970, %v2704, 0.0
        %2763 = vadd.xlane.f32.xlu0 %v2762
        %v2764 = vpop.xlane.xlu0 %2763
        %v2765 = vsel %vm970, %v2709, 0.0
        %2766 = vadd.xlane.f32.xlu0 %v2765
        %v2767 = vpop.xlane.xlu0 %2766
        %v2768 = vsel %vm970, %v2714, 0.0
        %2769 = vadd.xlane.f32.xlu0 %v2768
        %v2770 = vpop.xlane.xlu0 %2769
        %v2771 = vsel %vm970, %v2719, 0.0
        %2772 = vadd.xlane.f32.xlu0 %v2771
        %v2773 = vpop.xlane.xlu0 %2772
        %v2774 = vsel %vm970, %v2724, 0.0
        %2775 = vadd.xlane.f32.xlu0 %v2774
        %v2776 = vpop.xlane.xlu0 %2775
        %v2777 = vsel %vm970, %v2729, 0.0
        %2778 = vadd.xlane.f32.xlu0 %v2777
        %v2779 = vpop.xlane.xlu0 %2778
        %v2780 = vmul.f32 %v2734, 0.015625
        %v2781 = vmul.f32 %v2737, 0.015625
        %v2782 = vmul.f32 %v2740, 0.015625
        %v2783 = vmul.f32 %v2743, 0.015625
        %v2784 = vmul.f32 %v2746, 0.015625
        %v2785 = vmul.f32 %v2749, 0.015625
        %v2786 = vmul.f32 %v2752, 0.015625
        %v2787 = vmul.f32 %v2755, 0.015625
        %v2788 = vmul.f32 %v2758, 0.015625
        %v2789 = vmul.f32 %v2761, 0.015625
        %v2790 = vmul.f32 %v2764, 0.015625
        %v2791 = vmul.f32 %v2767, 0.015625
        %v2792 = vmul.f32 %v2770, 0.015625
        %v2793 = vmul.f32 %v2773, 0.015625
        %v2794 = vmul.f32 %v2776, 0.015625
        %v2795 = vmul.f32 %v2779, 0.015625
        %v2796 = vmul.f32 %v2654, %v2654
        %v2797 = vmul.f32 %v2659, %v2659
        %v2798 = vmul.f32 %v2664, %v2664
        %v2799 = vmul.f32 %v2669, %v2669
        %v2800 = vmul.f32 %v2674, %v2674
        %v2801 = vmul.f32 %v2679, %v2679
        %v2802 = vmul.f32 %v2684, %v2684
        %v2803 = vmul.f32 %v2689, %v2689
        %v2804 = vmul.f32 %v2694, %v2694
        %v2805 = vmul.f32 %v2699, %v2699
        %v2806 = vmul.f32 %v2704, %v2704
        %v2807 = vmul.f32 %v2709, %v2709
        %v2808 = vmul.f32 %v2714, %v2714
        %v2809 = vmul.f32 %v2719, %v2719
        %v2810 = vmul.f32 %v2724, %v2724
        %v2811 = vmul.f32 %v2729, %v2729
        %v2812 = vsel %vm970, %v2796, 0.0
        %2813 = vadd.xlane.f32.xlu0 %v2812
        %v2814 = vpop.xlane.xlu0 %2813
        %v2815 = vsel %vm970, %v2797, 0.0
        %2816 = vadd.xlane.f32.xlu0 %v2815
        %v2817 = vpop.xlane.xlu0 %2816
        %v2818 = vsel %vm970, %v2798, 0.0
        %2819 = vadd.xlane.f32.xlu0 %v2818
        %v2820 = vpop.xlane.xlu0 %2819
        %v2821 = vsel %vm970, %v2799, 0.0
        %2822 = vadd.xlane.f32.xlu0 %v2821
        %v2823 = vpop.xlane.xlu0 %2822
        %v2824 = vsel %vm970, %v2800, 0.0
        %2825 = vadd.xlane.f32.xlu0 %v2824
        %v2826 = vpop.xlane.xlu0 %2825
        %v2827 = vsel %vm970, %v2801, 0.0
        %2828 = vadd.xlane.f32.xlu0 %v2827
        %v2829 = vpop.xlane.xlu0 %2828
        %v2830 = vsel %vm970, %v2802, 0.0
        %2831 = vadd.xlane.f32.xlu0 %v2830
        %v2832 = vpop.xlane.xlu0 %2831
        %v2833 = vsel %vm970, %v2803, 0.0
        %2834 = vadd.xlane.f32.xlu0 %v2833
        %v2835 = vpop.xlane.xlu0 %2834
        %v2836 = vsel %vm970, %v2804, 0.0
        %2837 = vadd.xlane.f32.xlu0 %v2836
        %v2838 = vpop.xlane.xlu0 %2837
        %v2839 = vsel %vm970, %v2805, 0.0
        %2840 = vadd.xlane.f32.xlu0 %v2839
        %v2841 = vpop.xlane.xlu0 %2840
        %v2842 = vsel %vm970, %v2806, 0.0
        %2843 = vadd.xlane.f32.xlu0 %v2842
        %v2844 = vpop.xlane.xlu0 %2843
        %v2845 = vsel %vm970, %v2807, 0.0
        %2846 = vadd.xlane.f32.xlu0 %v2845
        %v2847 = vpop.xlane.xlu0 %2846
        %v2848 = vsel %vm970, %v2808, 0.0
        %2849 = vadd.xlane.f32.xlu0 %v2848
        %v2850 = vpop.xlane.xlu0 %2849
        %v2851 = vsel %vm970, %v2809, 0.0
        %2852 = vadd.xlane.f32.xlu0 %v2851
        %v2853 = vpop.xlane.xlu0 %2852
        %v2854 = vsel %vm970, %v2810, 0.0
        %2855 = vadd.xlane.f32.xlu0 %v2854
        %v2856 = vpop.xlane.xlu0 %2855
        %v2857 = vsel %vm970, %v2811, 0.0
        %2858 = vadd.xlane.f32.xlu0 %v2857
        %v2859 = vpop.xlane.xlu0 %2858
        %v2860 = vmul.f32 %v2814, 0.015625
        %v2861 = vmul.f32 %v2817, 0.015625
        %v2862 = vmul.f32 %v2820, 0.015625
        %v2863 = vmul.f32 %v2823, 0.015625
        %v2864 = vmul.f32 %v2826, 0.015625
        %v2865 = vmul.f32 %v2829, 0.015625
        %v2866 = vmul.f32 %v2832, 0.015625
        %v2867 = vmul.f32 %v2835, 0.015625
        %v2868 = vmul.f32 %v2838, 0.015625
        %v2869 = vmul.f32 %v2841, 0.015625
        %v2870 = vmul.f32 %v2844, 0.015625
        %v2871 = vmul.f32 %v2847, 0.015625
        %v2872 = vmul.f32 %v2850, 0.015625
        %v2873 = vmul.f32 %v2853, 0.015625
        %v2874 = vmul.f32 %v2856, 0.015625
        %v2875 = vmul.f32 %v2859, 0.015625
        %v2876 = vmul.f32 %v2780, %v2780
        %v2877 = vmul.f32 %v2781, %v2781
        %v2878 = vmul.f32 %v2782, %v2782
        %v2879 = vmul.f32 %v2783, %v2783
        %v2880 = vmul.f32 %v2784, %v2784
        %v2881 = vmul.f32 %v2785, %v2785
        %v2882 = vmul.f32 %v2786, %v2786
        %v2883 = vmul.f32 %v2787, %v2787
        %v2884 = vmul.f32 %v2788, %v2788
        %v2885 = vmul.f32 %v2789, %v2789
        %v2886 = vmul.f32 %v2790, %v2790
        %v2887 = vmul.f32 %v2791, %v2791
        %v2888 = vmul.f32 %v2792, %v2792
        %v2889 = vmul.f32 %v2793, %v2793
        %v2890 = vmul.f32 %v2794, %v2794
        %v2891 = vmul.f32 %v2795, %v2795
        %v2892 = vsub.f32 %v2860, %v2876
        %v2893 = vsub.f32 %v2861, %v2877
        %v2894 = vsub.f32 %v2862, %v2878
        %v2895 = vsub.f32 %v2863, %v2879
        %v2896 = vsub.f32 %v2864, %v2880
        %v2897 = vsub.f32 %v2865, %v2881
        %v2898 = vsub.f32 %v2866, %v2882
        %v2899 = vsub.f32 %v2867, %v2883
        %v2900 = vsub.f32 %v2868, %v2884
        %v2901 = vsub.f32 %v2869, %v2885
        %v2902 = vsub.f32 %v2870, %v2886
        %v2903 = vsub.f32 %v2871, %v2887
        %v2904 = vsub.f32 %v2872, %v2888
        %v2905 = vsub.f32 %v2873, %v2889
        %v2906 = vsub.f32 %v2874, %v2890
        %v2907 = vsub.f32 %v2875, %v2891
        %v2908 = vmax.f32 %v2892, 0.0
        %v2909 = vmax.f32 %v2893, 0.0
        %v2910 = vmax.f32 %v2894, 0.0
        %v2911 = vmax.f32 %v2895, 0.0
        %v2912 = vmax.f32 %v2896, 0.0
        %v2913 = vmax.f32 %v2897, 0.0
        %v2914 = vmax.f32 %v2898, 0.0
        %v2915 = vmax.f32 %v2899, 0.0
        %v2916 = vmax.f32 %v2900, 0.0
        %v2917 = vmax.f32 %v2901, 0.0
        %v2918 = vmax.f32 %v2902, 0.0
        %v2919 = vmax.f32 %v2903, 0.0
        %v2920 = vmax.f32 %v2904, 0.0
        %v2921 = vmax.f32 %v2905, 0.0
        %v2922 = vmax.f32 %v2906, 0.0
        %v2923 = vmax.f32 %v2907, 0.0
        %v2924 = vld [vmem:[%s2 + $0xe] sm:$0x1]
        %v2925 = vld [vmem:[%s2 + $0xf] sm:$0x1]
        %v2926 = vsub.f32 %v2654, %v2780
        %v2927 = vsub.f32 %v2659, %v2781
        %v2928 = vsub.f32 %v2664, %v2782
        %v2929 = vsub.f32 %v2669, %v2783
        %v2930 = vsub.f32 %v2674, %v2784
        %v2931 = vsub.f32 %v2679, %v2785
        %v2932 = vsub.f32 %v2684, %v2786
        %v2933 = vsub.f32 %v2689, %v2787
        %v2934 = vsub.f32 %v2694, %v2788
        %v2935 = vsub.f32 %v2699, %v2789
        %v2936 = vsub.f32 %v2704, %v2790
        %v2937 = vsub.f32 %v2709, %v2791
        %v2938 = vsub.f32 %v2714, %v2792
        %v2939 = vsub.f32 %v2719, %v2793
        %v2940 = vsub.f32 %v2724, %v2794
        %v2941 = vsub.f32 %v2729, %v2795
        %v2942 = vadd.f32 %v2908, 1e-05
        %v2943 = vadd.f32 %v2909, 1e-05
        %v2944 = vadd.f32 %v2910, 1e-05
        %v2945 = vadd.f32 %v2911, 1e-05
        %v2946 = vadd.f32 %v2912, 1e-05
        %v2947 = vadd.f32 %v2913, 1e-05
        %v2948 = vadd.f32 %v2914, 1e-05
        %v2949 = vadd.f32 %v2915, 1e-05
        %v2950 = vadd.f32 %v2916, 1e-05
        %v2951 = vadd.f32 %v2917, 1e-05
        %v2952 = vadd.f32 %v2918, 1e-05
        %v2953 = vadd.f32 %v2919, 1e-05
        %v2954 = vadd.f32 %v2920, 1e-05
        %v2955 = vadd.f32 %v2921, 1e-05
        %v2956 = vadd.f32 %v2922, 1e-05
        %v2957 = vadd.f32 %v2923, 1e-05
        %v2958 = vrsqrt.pop %v2942
        %v2959 = vrsqrt.pop %v2943
        %v2960 = vrsqrt.pop %v2944
        %v2961 = vrsqrt.pop %v2945
        %v2962 = vrsqrt.pop %v2946
        %v2963 = vrsqrt.pop %v2947
        %v2964 = vrsqrt.pop %v2948
        %v2965 = vrsqrt.pop %v2949
        %v2966 = vrsqrt.pop %v2950
        %v2967 = vrsqrt.pop %v2951
        %v2968 = vrsqrt.pop %v2952
        %v2969 = vrsqrt.pop %v2953
        %v2970 = vrsqrt.pop %v2954
        %v2971 = vrsqrt.pop %v2955
        %v2972 = vrsqrt.pop %v2956
        %v2973 = vrsqrt.pop %v2957
        %v2974 = vmul.f32 %v2926, %v2958
        %v2975 = vmul.f32 %v2927, %v2959
        %v2976 = vmul.f32 %v2928, %v2960
        %v2977 = vmul.f32 %v2929, %v2961
        %v2978 = vmul.f32 %v2930, %v2962
        %v2979 = vmul.f32 %v2931, %v2963
        %v2980 = vmul.f32 %v2932, %v2964
        %v2981 = vmul.f32 %v2933, %v2965
        %v2982 = vmul.f32 %v2934, %v2966
        %v2983 = vmul.f32 %v2935, %v2967
        %v2984 = vmul.f32 %v2936, %v2968
        %v2985 = vmul.f32 %v2937, %v2969
        %v2986 = vmul.f32 %v2938, %v2970
        %v2987 = vmul.f32 %v2939, %v2971
        %v2988 = vmul.f32 %v2940, %v2972
        %v2989 = vmul.f32 %v2941, %v2973
        %v2990 = vlaneseq
        %v2991 = vshrl.u32 %v2990, 7
        %v2992 = vsub.s32 0, %v2991
        %v2993 = vrot.slane %v2924, %v2992
        %v2994 = vmul.f32 %v2974, %v2993
        %v2995 = vmul.f32 %v2975, %v2993
        %v2996 = vmul.f32 %v2976, %v2993
        %v2997 = vmul.f32 %v2977, %v2993
        %v2998 = vmul.f32 %v2978, %v2993
        %v2999 = vmul.f32 %v2979, %v2993
        %v3000 = vmul.f32 %v2980, %v2993
        %v3001 = vmul.f32 %v2981, %v2993
        %v3002 = vmul.f32 %v2982, %v2993
        %v3003 = vmul.f32 %v2983, %v2993
        %v3004 = vmul.f32 %v2984, %v2993
        %v3005 = vmul.f32 %v2985, %v2993
        %v3006 = vmul.f32 %v2986, %v2993
        %v3007 = vmul.f32 %v2987, %v2993
        %v3008 = vmul.f32 %v2988, %v2993
        %v3009 = vmul.f32 %v2989, %v2993
        %v3010 = vlaneseq
        %v3011 = vshrl.u32 %v3010, 7
        %v3012 = vsub.s32 0, %v3011
        %v3013 = vrot.slane %v2925, %v3012
        %v3014 = vadd.f32 %v2994, %v3013
        %v3015 = vadd.f32 %v2995, %v3013
        %v3016 = vadd.f32 %v2996, %v3013
        %v3017 = vadd.f32 %v2997, %v3013
        %v3018 = vadd.f32 %v2998, %v3013
        %v3019 = vadd.f32 %v2999, %v3013
        %v3020 = vadd.f32 %v3000, %v3013
        %v3021 = vadd.f32 %v3001, %v3013
        %v3022 = vadd.f32 %v3002, %v3013
        %v3023 = vadd.f32 %v3003, %v3013
        %v3024 = vadd.f32 %v3004, %v3013
        %v3025 = vadd.f32 %v3005, %v3013
        %v3026 = vadd.f32 %v3006, %v3013
        %v3027 = vadd.f32 %v3007, %v3013
        %v3028 = vadd.f32 %v3008, %v3013
        %v3029 = vadd.f32 %v3009, %v3013
        %v3030 = vmax.f32 %v3014, 0.0
        %v3031 = vmax.f32 %v3015, 0.0
        %v3032 = vmax.f32 %v3016, 0.0
        %v3033 = vmax.f32 %v3017, 0.0
        %v3034 = vmax.f32 %v3018, 0.0
        %v3035 = vmax.f32 %v3019, 0.0
        %v3036 = vmax.f32 %v3020, 0.0
        %v3037 = vmax.f32 %v3021, 0.0
        %v3038 = vmax.f32 %v3022, 0.0
        %v3039 = vmax.f32 %v3023, 0.0
        %v3040 = vmax.f32 %v3024, 0.0
        %v3041 = vmax.f32 %v3025, 0.0
        %v3042 = vmax.f32 %v3026, 0.0
        %v3043 = vmax.f32 %v3027, 0.0
        %v3044 = vmax.f32 %v3028, 0.0
        %v3045 = vmax.f32 %v3029, 0.0
        %v3046 = vld [vmem:[#allocation2 + $0x108] sm:$0xff]
        %v3047 = vld [vmem:[#allocation2 + $0x110] sm:$0xff]
        %v3048 = vld [vmem:[#allocation2 + $0x118] sm:$0xff]
        %v3049 = vld [vmem:[#allocation2 + $0x120] sm:$0xff]
        %v3050 = vld [vmem:[#allocation2 + $0x128] sm:$0xff]
        %v3051 = vld [vmem:[#allocation2 + $0x130] sm:$0xff]
        %v3052 = vld [vmem:[#allocation2 + $0x138] sm:$0xff]
        %v3053 = vld [vmem:[#allocation2 + $0x140] sm:$0xff]
        %v3054 = vld [vmem:[%s2 + $0x10] sm:$0x1]
        %v3055 = vlaneseq
        %v3056 = vshrl.u32 %v3055, 7
        %v3057 = vsub.s32 0, %v3056
        %v3058 = vrot.slane %v3054, %v3057
        %v3060 = vsel %vm970, %v3030, 0
        %v3063 = vsel %vm970, %v3031, 0
        %v3066 = vsel %vm970, %v3032, 0
        %v3069 = vsel %vm970, %v3033, 0
        %v3072 = vsel %vm970, %v3034, 0
        %v3075 = vsel %vm970, %v3035, 0
        %v3078 = vsel %vm970, %v3036, 0
        %v3081 = vsel %vm970, %v3037, 0
        %v3084 = vsel %vm970, %v3038, 0
        %v3087 = vsel %vm970, %v3039, 0
        %v3090 = vsel %vm970, %v3040, 0
        %v3093 = vsel %vm970, %v3041, 0
        %v3096 = vsel %vm970, %v3042, 0
        %v3099 = vsel %vm970, %v3043, 0
        %v3102 = vsel %vm970, %v3044, 0
        %v3105 = vsel %vm970, %v3045, 0
        %3107 = vmatprep.subr.mxu0 0.0
        %3108 = vmatpush1.msra.mxu0 0.0
        %3109 = vmatprep.subr.mxu0 0.0
        %3110 = vmatpush1.msra.mxu0 0.0
        %3111 = vmatprep.subr.mxu0 0.0
        %3112 = vmatpush1.msra.mxu0 0.0
        %3113 = vmatprep.subr.mxu0 0.0
        %3114 = vmatpush1.msra.mxu0 0.0
        %3115 = vmatprep.subr.mxu0 0.0
        %3116 = vmatpush1.msra.mxu0 0.0
        %3117 = vmatprep.subr.mxu0 0.0
        %3118 = vmatpush1.msra.mxu0 0.0
        %3119 = vmatprep.subr.mxu0 0.0
        %3120 = vmatpush1.msra.mxu0 0.0
        %3121 = vmatprep.subr.mxu0 0.0
        %3122 = vmatpush1.msra.mxu0 0.0
        %3123 = vmatprep.subr.mxu0 0.0
        %3124 = vmatpush1.msra.mxu0 %v3053
        %3125 = vmatprep.subr.mxu0 0.0
        %3126 = vmatpush1.msra.mxu0 %v3052
        %3127 = vmatprep.subr.mxu0 0.0
        %3128 = vmatpush1.msra.mxu0 %v3051
        %3129 = vmatprep.subr.mxu0 0.0
        %3130 = vmatpush1.msra.mxu0 %v3050
        %3131 = vmatprep.subr.mxu0 0.0
        %3132 = vmatpush1.msra.mxu0 %v3049
        %3133 = vmatprep.subr.mxu0 0.0
        %3134 = vmatpush1.msra.mxu0 %v3048
        %3135 = vmatprep.subr.mxu0 0.0
        %3136 = vmatpush1.msra.mxu0 %v3047
        %3137 = vmatprep.subr.mxu0 0.0
        %3138 = vmatpush1.msra.mxu0 %v3046
        %3139 = vmatprep.subr.mxu0 0.0
        %3140 = vmatpush2.msra.mxu0 0.0
        %3141 = vmatprep.subr.mxu0 0.0
        %3142 = vmatpush2.msra.mxu0 0.0
        %3143 = vmatprep.subr.mxu0 0.0
        %3144 = vmatpush2.msra.mxu0 0.0
        %3145 = vmatprep.subr.mxu0 0.0
        %3146 = vmatpush2.msra.mxu0 0.0
        %3147 = vmatprep.subr.mxu0 0.0
        %3148 = vmatpush2.msra.mxu0 0.0
        %3149 = vmatprep.subr.mxu0 0.0
        %3150 = vmatpush2.msra.mxu0 0.0
        %3151 = vmatprep.subr.mxu0 0.0
        %3152 = vmatpush2.msra.mxu0 0.0
        %3153 = vmatprep.subr.mxu0 0.0
        %3154 = vmatpush2.msra.mxu0 0.0
        %3155 = vmatprep.subr.mxu0 0.0
        %3156 = vmatpush2.msra.mxu0 0.0
        %3157 = vmatprep.subr.mxu0 0.0
        %3158 = vmatpush2.msra.mxu0 0.0
        %3159 = vmatprep.subr.mxu0 0.0
        %3160 = vmatpush2.msra.mxu0 0.0
        %3161 = vmatprep.subr.mxu0 0.0
        %3162 = vmatpush2.msra.mxu0 0.0
        %3163 = vmatprep.subr.mxu0 0.0
        %3164 = vmatpush2.msra.mxu0 0.0
        %3165 = vmatprep.subr.mxu0 0.0
        %3166 = vmatpush2.msra.mxu0 0.0
        %3167 = vmatprep.subr.mxu0 0.0
        %3168 = vmatpush2.msra.mxu0 0.0
        %3169 = vmatprep.subr.mxu0 0.0
        %3170 = vmatpush2.msra.mxu0 0.0
        %3171 = vmatprep.mubr.f32.mxu0 0.0
        %3172 = vmatmul.mubr.f32.gmra.mxu0 %v3060
        %v3173 = vpop.f32.mrf.mxu0
        %v3174 = vadd.f32 %v3058, %v3173
        %v3175 = vpop.f32.mrf.mxu0
        %3176 = vmatprep.mubr.f32.mxu0 0.0
        %3177 = vmatmul.mubr.f32.gmra.mxu0 %v3063
        %v3178 = vpop.f32.mrf.mxu0
        %v3179 = vadd.f32 %v3058, %v3178
        %v3180 = vpop.f32.mrf.mxu0
        %3181 = vmatprep.mubr.f32.mxu0 0.0
        %3182 = vmatmul.mubr.f32.gmra.mxu0 %v3066
        %v3183 = vpop.f32.mrf.mxu0
        %v3184 = vadd.f32 %v3058, %v3183
        %v3185 = vpop.f32.mrf.mxu0
        %3186 = vmatprep.mubr.f32.mxu0 0.0
        %3187 = vmatmul.mubr.f32.gmra.mxu0 %v3069
        %v3188 = vpop.f32.mrf.mxu0
        %v3189 = vadd.f32 %v3058, %v3188
        %v3190 = vpop.f32.mrf.mxu0
        %3191 = vmatprep.mubr.f32.mxu0 0.0
        %3192 = vmatmul.mubr.f32.gmra.mxu0 %v3072
        %v3193 = vpop.f32.mrf.mxu0
        %v3194 = vadd.f32 %v3058, %v3193
        %v3195 = vpop.f32.mrf.mxu0
        %3196 = vmatprep.mubr.f32.mxu0 0.0
        %3197 = vmatmul.mubr.f32.gmra.mxu0 %v3075
        %v3198 = vpop.f32.mrf.mxu0
        %v3199 = vadd.f32 %v3058, %v3198
        %v3200 = vpop.f32.mrf.mxu0
        %3201 = vmatprep.mubr.f32.mxu0 0.0
        %3202 = vmatmul.mubr.f32.gmra.mxu0 %v3078
        %v3203 = vpop.f32.mrf.mxu0
        %v3204 = vadd.f32 %v3058, %v3203
        %v3205 = vpop.f32.mrf.mxu0
        %3206 = vmatprep.mubr.f32.mxu0 0.0
        %3207 = vmatmul.mubr.f32.gmra.mxu0 %v3081
        %v3208 = vpop.f32.mrf.mxu0
        %v3209 = vadd.f32 %v3058, %v3208
        %v3210 = vpop.f32.mrf.mxu0
        %3211 = vmatprep.mubr.f32.mxu0 0.0
        %3212 = vmatmul.mubr.f32.gmra.mxu0 %v3084
        %v3213 = vpop.f32.mrf.mxu0
        %v3214 = vadd.f32 %v3058, %v3213
        %v3215 = vpop.f32.mrf.mxu0
        %3216 = vmatprep.mubr.f32.mxu0 0.0
        %3217 = vmatmul.mubr.f32.gmra.mxu0 %v3087
        %v3218 = vpop.f32.mrf.mxu0
        %v3219 = vadd.f32 %v3058, %v3218
        %v3220 = vpop.f32.mrf.mxu0
        %3221 = vmatprep.mubr.f32.mxu0 0.0
        %3222 = vmatmul.mubr.f32.gmra.mxu0 %v3090
        %v3223 = vpop.f32.mrf.mxu0
        %v3224 = vadd.f32 %v3058, %v3223
        %v3225 = vpop.f32.mrf.mxu0
        %3226 = vmatprep.mubr.f32.mxu0 0.0
        %3227 = vmatmul.mubr.f32.gmra.mxu0 %v3093
        %v3228 = vpop.f32.mrf.mxu0
        %v3229 = vadd.f32 %v3058, %v3228
        %v3230 = vpop.f32.mrf.mxu0
        %3231 = vmatprep.mubr.f32.mxu0 0.0
        %3232 = vmatmul.mubr.f32.gmra.mxu0 %v3096
        %v3233 = vpop.f32.mrf.mxu0
        %v3234 = vadd.f32 %v3058, %v3233
        %v3235 = vpop.f32.mrf.mxu0
        %3236 = vmatprep.mubr.f32.mxu0 0.0
        %3237 = vmatmul.mubr.f32.gmra.mxu0 %v3099
        %v3238 = vpop.f32.mrf.mxu0
        %v3239 = vadd.f32 %v3058, %v3238
        %v3240 = vpop.f32.mrf.mxu0
        %3241 = vmatprep.mubr.f32.mxu0 0.0
        %3242 = vmatmul.mubr.f32.gmra.mxu0 %v3102
        %v3243 = vpop.f32.mrf.mxu0
        %v3244 = vadd.f32 %v3058, %v3243
        %v3245 = vpop.f32.mrf.mxu0
        %3246 = vmatprep.mubr.f32.mxu0 0.0
        %3247 = vmatmul.mubr.f32.gmra.mxu0 %v3105
        %v3248 = vpop.f32.mrf.mxu0
        %v3249 = vadd.f32 %v3058, %v3248
        %v3250 = vpop.f32.mrf.mxu0
        %3251 = vdwg.mxu0
        %v3252 = vsel %vm447, %v3174, 0.0
        %3253 = vadd.xlane.f32.xlu0 %v3252
        %v3254 = vpop.xlane.xlu0 %3253
        %v3255 = vsel %vm447, %v3179, 0.0
        %3256 = vadd.xlane.f32.xlu0 %v3255
        %v3257 = vpop.xlane.xlu0 %3256
        %v3258 = vsel %vm447, %v3184, 0.0
        %3259 = vadd.xlane.f32.xlu0 %v3258
        %v3260 = vpop.xlane.xlu0 %3259
        %v3261 = vsel %vm447, %v3189, 0.0
        %3262 = vadd.xlane.f32.xlu0 %v3261
        %v3263 = vpop.xlane.xlu0 %3262
        %v3264 = vsel %vm447, %v3194, 0.0
        %3265 = vadd.xlane.f32.xlu0 %v3264
        %v3266 = vpop.xlane.xlu0 %3265
        %v3267 = vsel %vm447, %v3199, 0.0
        %3268 = vadd.xlane.f32.xlu0 %v3267
        %v3269 = vpop.xlane.xlu0 %3268
        %v3270 = vsel %vm447, %v3204, 0.0
        %3271 = vadd.xlane.f32.xlu0 %v3270
        %v3272 = vpop.xlane.xlu0 %3271
        %v3273 = vsel %vm447, %v3209, 0.0
        %3274 = vadd.xlane.f32.xlu0 %v3273
        %v3275 = vpop.xlane.xlu0 %3274
        %v3276 = vsel %vm447, %v3214, 0.0
        %3277 = vadd.xlane.f32.xlu0 %v3276
        %v3278 = vpop.xlane.xlu0 %3277
        %v3279 = vsel %vm447, %v3219, 0.0
        %3280 = vadd.xlane.f32.xlu0 %v3279
        %v3281 = vpop.xlane.xlu0 %3280
        %v3282 = vsel %vm447, %v3224, 0.0
        %3283 = vadd.xlane.f32.xlu0 %v3282
        %v3284 = vpop.xlane.xlu0 %3283
        %v3285 = vsel %vm447, %v3229, 0.0
        %3286 = vadd.xlane.f32.xlu0 %v3285
        %v3287 = vpop.xlane.xlu0 %3286
        %v3288 = vsel %vm447, %v3234, 0.0
        %3289 = vadd.xlane.f32.xlu0 %v3288
        %v3290 = vpop.xlane.xlu0 %3289
        %v3291 = vsel %vm447, %v3239, 0.0
        %3292 = vadd.xlane.f32.xlu0 %v3291
        %v3293 = vpop.xlane.xlu0 %3292
        %v3294 = vsel %vm447, %v3244, 0.0
        %3295 = vadd.xlane.f32.xlu0 %v3294
        %v3296 = vpop.xlane.xlu0 %3295
        %v3297 = vsel %vm447, %v3249, 0.0
        %3298 = vadd.xlane.f32.xlu0 %v3297
        %v3299 = vpop.xlane.xlu0 %3298
        %v3300 = vmul.f32 %v3254, 0.0125
        %v3301 = vmul.f32 %v3257, 0.0125
        %v3302 = vmul.f32 %v3260, 0.0125
        %v3303 = vmul.f32 %v3263, 0.0125
        %v3304 = vmul.f32 %v3266, 0.0125
        %v3305 = vmul.f32 %v3269, 0.0125
        %v3306 = vmul.f32 %v3272, 0.0125
        %v3307 = vmul.f32 %v3275, 0.0125
        %v3308 = vmul.f32 %v3278, 0.0125
        %v3309 = vmul.f32 %v3281, 0.0125
        %v3310 = vmul.f32 %v3284, 0.0125
        %v3311 = vmul.f32 %v3287, 0.0125
        %v3312 = vmul.f32 %v3290, 0.0125
        %v3313 = vmul.f32 %v3293, 0.0125
        %v3314 = vmul.f32 %v3296, 0.0125
        %v3315 = vmul.f32 %v3299, 0.0125
        %v3316 = vmul.f32 %v3174, %v3174
        %v3317 = vmul.f32 %v3179, %v3179
        %v3318 = vmul.f32 %v3184, %v3184
        %v3319 = vmul.f32 %v3189, %v3189
        %v3320 = vmul.f32 %v3194, %v3194
        %v3321 = vmul.f32 %v3199, %v3199
        %v3322 = vmul.f32 %v3204, %v3204
        %v3323 = vmul.f32 %v3209, %v3209
        %v3324 = vmul.f32 %v3214, %v3214
        %v3325 = vmul.f32 %v3219, %v3219
        %v3326 = vmul.f32 %v3224, %v3224
        %v3327 = vmul.f32 %v3229, %v3229
        %v3328 = vmul.f32 %v3234, %v3234
        %v3329 = vmul.f32 %v3239, %v3239
        %v3330 = vmul.f32 %v3244, %v3244
        %v3331 = vmul.f32 %v3249, %v3249
        %v3332 = vsel %vm447, %v3316, 0.0
        %3333 = vadd.xlane.f32.xlu0 %v3332
        %v3334 = vpop.xlane.xlu0 %3333
        %v3335 = vsel %vm447, %v3317, 0.0
        %3336 = vadd.xlane.f32.xlu0 %v3335
        %v3337 = vpop.xlane.xlu0 %3336
        %v3338 = vsel %vm447, %v3318, 0.0
        %3339 = vadd.xlane.f32.xlu0 %v3338
        %v3340 = vpop.xlane.xlu0 %3339
        %v3341 = vsel %vm447, %v3319, 0.0
        %3342 = vadd.xlane.f32.xlu0 %v3341
        %v3343 = vpop.xlane.xlu0 %3342
        %v3344 = vsel %vm447, %v3320, 0.0
        %3345 = vadd.xlane.f32.xlu0 %v3344
        %v3346 = vpop.xlane.xlu0 %3345
        %v3347 = vsel %vm447, %v3321, 0.0
        %3348 = vadd.xlane.f32.xlu0 %v3347
        %v3349 = vpop.xlane.xlu0 %3348
        %v3350 = vsel %vm447, %v3322, 0.0
        %3351 = vadd.xlane.f32.xlu0 %v3350
        %v3352 = vpop.xlane.xlu0 %3351
        %v3353 = vsel %vm447, %v3323, 0.0
        %3354 = vadd.xlane.f32.xlu0 %v3353
        %v3355 = vpop.xlane.xlu0 %3354
        %v3356 = vsel %vm447, %v3324, 0.0
        %3357 = vadd.xlane.f32.xlu0 %v3356
        %v3358 = vpop.xlane.xlu0 %3357
        %v3359 = vsel %vm447, %v3325, 0.0
        %3360 = vadd.xlane.f32.xlu0 %v3359
        %v3361 = vpop.xlane.xlu0 %3360
        %v3362 = vsel %vm447, %v3326, 0.0
        %3363 = vadd.xlane.f32.xlu0 %v3362
        %v3364 = vpop.xlane.xlu0 %3363
        %v3365 = vsel %vm447, %v3327, 0.0
        %3366 = vadd.xlane.f32.xlu0 %v3365
        %v3367 = vpop.xlane.xlu0 %3366
        %v3368 = vsel %vm447, %v3328, 0.0
        %3369 = vadd.xlane.f32.xlu0 %v3368
        %v3370 = vpop.xlane.xlu0 %3369
        %v3371 = vsel %vm447, %v3329, 0.0
        %3372 = vadd.xlane.f32.xlu0 %v3371
        %v3373 = vpop.xlane.xlu0 %3372
        %v3374 = vsel %vm447, %v3330, 0.0
        %3375 = vadd.xlane.f32.xlu0 %v3374
        %v3376 = vpop.xlane.xlu0 %3375
        %v3377 = vsel %vm447, %v3331, 0.0
        %3378 = vadd.xlane.f32.xlu0 %v3377
        %v3379 = vpop.xlane.xlu0 %3378
        %v3380 = vmul.f32 %v3334, 0.0125
        %v3381 = vmul.f32 %v3337, 0.0125
        %v3382 = vmul.f32 %v3340, 0.0125
        %v3383 = vmul.f32 %v3343, 0.0125
        %v3384 = vmul.f32 %v3346, 0.0125
        %v3385 = vmul.f32 %v3349, 0.0125
        %v3386 = vmul.f32 %v3352, 0.0125
        %v3387 = vmul.f32 %v3355, 0.0125
        %v3388 = vmul.f32 %v3358, 0.0125
        %v3389 = vmul.f32 %v3361, 0.0125
        %v3390 = vmul.f32 %v3364, 0.0125
        %v3391 = vmul.f32 %v3367, 0.0125
        %v3392 = vmul.f32 %v3370, 0.0125
        %v3393 = vmul.f32 %v3373, 0.0125
        %v3394 = vmul.f32 %v3376, 0.0125
        %v3395 = vmul.f32 %v3379, 0.0125
        %v3396 = vmul.f32 %v3300, %v3300
        %v3397 = vmul.f32 %v3301, %v3301
        %v3398 = vmul.f32 %v3302, %v3302
        %v3399 = vmul.f32 %v3303, %v3303
        %v3400 = vmul.f32 %v3304, %v3304
        %v3401 = vmul.f32 %v3305, %v3305
        %v3402 = vmul.f32 %v3306, %v3306
        %v3403 = vmul.f32 %v3307, %v3307
        %v3404 = vmul.f32 %v3308, %v3308
        %v3405 = vmul.f32 %v3309, %v3309
        %v3406 = vmul.f32 %v3310, %v3310
        %v3407 = vmul.f32 %v3311, %v3311
        %v3408 = vmul.f32 %v3312, %v3312
        %v3409 = vmul.f32 %v3313, %v3313
        %v3410 = vmul.f32 %v3314, %v3314
        %v3411 = vmul.f32 %v3315, %v3315
        %v3412 = vsub.f32 %v3380, %v3396
        %v3413 = vsub.f32 %v3381, %v3397
        %v3414 = vsub.f32 %v3382, %v3398
        %v3415 = vsub.f32 %v3383, %v3399
        %v3416 = vsub.f32 %v3384, %v3400
        %v3417 = vsub.f32 %v3385, %v3401
        %v3418 = vsub.f32 %v3386, %v3402
        %v3419 = vsub.f32 %v3387, %v3403
        %v3420 = vsub.f32 %v3388, %v3404
        %v3421 = vsub.f32 %v3389, %v3405
        %v3422 = vsub.f32 %v3390, %v3406
        %v3423 = vsub.f32 %v3391, %v3407
        %v3424 = vsub.f32 %v3392, %v3408
        %v3425 = vsub.f32 %v3393, %v3409
        %v3426 = vsub.f32 %v3394, %v3410
        %v3427 = vsub.f32 %v3395, %v3411
        %v3428 = vmax.f32 %v3412, 0.0
        %v3429 = vmax.f32 %v3413, 0.0
        %v3430 = vmax.f32 %v3414, 0.0
        %v3431 = vmax.f32 %v3415, 0.0
        %v3432 = vmax.f32 %v3416, 0.0
        %v3433 = vmax.f32 %v3417, 0.0
        %v3434 = vmax.f32 %v3418, 0.0
        %v3435 = vmax.f32 %v3419, 0.0
        %v3436 = vmax.f32 %v3420, 0.0
        %v3437 = vmax.f32 %v3421, 0.0
        %v3438 = vmax.f32 %v3422, 0.0
        %v3439 = vmax.f32 %v3423, 0.0
        %v3440 = vmax.f32 %v3424, 0.0
        %v3441 = vmax.f32 %v3425, 0.0
        %v3442 = vmax.f32 %v3426, 0.0
        %v3443 = vmax.f32 %v3427, 0.0
        %v3444 = vld [vmem:[%s2 + $0x11] sm:$0x1]
        %v3445 = vld [vmem:[%s2 + $0x12] sm:$0x1]
        %v3446 = vsub.f32 %v3174, %v3300
        %v3447 = vsub.f32 %v3179, %v3301
        %v3448 = vsub.f32 %v3184, %v3302
        %v3449 = vsub.f32 %v3189, %v3303
        %v3450 = vsub.f32 %v3194, %v3304
        %v3451 = vsub.f32 %v3199, %v3305
        %v3452 = vsub.f32 %v3204, %v3306
        %v3453 = vsub.f32 %v3209, %v3307
        %v3454 = vsub.f32 %v3214, %v3308
        %v3455 = vsub.f32 %v3219, %v3309
        %v3456 = vsub.f32 %v3224, %v3310
        %v3457 = vsub.f32 %v3229, %v3311
        %v3458 = vsub.f32 %v3234, %v3312
        %v3459 = vsub.f32 %v3239, %v3313
        %v3460 = vsub.f32 %v3244, %v3314
        %v3461 = vsub.f32 %v3249, %v3315
        %v3462 = vadd.f32 %v3428, 1e-05
        %v3463 = vadd.f32 %v3429, 1e-05
        %v3464 = vadd.f32 %v3430, 1e-05
        %v3465 = vadd.f32 %v3431, 1e-05
        %v3466 = vadd.f32 %v3432, 1e-05
        %v3467 = vadd.f32 %v3433, 1e-05
        %v3468 = vadd.f32 %v3434, 1e-05
        %v3469 = vadd.f32 %v3435, 1e-05
        %v3470 = vadd.f32 %v3436, 1e-05
        %v3471 = vadd.f32 %v3437, 1e-05
        %v3472 = vadd.f32 %v3438, 1e-05
        %v3473 = vadd.f32 %v3439, 1e-05
        %v3474 = vadd.f32 %v3440, 1e-05
        %v3475 = vadd.f32 %v3441, 1e-05
        %v3476 = vadd.f32 %v3442, 1e-05
        %v3477 = vadd.f32 %v3443, 1e-05
        %v3478 = vrsqrt.pop %v3462
        %v3479 = vrsqrt.pop %v3463
        %v3480 = vrsqrt.pop %v3464
        %v3481 = vrsqrt.pop %v3465
        %v3482 = vrsqrt.pop %v3466
        %v3483 = vrsqrt.pop %v3467
        %v3484 = vrsqrt.pop %v3468
        %v3485 = vrsqrt.pop %v3469
        %v3486 = vrsqrt.pop %v3470
        %v3487 = vrsqrt.pop %v3471
        %v3488 = vrsqrt.pop %v3472
        %v3489 = vrsqrt.pop %v3473
        %v3490 = vrsqrt.pop %v3474
        %v3491 = vrsqrt.pop %v3475
        %v3492 = vrsqrt.pop %v3476
        %v3493 = vrsqrt.pop %v3477
        %v3494 = vmul.f32 %v3446, %v3478
        %v3495 = vmul.f32 %v3447, %v3479
        %v3496 = vmul.f32 %v3448, %v3480
        %v3497 = vmul.f32 %v3449, %v3481
        %v3498 = vmul.f32 %v3450, %v3482
        %v3499 = vmul.f32 %v3451, %v3483
        %v3500 = vmul.f32 %v3452, %v3484
        %v3501 = vmul.f32 %v3453, %v3485
        %v3502 = vmul.f32 %v3454, %v3486
        %v3503 = vmul.f32 %v3455, %v3487
        %v3504 = vmul.f32 %v3456, %v3488
        %v3505 = vmul.f32 %v3457, %v3489
        %v3506 = vmul.f32 %v3458, %v3490
        %v3507 = vmul.f32 %v3459, %v3491
        %v3508 = vmul.f32 %v3460, %v3492
        %v3509 = vmul.f32 %v3461, %v3493
        %v3510 = vlaneseq
        %v3511 = vshrl.u32 %v3510, 7
        %v3512 = vsub.s32 0, %v3511
        %v3513 = vrot.slane %v3444, %v3512
        %v3514 = vmul.f32 %v3494, %v3513
        %v3515 = vmul.f32 %v3495, %v3513
        %v3516 = vmul.f32 %v3496, %v3513
        %v3517 = vmul.f32 %v3497, %v3513
        %v3518 = vmul.f32 %v3498, %v3513
        %v3519 = vmul.f32 %v3499, %v3513
        %v3520 = vmul.f32 %v3500, %v3513
        %v3521 = vmul.f32 %v3501, %v3513
        %v3522 = vmul.f32 %v3502, %v3513
        %v3523 = vmul.f32 %v3503, %v3513
        %v3524 = vmul.f32 %v3504, %v3513
        %v3525 = vmul.f32 %v3505, %v3513
        %v3526 = vmul.f32 %v3506, %v3513
        %v3527 = vmul.f32 %v3507, %v3513
        %v3528 = vmul.f32 %v3508, %v3513
        %v3529 = vmul.f32 %v3509, %v3513
        %v3530 = vlaneseq
        %v3531 = vshrl.u32 %v3530, 7
        %v3532 = vsub.s32 0, %v3531
        %v3533 = vrot.slane %v3445, %v3532
        %v3534 = vadd.f32 %v3514, %v3533
        %v3535 = vadd.f32 %v3515, %v3533
        %v3536 = vadd.f32 %v3516, %v3533
        %v3537 = vadd.f32 %v3517, %v3533
        %v3538 = vadd.f32 %v3518, %v3533
        %v3539 = vadd.f32 %v3519, %v3533
        %v3540 = vadd.f32 %v3520, %v3533
        %v3541 = vadd.f32 %v3521, %v3533
        %v3542 = vadd.f32 %v3522, %v3533
        %v3543 = vadd.f32 %v3523, %v3533
        %v3544 = vadd.f32 %v3524, %v3533
        %v3545 = vadd.f32 %v3525, %v3533
        %v3546 = vadd.f32 %v3526, %v3533
        %v3547 = vadd.f32 %v3527, %v3533
        %v3548 = vadd.f32 %v3528, %v3533
        %v3549 = vadd.f32 %v3529, %v3533
        %v3550 = vmax.f32 %v3534, 0.0
        %v3551 = vmax.f32 %v3535, 0.0
        %v3552 = vmax.f32 %v3536, 0.0
        %v3553 = vmax.f32 %v3537, 0.0
        %v3554 = vmax.f32 %v3538, 0.0
        %v3555 = vmax.f32 %v3539, 0.0
        %v3556 = vmax.f32 %v3540, 0.0
        %v3557 = vmax.f32 %v3541, 0.0
        %v3558 = vmax.f32 %v3542, 0.0
        %v3559 = vmax.f32 %v3543, 0.0
        %v3560 = vmax.f32 %v3544, 0.0
        %v3561 = vmax.f32 %v3545, 0.0
        %v3562 = vmax.f32 %v3546, 0.0
        %v3563 = vmax.f32 %v3547, 0.0
        %v3564 = vmax.f32 %v3548, 0.0
        %v3565 = vmax.f32 %v3549, 0.0
        %v3566 = vld [vmem:[#allocation2 + $0x148] sm:$0xff]
        %v3567 = vld [vmem:[#allocation2 + $0x150] sm:$0xff]
        %v3568 = vld [vmem:[#allocation2 + $0x158] sm:$0xff]
        %v3569 = vld [vmem:[#allocation2 + $0x160] sm:$0xff]
        %v3570 = vld [vmem:[#allocation2 + $0x168] sm:$0xff]
        %v3571 = vld [vmem:[#allocation2 + $0x170] sm:$0xff]
        %v3572 = vld [vmem:[#allocation2 + $0x178] sm:$0xff]
        %v3573 = vld [vmem:[#allocation2 + $0x180] sm:$0xff]
        %v3574 = vld [vmem:[#allocation2 + $0x188] sm:$0xff]
        %v3575 = vld [vmem:[#allocation2 + $0x190] sm:$0xff]
        %v3576 = vld [vmem:[%s2 + $0x13] sm:$0x1]
        %v3577 = vlaneseq
        %v3578 = vshrl.u32 %v3577, 7
        %v3579 = vsub.s32 0, %v3578
        %v3580 = vrot.slane %v3576, %v3579
        %v3582 = vsel %vm447, %v3550, 0
        %v3585 = vsel %vm447, %v3551, 0
        %v3588 = vsel %vm447, %v3552, 0
        %v3591 = vsel %vm447, %v3553, 0
        %v3594 = vsel %vm447, %v3554, 0
        %v3597 = vsel %vm447, %v3555, 0
        %v3600 = vsel %vm447, %v3556, 0
        %v3603 = vsel %vm447, %v3557, 0
        %v3606 = vsel %vm447, %v3558, 0
        %v3609 = vsel %vm447, %v3559, 0
        %v3612 = vsel %vm447, %v3560, 0
        %v3615 = vsel %vm447, %v3561, 0
        %v3618 = vsel %vm447, %v3562, 0
        %v3621 = vsel %vm447, %v3563, 0
        %v3624 = vsel %vm447, %v3564, 0
        %v3627 = vsel %vm447, %v3565, 0
        %3629 = vmatprep.subr.mxu0 0.0
        %3630 = vmatpush1.msra.mxu0 0.0
        %3631 = vmatprep.subr.mxu0 0.0
        %3632 = vmatpush1.msra.mxu0 0.0
        %3633 = vmatprep.subr.mxu0 0.0
        %3634 = vmatpush1.msra.mxu0 0.0
        %3635 = vmatprep.subr.mxu0 0.0
        %3636 = vmatpush1.msra.mxu0 0.0
        %3637 = vmatprep.subr.mxu0 0.0
        %3638 = vmatpush1.msra.mxu0 0.0
        %3639 = vmatprep.subr.mxu0 0.0
        %3640 = vmatpush1.msra.mxu0 0.0
        %3641 = vmatprep.subr.mxu0 0.0
        %3642 = vmatpush1.msra.mxu0 %v3575
        %3643 = vmatprep.subr.mxu0 0.0
        %3644 = vmatpush1.msra.mxu0 %v3574
        %3645 = vmatprep.subr.mxu0 0.0
        %3646 = vmatpush1.msra.mxu0 %v3573
        %3647 = vmatprep.subr.mxu0 0.0
        %3648 = vmatpush1.msra.mxu0 %v3572
        %3649 = vmatprep.subr.mxu0 0.0
        %3650 = vmatpush1.msra.mxu0 %v3571
        %3651 = vmatprep.subr.mxu0 0.0
        %3652 = vmatpush1.msra.mxu0 %v3570
        %3653 = vmatprep.subr.mxu0 0.0
        %3654 = vmatpush1.msra.mxu0 %v3569
        %3655 = vmatprep.subr.mxu0 0.0
        %3656 = vmatpush1.msra.mxu0 %v3568
        %3657 = vmatprep.subr.mxu0 0.0
        %3658 = vmatpush1.msra.mxu0 %v3567
        %3659 = vmatprep.subr.mxu0 0.0
        %3660 = vmatpush1.msra.mxu0 %v3566
        %3661 = vmatprep.subr.mxu0 0.0
        %3662 = vmatpush2.msra.mxu0 0.0
        %3663 = vmatprep.subr.mxu0 0.0
        %3664 = vmatpush2.msra.mxu0 0.0
        %3665 = vmatprep.subr.mxu0 0.0
        %3666 = vmatpush2.msra.mxu0 0.0
        %3667 = vmatprep.subr.mxu0 0.0
        %3668 = vmatpush2.msra.mxu0 0.0
        %3669 = vmatprep.subr.mxu0 0.0
        %3670 = vmatpush2.msra.mxu0 0.0
        %3671 = vmatprep.subr.mxu0 0.0
        %3672 = vmatpush2.msra.mxu0 0.0
        %3673 = vmatprep.subr.mxu0 0.0
        %3674 = vmatpush2.msra.mxu0 0.0
        %3675 = vmatprep.subr.mxu0 0.0
        %3676 = vmatpush2.msra.mxu0 0.0
        %3677 = vmatprep.subr.mxu0 0.0
        %3678 = vmatpush2.msra.mxu0 0.0
        %3679 = vmatprep.subr.mxu0 0.0
        %3680 = vmatpush2.msra.mxu0 0.0
        %3681 = vmatprep.subr.mxu0 0.0
        %3682 = vmatpush2.msra.mxu0 0.0
        %3683 = vmatprep.subr.mxu0 0.0
        %3684 = vmatpush2.msra.mxu0 0.0
        %3685 = vmatprep.subr.mxu0 0.0
        %3686 = vmatpush2.msra.mxu0 0.0
        %3687 = vmatprep.subr.mxu0 0.0
        %3688 = vmatpush2.msra.mxu0 0.0
        %3689 = vmatprep.subr.mxu0 0.0
        %3690 = vmatpush2.msra.mxu0 0.0
        %3691 = vmatprep.subr.mxu0 0.0
        %3692 = vmatpush2.msra.mxu0 0.0
        %3693 = vmatprep.mubr.f32.mxu0 0.0
        %3694 = vmatmul.mubr.f32.gmra.mxu0 %v3582
        %v3695 = vpop.f32.mrf.mxu0
        %v3696 = vadd.f32 %v3580, %v3695
        %v3697 = vpop.f32.mrf.mxu0
        %3698 = vmatprep.mubr.f32.mxu0 0.0
        %3699 = vmatmul.mubr.f32.gmra.mxu0 %v3585
        %v3700 = vpop.f32.mrf.mxu0
        %v3701 = vadd.f32 %v3580, %v3700
        %v3702 = vpop.f32.mrf.mxu0
        %3703 = vmatprep.mubr.f32.mxu0 0.0
        %3704 = vmatmul.mubr.f32.gmra.mxu0 %v3588
        %v3705 = vpop.f32.mrf.mxu0
        %v3706 = vadd.f32 %v3580, %v3705
        %v3707 = vpop.f32.mrf.mxu0
        %3708 = vmatprep.mubr.f32.mxu0 0.0
        %3709 = vmatmul.mubr.f32.gmra.mxu0 %v3591
        %v3710 = vpop.f32.mrf.mxu0
        %v3711 = vadd.f32 %v3580, %v3710
        %v3712 = vpop.f32.mrf.mxu0
        %3713 = vmatprep.mubr.f32.mxu0 0.0
        %3714 = vmatmul.mubr.f32.gmra.mxu0 %v3594
        %v3715 = vpop.f32.mrf.mxu0
        %v3716 = vadd.f32 %v3580, %v3715
        %v3717 = vpop.f32.mrf.mxu0
        %3718 = vmatprep.mubr.f32.mxu0 0.0
        %3719 = vmatmul.mubr.f32.gmra.mxu0 %v3597
        %v3720 = vpop.f32.mrf.mxu0
        %v3721 = vadd.f32 %v3580, %v3720
        %v3722 = vpop.f32.mrf.mxu0
        %3723 = vmatprep.mubr.f32.mxu0 0.0
        %3724 = vmatmul.mubr.f32.gmra.mxu0 %v3600
        %v3725 = vpop.f32.mrf.mxu0
        %v3726 = vadd.f32 %v3580, %v3725
        %v3727 = vpop.f32.mrf.mxu0
        %3728 = vmatprep.mubr.f32.mxu0 0.0
        %3729 = vmatmul.mubr.f32.gmra.mxu0 %v3603
        %v3730 = vpop.f32.mrf.mxu0
        %v3731 = vadd.f32 %v3580, %v3730
        %v3732 = vpop.f32.mrf.mxu0
        %3733 = vmatprep.mubr.f32.mxu0 0.0
        %3734 = vmatmul.mubr.f32.gmra.mxu0 %v3606
        %v3735 = vpop.f32.mrf.mxu0
        %v3736 = vadd.f32 %v3580, %v3735
        %v3737 = vpop.f32.mrf.mxu0
        %3738 = vmatprep.mubr.f32.mxu0 0.0
        %3739 = vmatmul.mubr.f32.gmra.mxu0 %v3609
        %v3740 = vpop.f32.mrf.mxu0
        %v3741 = vadd.f32 %v3580, %v3740
        %v3742 = vpop.f32.mrf.mxu0
        %3743 = vmatprep.mubr.f32.mxu0 0.0
        %3744 = vmatmul.mubr.f32.gmra.mxu0 %v3612
        %v3745 = vpop.f32.mrf.mxu0
        %v3746 = vadd.f32 %v3580, %v3745
        %v3747 = vpop.f32.mrf.mxu0
        %3748 = vmatprep.mubr.f32.mxu0 0.0
        %3749 = vmatmul.mubr.f32.gmra.mxu0 %v3615
        %v3750 = vpop.f32.mrf.mxu0
        %v3751 = vadd.f32 %v3580, %v3750
        %v3752 = vpop.f32.mrf.mxu0
        %3753 = vmatprep.mubr.f32.mxu0 0.0
        %3754 = vmatmul.mubr.f32.gmra.mxu0 %v3618
        %v3755 = vpop.f32.mrf.mxu0
        %v3756 = vadd.f32 %v3580, %v3755
        %v3757 = vpop.f32.mrf.mxu0
        %3758 = vmatprep.mubr.f32.mxu0 0.0
        %3759 = vmatmul.mubr.f32.gmra.mxu0 %v3621
        %v3760 = vpop.f32.mrf.mxu0
        %v3761 = vadd.f32 %v3580, %v3760
        %v3762 = vpop.f32.mrf.mxu0
        %3763 = vmatprep.mubr.f32.mxu0 0.0
        %3764 = vmatmul.mubr.f32.gmra.mxu0 %v3624
        %v3765 = vpop.f32.mrf.mxu0
        %v3766 = vadd.f32 %v3580, %v3765
        %v3767 = vpop.f32.mrf.mxu0
        %3768 = vmatprep.mubr.f32.mxu0 0.0
        %3769 = vmatmul.mubr.f32.gmra.mxu0 %v3627
        %v3770 = vpop.f32.mrf.mxu0
        %v3771 = vadd.f32 %v3580, %v3770
        %v3772 = vpop.f32.mrf.mxu0
        %3773 = vdwg.mxu0
        %v3774 = vsel %vm253, %v3696, -inf
        %3775 = vmax.xlane.f32.xlu0 %v3774
        %v3776 = vpop.xlane.xlu0 %3775
        %v3777 = vsel %vm253, %v3701, -inf
        %3778 = vmax.xlane.f32.xlu0 %v3777
        %v3779 = vpop.xlane.xlu0 %3778
        %v3780 = vsel %vm253, %v3706, -inf
        %3781 = vmax.xlane.f32.xlu0 %v3780
        %v3782 = vpop.xlane.xlu0 %3781
        %v3783 = vsel %vm253, %v3711, -inf
        %3784 = vmax.xlane.f32.xlu0 %v3783
        %v3785 = vpop.xlane.xlu0 %3784
        %v3786 = vsel %vm253, %v3716, -inf
        %3787 = vmax.xlane.f32.xlu0 %v3786
        %v3788 = vpop.xlane.xlu0 %3787
        %v3789 = vsel %vm253, %v3721, -inf
        %3790 = vmax.xlane.f32.xlu0 %v3789
        %v3791 = vpop.xlane.xlu0 %3790
        %v3792 = vsel %vm253, %v3726, -inf
        %3793 = vmax.xlane.f32.xlu0 %v3792
        %v3794 = vpop.xlane.xlu0 %3793
        %v3795 = vsel %vm253, %v3731, -inf
        %3796 = vmax.xlane.f32.xlu0 %v3795
        %v3797 = vpop.xlane.xlu0 %3796
        %v3798 = vsel %vm253, %v3736, -inf
        %3799 = vmax.xlane.f32.xlu0 %v3798
        %v3800 = vpop.xlane.xlu0 %3799
        %v3801 = vsel %vm253, %v3741, -inf
        %3802 = vmax.xlane.f32.xlu0 %v3801
        %v3803 = vpop.xlane.xlu0 %3802
        %v3804 = vsel %vm253, %v3746, -inf
        %3805 = vmax.xlane.f32.xlu0 %v3804
        %v3806 = vpop.xlane.xlu0 %3805
        %v3807 = vsel %vm253, %v3751, -inf
        %3808 = vmax.xlane.f32.xlu0 %v3807
        %v3809 = vpop.xlane.xlu0 %3808
        %v3810 = vsel %vm253, %v3756, -inf
        %3811 = vmax.xlane.f32.xlu0 %v3810
        %v3812 = vpop.xlane.xlu0 %3811
        %v3813 = vsel %vm253, %v3761, -inf
        %3814 = vmax.xlane.f32.xlu0 %v3813
        %v3815 = vpop.xlane.xlu0 %3814
        %v3816 = vsel %vm253, %v3766, -inf
        %3817 = vmax.xlane.f32.xlu0 %v3816
        %v3818 = vpop.xlane.xlu0 %3817
        %v3819 = vsel %vm253, %v3771, -inf
        %3820 = vmax.xlane.f32.xlu0 %v3819
        %v3821 = vpop.xlane.xlu0 %3820
        %v3822 = vsub.f32 %v3696, %v3776
        %v3823 = vsub.f32 %v3701, %v3779
        %v3824 = vsub.f32 %v3706, %v3782
        %v3825 = vsub.f32 %v3711, %v3785
        %v3826 = vsub.f32 %v3716, %v3788
        %v3827 = vsub.f32 %v3721, %v3791
        %v3828 = vsub.f32 %v3726, %v3794
        %v3829 = vsub.f32 %v3731, %v3797
        %v3830 = vsub.f32 %v3736, %v3800
        %v3831 = vsub.f32 %v3741, %v3803
        %v3832 = vsub.f32 %v3746, %v3806
        %v3833 = vsub.f32 %v3751, %v3809
        %v3834 = vsub.f32 %v3756, %v3812
        %v3835 = vsub.f32 %v3761, %v3815
        %v3836 = vsub.f32 %v3766, %v3818
        %v3837 = vsub.f32 %v3771, %v3821
        %v3838 = vmul.f32 %v3822, 1.442695
        %v3839 = vpow.pop %v3838
        %v3840 = vmul.f32 %v3823, 1.442695
        %v3841 = vpow.pop %v3840
        %v3842 = vmul.f32 %v3824, 1.442695
        %v3843 = vpow.pop %v3842
        %v3844 = vmul.f32 %v3825, 1.442695
        %v3845 = vpow.pop %v3844
        %v3846 = vmul.f32 %v3826, 1.442695
        %v3847 = vpow.pop %v3846
        %v3848 = vmul.f32 %v3827, 1.442695
        %v3849 = vpow.pop %v3848
        %v3850 = vmul.f32 %v3828, 1.442695
        %v3851 = vpow.pop %v3850
        %v3852 = vmul.f32 %v3829, 1.442695
        %v3853 = vpow.pop %v3852
        %v3854 = vmul.f32 %v3830, 1.442695
        %v3855 = vpow.pop %v3854
        %v3856 = vmul.f32 %v3831, 1.442695
        %v3857 = vpow.pop %v3856
        %v3858 = vmul.f32 %v3832, 1.442695
        %v3859 = vpow.pop %v3858
        %v3860 = vmul.f32 %v3833, 1.442695
        %v3861 = vpow.pop %v3860
        %v3862 = vmul.f32 %v3834, 1.442695
        %v3863 = vpow.pop %v3862
        %v3864 = vmul.f32 %v3835, 1.442695
        %v3865 = vpow.pop %v3864
        %v3866 = vmul.f32 %v3836, 1.442695
        %v3867 = vpow.pop %v3866
        %v3868 = vmul.f32 %v3837, 1.442695
        %v3869 = vpow.pop %v3868
        %v3870 = vsel %vm253, %v3839, 0.0
        %3871 = vadd.xlane.f32.xlu0 %v3870
        %v3872 = vpop.xlane.xlu0 %3871
        %v3873 = vsel %vm253, %v3841, 0.0
        %3874 = vadd.xlane.f32.xlu0 %v3873
        %v3875 = vpop.xlane.xlu0 %3874
        %v3876 = vsel %vm253, %v3843, 0.0
        %3877 = vadd.xlane.f32.xlu0 %v3876
        %v3878 = vpop.xlane.xlu0 %3877
        %v3879 = vsel %vm253, %v3845, 0.0
        %3880 = vadd.xlane.f32.xlu0 %v3879
        %v3881 = vpop.xlane.xlu0 %3880
        %v3882 = vsel %vm253, %v3847, 0.0
        %3883 = vadd.xlane.f32.xlu0 %v3882
        %v3884 = vpop.xlane.xlu0 %3883
        %v3885 = vsel %vm253, %v3849, 0.0
        %3886 = vadd.xlane.f32.xlu0 %v3885
        %v3887 = vpop.xlane.xlu0 %3886
        %v3888 = vsel %vm253, %v3851, 0.0
        %3889 = vadd.xlane.f32.xlu0 %v3888
        %v3890 = vpop.xlane.xlu0 %3889
        %v3891 = vsel %vm253, %v3853, 0.0
        %3892 = vadd.xlane.f32.xlu0 %v3891
        %v3893 = vpop.xlane.xlu0 %3892
        %v3894 = vsel %vm253, %v3855, 0.0
        %3895 = vadd.xlane.f32.xlu0 %v3894
        %v3896 = vpop.xlane.xlu0 %3895
        %v3897 = vsel %vm253, %v3857, 0.0
        %3898 = vadd.xlane.f32.xlu0 %v3897
        %v3899 = vpop.xlane.xlu0 %3898
        %v3900 = vsel %vm253, %v3859, 0.0
        %3901 = vadd.xlane.f32.xlu0 %v3900
        %v3902 = vpop.xlane.xlu0 %3901
        %v3903 = vsel %vm253, %v3861, 0.0
        %3904 = vadd.xlane.f32.xlu0 %v3903
        %v3905 = vpop.xlane.xlu0 %3904
        %v3906 = vsel %vm253, %v3863, 0.0
        %3907 = vadd.xlane.f32.xlu0 %v3906
        %v3908 = vpop.xlane.xlu0 %3907
        %v3909 = vsel %vm253, %v3865, 0.0
        %3910 = vadd.xlane.f32.xlu0 %v3909
        %v3911 = vpop.xlane.xlu0 %3910
        %v3912 = vsel %vm253, %v3867, 0.0
        %3913 = vadd.xlane.f32.xlu0 %v3912
        %v3914 = vpop.xlane.xlu0 %3913
        %v3915 = vsel %vm253, %v3869, 0.0
        %3916 = vadd.xlane.f32.xlu0 %v3915
        %v3917 = vpop.xlane.xlu0 %3916
        %v3918 = vrcp.pop %v3872
        %v3919 = vrcp.pop %v3875
        %v3920 = vrcp.pop %v3878
        %v3921 = vrcp.pop %v3881
        %v3922 = vrcp.pop %v3884
        %v3923 = vrcp.pop %v3887
        %v3924 = vrcp.pop %v3890
        %v3925 = vrcp.pop %v3893
        %v3926 = vrcp.pop %v3896
        %v3927 = vrcp.pop %v3899
        %v3928 = vrcp.pop %v3902
        %v3929 = vrcp.pop %v3905
        %v3930 = vrcp.pop %v3908
        %v3931 = vrcp.pop %v3911
        %v3932 = vrcp.pop %v3914
        %v3933 = vrcp.pop %v3917
        %v3934 = vmul.f32 %v3872, %v3918
        %v3935 = vmul.f32 %v3875, %v3919
        %v3936 = vmul.f32 %v3878, %v3920
        %v3937 = vmul.f32 %v3881, %v3921
        %v3938 = vmul.f32 %v3884, %v3922
        %v3939 = vmul.f32 %v3887, %v3923
        %v3940 = vmul.f32 %v3890, %v3924
        %v3941 = vmul.f32 %v3893, %v3925
        %v3942 = vmul.f32 %v3896, %v3926
        %v3943 = vmul.f32 %v3899, %v3927
        %v3944 = vmul.f32 %v3902, %v3928
        %v3945 = vmul.f32 %v3905, %v3929
        %v3946 = vmul.f32 %v3908, %v3930
        %v3947 = vmul.f32 %v3911, %v3931
        %v3948 = vmul.f32 %v3914, %v3932
        %v3949 = vmul.f32 %v3917, %v3933
        %v3950 = vsub.f32 2.0, %v3934
        %v3951 = vsub.f32 2.0, %v3935
        %v3952 = vsub.f32 2.0, %v3936
        %v3953 = vsub.f32 2.0, %v3937
        %v3954 = vsub.f32 2.0, %v3938
        %v3955 = vsub.f32 2.0, %v3939
        %v3956 = vsub.f32 2.0, %v3940
        %v3957 = vsub.f32 2.0, %v3941
        %v3958 = vsub.f32 2.0, %v3942
        %v3959 = vsub.f32 2.0, %v3943
        %v3960 = vsub.f32 2.0, %v3944
        %v3961 = vsub.f32 2.0, %v3945
        %v3962 = vsub.f32 2.0, %v3946
        %v3963 = vsub.f32 2.0, %v3947
        %v3964 = vsub.f32 2.0, %v3948
        %v3965 = vsub.f32 2.0, %v3949
        %v3966 = vmul.f32 %v3918, %v3950
        %v3967 = vmul.f32 %v3919, %v3951
        %v3968 = vmul.f32 %v3920, %v3952
        %v3969 = vmul.f32 %v3921, %v3953
        %v3970 = vmul.f32 %v3922, %v3954
        %v3971 = vmul.f32 %v3923, %v3955
        %v3972 = vmul.f32 %v3924, %v3956
        %v3973 = vmul.f32 %v3925, %v3957
        %v3974 = vmul.f32 %v3926, %v3958
        %v3975 = vmul.f32 %v3927, %v3959
        %v3976 = vmul.f32 %v3928, %v3960
        %v3977 = vmul.f32 %v3929, %v3961
        %v3978 = vmul.f32 %v3930, %v3962
        %v3979 = vmul.f32 %v3931, %v3963
        %v3980 = vmul.f32 %v3932, %v3964
        %v3981 = vmul.f32 %v3933, %v3965
        %v3982 = vmul.f32 %v3839, %v3966
        %v3983 = vmul.f32 %v3841, %v3967
        %v3984 = vmul.f32 %v3843, %v3968
        %v3985 = vmul.f32 %v3845, %v3969
        %v3986 = vmul.f32 %v3847, %v3970
        %v3987 = vmul.f32 %v3849, %v3971
        %v3988 = vmul.f32 %v3851, %v3972
        %v3989 = vmul.f32 %v3853, %v3973
        %v3990 = vmul.f32 %v3855, %v3974
        %v3991 = vmul.f32 %v3857, %v3975
        %v3992 = vmul.f32 %v3859, %v3976
        %v3993 = vmul.f32 %v3861, %v3977
        %v3994 = vmul.f32 %v3863, %v3978
        %v3995 = vmul.f32 %v3865, %v3979
        %v3996 = vmul.f32 %v3867, %v3980
        %v3997 = vmul.f32 %v3869, %v3981
        %3998 = vst.msk [vmem:[%s222] sm:$0xff] %vm253, %v3982
        %3999 = vst.msk [vmem:[%s222 + $0x8] sm:$0xff] %vm253, %v3983
        %4000 = vst.msk [vmem:[%s222 + $0x10] sm:$0xff] %vm253, %v3984
        %4001 = vst.msk [vmem:[%s222 + $0x18] sm:$0xff] %vm253, %v3985
        %4002 = vst.msk [vmem:[%s222 + $0x20] sm:$0xff] %vm253, %v3986
        %4003 = vst.msk [vmem:[%s222 + $0x28] sm:$0xff] %vm253, %v3987
        %4004 = vst.msk [vmem:[%s222 + $0x30] sm:$0xff] %vm253, %v3988
        %4005 = vst.msk [vmem:[%s222 + $0x38] sm:$0xff] %vm253, %v3989
        %4006 = vst.msk [vmem:[%s222 + $0x40] sm:$0xff] %vm253, %v3990
        %4007 = vst.msk [vmem:[%s222 + $0x48] sm:$0xff] %vm253, %v3991
        %4008 = vst.msk [vmem:[%s222 + $0x50] sm:$0xff] %vm253, %v3992
        %4009 = vst.msk [vmem:[%s222 + $0x58] sm:$0xff] %vm253, %v3993
        %4010 = vst.msk [vmem:[%s222 + $0x60] sm:$0xff] %vm253, %v3994
        %4011 = vst.msk [vmem:[%s222 + $0x68] sm:$0xff] %vm253, %v3995
        %4012 = vst.msk [vmem:[%s222 + $0x70] sm:$0xff] %vm253, %v3996
        %4013 = vst.msk [vmem:[%s222 + $0x78] sm:$0xff] %vm253, %v3997
        %4014 = vst.msk [vmem:[%s228] sm:$0xff] %vm2016, %v1932
        %4015 = vst.msk [vmem:[%s228 + $0x8] sm:$0xff] %vm2016, %v1937
        %4016 = vst.msk [vmem:[%s228 + $0x10] sm:$0xff] %vm2016, %v1942
        %4017 = vst.msk [vmem:[%s228 + $0x18] sm:$0xff] %vm2016, %v1947
        %4018 = vst.msk [vmem:[%s228 + $0x20] sm:$0xff] %vm2016, %v1952
        %4019 = vst.msk [vmem:[%s228 + $0x28] sm:$0xff] %vm2016, %v1957
        %4020 = vst.msk [vmem:[%s228 + $0x30] sm:$0xff] %vm2016, %v1962
        %4021 = vst.msk [vmem:[%s228 + $0x38] sm:$0xff] %vm2016, %v1967
        %4022 = vst.msk [vmem:[%s228 + $0x40] sm:$0xff] %vm2016, %v1972
        %4023 = vst.msk [vmem:[%s228 + $0x48] sm:$0xff] %vm2016, %v1977
        %4024 = vst.msk [vmem:[%s228 + $0x50] sm:$0xff] %vm2016, %v1982
        %4025 = vst.msk [vmem:[%s228 + $0x58] sm:$0xff] %vm2016, %v1987
        %4026 = vst.msk [vmem:[%s228 + $0x60] sm:$0xff] %vm2016, %v1992
        %4027 = vst.msk [vmem:[%s228 + $0x68] sm:$0xff] %vm2016, %v1997
        %4028 = vst.msk [vmem:[%s228 + $0x70] sm:$0xff] %vm2016, %v2002
        %4029 = vst.msk [vmem:[%s228 + $0x78] sm:$0xff] %vm2016, %v2007
        %s4030 = smul.u32 16, %s17
        %p4031 = scmp.lt.s32.totalorder %s4030, 31
        %s4032 = scalar_select %p4031, %s4030, 31
        %s4033 = smul.addr %s4032, 8
        %s4034 = scalar_lea.vmem %s3, %s4033
        %s4035 = smul.u32 16, %s17
        %p4036 = scmp.lt.s32.totalorder %s4035, 31
        %s4037 = scalar_select %p4036, %s4035, 31
        %s4038 = smul.addr %s4037, 8
        %s4039 = scalar_lea.vmem %s4, %s4038
        // Predicated region
        $region37: #{wae_forward.1} parent=31 // pred_check
          %p4040 = pneg %p103
        $region38: #{wae_forward.1} parent=31 // pred_check_branch
          %4042 = sbr.rel (%p4040) target = $region40
        $region39: #{wae_forward.1} parent=31 // pred_region
          %s4043 = smul.u32 16, %s17
        $region40: #{wae_forward.1} parent=31 // pred_fallthru
          _
        // Predicated region
        $region41: #{wae_forward.1} parent=31 // pred_check
          %p4044 = pneg %p129
        $region42: #{wae_forward.1} parent=31 // pred_check_branch
          %4046 = sbr.rel (%p4044) target = $region44
        $region43: #{wae_forward.1} parent=31 // pred_region
          %s4047 = smul.u32 16, %s17
        $region44: #{wae_forward.1} parent=31 // pred_fallthru
          _
      $region32: #{wae_forward.1} parent=5 // pred_fallthru
        _
      %p4048 = scmp.le.s32.totalorder 2, %s12
      // Predicated region
      $region45: #{wae_forward.1} parent=5 // pred_check
        %p4049 = pneg %p4048
      $region46: #{wae_forward.1} parent=5 // pred_check_branch
        %4051 = sbr.rel (%p4049) target = $region48
      $region47: #{wae_forward.1} parent=5 // pred_region
        %s4052 = ssub.s32 %s12, 2
        // Predicated region
        $region49: #{wae_forward.1} parent=47 // pred_check
          %p4053 = pneg %p109
        $region50: #{wae_forward.1} parent=47 // pred_check_branch
          %4055 = sbr.rel (%p4053) target = $region52
        $region51: #{wae_forward.1} parent=47 // pred_region
          %s4056 = smul.u32 16, %s18
          %p4057 = scmp.lt.s32.totalorder %s4056, 31
          %s4058 = scalar_select %p4057, %s4056, 31
          %s4059 = smul.addr %s4058, 8
          %s4060 = scalar_lea.vmem %s3, %s4059
        $region52: #{wae_forward.1} parent=47 // pred_fallthru
          _
        // Predicated region
        $region53: #{wae_forward.1} parent=47 // pred_check
          %p4061 = pneg %p135
        $region54: #{wae_forward.1} parent=47 // pred_check_branch
          %4063 = sbr.rel (%p4061) target = $region56
        $region55: #{wae_forward.1} parent=47 // pred_region
          %s4064 = smul.u32 16, %s18
          %p4065 = scmp.lt.s32.totalorder %s4064, 31
          %s4066 = scalar_select %p4065, %s4064, 31
          %s4067 = smul.addr %s4066, 8
          %s4068 = scalar_lea.vmem %s4, %s4067
        $region56: #{wae_forward.1} parent=47 // pred_fallthru
          _
      $region48: #{wae_forward.1} parent=5 // pred_fallthru
        _
    $region6: #{wae_forward.1} parent=1 // loop_footer
      %s16 = sadd.s32 1, %s12
    $region7: #{wae_forward.1} parent=1 // loop_footer_branch
      %11 = sbr.rel target = $region3
    $region8: #{wae_forward.1} parent=1 // loop_exit
      _
    %4069 = vsyncpa [#allocation3], 1
    %s4070 = scalar_lea.sflag [#allocation3], 1
    %4071 = vsyncpa %s4070, 1

</llo_original>
